<compile_context>
chip_gen: v7x
topology: tpu7x:2x2x1
jax: 0.10.0
libtpu: 0.0.40
codegen_flags: <defaults>
</compile_context>

<pallas_src>
import jax
import jax.numpy as jnp
from jax.experimental import pallas as pl
from jax.experimental.pallas import tpu as pltpu


# ----------------------------------------------------------------------------
# Fused kernel: ConvBNReLU + global-avg-pool + 1x1 attention conv + gate
# ----------------------------------------------------------------------------

def _arm_kernel(xp_ref, w9_ref, shift_ref, watt_ref, o_ref, col_ref):
    """One batch element per grid step.

    xp_ref   : (1, H+2, W+2, Cin)  bf16  zero-padded NHWC input
    w9_ref   : (9*Cin, Cout)       bf16  im2col 3x3 conv weight, BN scale folded
    shift_ref: (1, Cout)           f32   BN shift (beta - mean*scale)
    watt_ref : (Cout, Cin=Cout)    f32   1x1 attention conv weight (out, in)
    o_ref    : (1, Cout, H*W)      f32   channel-major output (H*W on lanes)
    col_ref  : (H*W, 9*Cin)        bf16  VMEM im2col scratch
    """
    Hp, Wp, Cin = xp_ref.shape[1], xp_ref.shape[2], xp_ref.shape[3]
    H, W = Hp - 2, Wp - 2
    HW = H * W
    Cout = o_ref.shape[1]

    # --- im2col: copy the 9 shifted bf16 windows once into the VMEM scratch.
    for t in range(9):
        di, dj = divmod(t, 3)
        col_ref[:, t * Cin:(t + 1) * Cin] = (
            xp_ref[0, di:di + H, dj:dj + W, :].reshape(HW, Cin))

    # --- 3x3 conv as a single big-K MXU matmul (bf16 operands, f32 accum).
    acc = jnp.dot(col_ref[...], w9_ref[...], preferred_element_type=jnp.float32)

    # --- fused BN shift + ReLU (BN scale already folded into w9).
    feat = jnp.maximum(acc + shift_ref[...], 0.0)               # (HW, Cout) f32

    # --- global average pool over the spatial dim (trace-time 1/HW constant).
    pooled = jnp.sum(feat, axis=0, keepdims=True) * (1.0 / HW)  # (1, Cin=Cout)

    # --- 1x1 attention conv + sigmoid: VPU multiply + XLU lane reduce, f32.
    #     att[o] = sigmoid( sum_i watt[o, i] * pooled[i] )  -> column gate.
    att = jnp.sum(watt_ref[...] * pooled, axis=1, keepdims=True)  # (Cout, 1)
    att = jax.nn.sigmoid(att)

    # --- channel-major output: one XLU transpose + per-channel gate.
    featT = jnp.transpose(feat)                                  # (Cout, HW)
    o_ref[0] = (featT * att).astype(o_ref.dtype)


# ----------------------------------------------------------------------------
# Wrapper (trace-time weight folding + BlockSpecs)
# ----------------------------------------------------------------------------

def attention_refinement_module(params, x, eps=1e-5):
    """x: NCHW f32.  Returns NCHW f32 (same semantics as the PyTorch module)."""
    B, Cin, H, W = x.shape
    w = params["conv_w"]                                        # (Cout, Cin, 3, 3)
    Cout = w.shape[0]

    # Eval-mode BN fold: scale into the conv weights, shift added in-kernel.
    scale = params["bn_gamma"] / jnp.sqrt(params["bn_var"] + eps)        # (Cout,)
    shift = (params["bn_beta"] - params["bn_mean"] * scale)
    shift = shift.reshape(1, Cout).astype(jnp.float32)
    # im2col weight slab: row index = tap*Cin + cin (matches scratch layout).
    w9 = (jnp.transpose(w, (2, 3, 1, 0)).reshape(9, Cin, Cout)
          * scale.reshape(1, 1, Cout)).reshape(9 * Cin, Cout).astype(jnp.bfloat16)
    # 1x1 attention weight kept in PyTorch (out, in) layout, f32 (VPU path).
    watt = params["atten_w"].reshape(Cout, Cout).astype(jnp.float32)

    # TODO(synk): the NCHW->NHWC input transpose + 1px zero-pad stay as XLA ops;
    # they could be folded into the kernel by masking border taps if the input
    # side ever dominates.
    xh = jnp.transpose(x, (0, 2, 3, 1)).astype(jnp.bfloat16)
    xp = jnp.pad(xh, ((0, 0), (1, 1), (1, 1), (0, 0)))          # (B, H+2, W+2, Cin)

    out_cm = pl.pallas_call(
        _arm_kernel,
        out_shape=jax.ShapeDtypeStruct((B, Cout, H * W), jnp.float32),
        grid=(B,),
        in_specs=[
            pl.BlockSpec((1, H + 2, W + 2, Cin), lambda b: (b, 0, 0, 0)),
            pl.BlockSpec((9 * Cin, Cout), lambda b: (0, 0)),
            pl.BlockSpec((1, Cout), lambda b: (0, 0)),
            pl.BlockSpec((Cout, Cout), lambda b: (0, 0)),
        ],
        out_specs=pl.BlockSpec((1, Cout, H * W), lambda b: (b, 0, 0)),
        scratch_shapes=[pltpu.VMEM((H * W, 9 * Cin), jnp.bfloat16)],
        compiler_params=pltpu.CompilerParams(
            dimension_semantics=("parallel",)),
    )(xp, w9, shift, watt)

    # (B, Cout, H*W) -> (B, Cout, H, W) is a free row-major reshape (no transpose).
    return out_cm.reshape(B, Cout, H, W)


# ----------------------------------------------------------------------------
# Pure-JAX reference (mirrors the PyTorch forward, eval-mode BN, and the
# kernel's bf16 quantisation of input + folded conv weights)
# ----------------------------------------------------------------------------

def reference_forward(params, x, eps=1e-5):
    w = params["conv_w"]
    Cout = w.shape[0]
    xh = jnp.transpose(x, (0, 2, 3, 1))
    xh = xh.astype(jnp.bfloat16).astype(jnp.float32)            # mirror input quant
    B, H, W, Cin = xh.shape
    xp = jnp.pad(xh, ((0, 0), (1, 1), (1, 1), (0, 0)))
    scale = params["bn_gamma"] / jnp.sqrt(params["bn_var"] + eps)
    shift = params["bn_beta"] - params["bn_mean"] * scale
    wt = jnp.transpose(w, (2, 3, 1, 0)) * scale                 # (3,3,Cin,Cout) folded
    wt = wt.astype(jnp.bfloat16).astype(jnp.float32)            # mirror weight quant
    acc = jnp.zeros((B, H, W, Cout), jnp.float32)
    for di in range(3):
        for dj in range(3):
            acc = acc + jnp.einsum("bhwc,cd->bhwd",
                                   xp[:, di:di + H, dj:dj + W, :], wt[di, dj])
    feat = jnp.maximum(acc + shift, 0.0)
    mean = jnp.mean(feat, axis=(1, 2))                          # (B, Cout)
    wa = params["atten_w"].reshape(Cout, Cout).astype(jnp.float32)
    att = jax.nn.sigmoid(mean @ wa.T)                           # (B, Cout)
    out = feat * att[:, None, None, :]
    return jnp.transpose(out, (0, 3, 1, 2))


# ----------------------------------------------------------------------------
# Main
# ----------------------------------------------------------------------------

if __name__ == "__main__":
    B, IN_CH, OUT_CH, HW = 2, 64, 128, 16

    key = jax.random.PRNGKey(0)
    k1, k2, k3, k4, k5, k6, k7 = jax.random.split(key, 7)

    def kaiming(k, shape):
        fan_in = shape[1] * shape[2] * shape[3]                 # gain(a=1) = 1
        return jax.random.normal(k, shape, jnp.float32) / (fan_in ** 0.5)

    params = dict(
        conv_w=kaiming(k1, (OUT_CH, IN_CH, 3, 3)),
        atten_w=kaiming(k2, (OUT_CH, OUT_CH, 1, 1)),
        # eval-mode BN params / running stats (randomised so the fold is exercised)
        bn_gamma=1.0 + 0.1 * jax.random.normal(k3, (OUT_CH,), jnp.float32),
        bn_beta=0.1 * jax.random.normal(k4, (OUT_CH,), jnp.float32),
        bn_mean=0.1 * jax.random.normal(k5, (OUT_CH,), jnp.float32),
        bn_var=jax.random.uniform(k6, (OUT_CH,), jnp.float32, minval=0.5, maxval=1.5),
    )
    x = jax.random.normal(k7, (B, IN_CH, HW, HW), jnp.float32)

    fwd = jax.jit(attention_refinement_module)
    out = fwd(params, x)
    jax.block_until_ready(out)

    ref = reference_forward(params, x)

    assert out.shape == (B, OUT_CH, HW, HW)
    assert bool(jnp.all(jnp.isfinite(out)))
    err = float(jnp.max(jnp.abs(out - ref)))
    assert err < 2e-2, f"max abs err vs reference: {err}"
    print("KERNEL_OK")
</pallas_src>

<mosaic_0001>
module attributes {stable_mosaic.version = 11 : i64} {
  func.func @_arm_kernel(%arg0: i32, %arg1: memref<1x18x18x64xbf16, #tpu.memory_space<vmem>>, %arg2: memref<576x128xbf16, #tpu.memory_space<vmem>>, %arg3: memref<1x128xf32, #tpu.memory_space<vmem>>, %arg4: memref<128x128xf32, #tpu.memory_space<vmem>>, %arg5: memref<1x128x256xf32, #tpu.memory_space<vmem>>, %arg6: memref<256x576xbf16, #tpu.memory_space<vmem>>) attributes {dimension_semantics = [#tpu.dimension_semantics<parallel>], iteration_bounds = array<i64: 2>, scalar_prefetch = 0 : i64, scratch_operands = 1 : i64, tpu.core_type = #tpu.core_type<tc>, window_params = [{transform_indices = @transform_0, window_bounds = array<i64: 1, 18, 18, 64>}, {pipeline_mode = #tpu.pipeline_mode<synchronous>, transform_indices = @transform_1, window_bounds = array<i64: 576, 128>}, {pipeline_mode = #tpu.pipeline_mode<synchronous>, transform_indices = @transform_2, window_bounds = array<i64: 1, 128>}, {pipeline_mode = #tpu.pipeline_mode<synchronous>, transform_indices = @transform_3, window_bounds = array<i64: 128, 128>}, {transform_indices = @transform_4, window_bounds = array<i64: 1, 128, 256>}]} {
    %c0 = arith.constant 0 : index
    %c0_0 = arith.constant 0 : index
    %c0_1 = arith.constant 0 : index
    %c0_2 = arith.constant 0 : index
    %0 = vector.load %arg1[%c0, %c0_0, %c0_1, %c0_2] : memref<1x18x18x64xbf16, #tpu.memory_space<vmem>>, vector<1x16x16x64xbf16>
    %1 = vector.shape_cast %0 : vector<1x16x16x64xbf16> to vector<16x16x64xbf16>
    %2 = vector.shape_cast %1 : vector<16x16x64xbf16> to vector<256x64xbf16>
    %c0_3 = arith.constant 0 : index
    %c0_4 = arith.constant 0 : index
    %3 = vector.load %arg6[%c0_3, %c0_4] : memref<256x576xbf16, #tpu.memory_space<vmem>>, vector<256x64xbf16>
    tpu.vector_store %arg6[%c0_3, %c0_4], %2 {strides = array<i32>} : memref<256x576xbf16, #tpu.memory_space<vmem>>, vector<256x64xbf16>,
    %c0_5 = arith.constant 0 : index
    %c0_6 = arith.constant 0 : index
    %c1 = arith.constant 1 : index
    %c0_7 = arith.constant 0 : index
    %4 = vector.load %arg1[%c0_5, %c0_6, %c1, %c0_7] : memref<1x18x18x64xbf16, #tpu.memory_space<vmem>>, vector<1x16x16x64xbf16>
    %5 = vector.shape_cast %4 : vector<1x16x16x64xbf16> to vector<16x16x64xbf16>
    %6 = vector.shape_cast %5 : vector<16x16x64xbf16> to vector<256x64xbf16>
    %c0_8 = arith.constant 0 : index
    %c64 = arith.constant 64 : index
    %7 = vector.load %arg6[%c0_8, %c64] : memref<256x576xbf16, #tpu.memory_space<vmem>>, vector<256x64xbf16>
    tpu.vector_store %arg6[%c0_8, %c64], %6 {strides = array<i32>} : memref<256x576xbf16, #tpu.memory_space<vmem>>, vector<256x64xbf16>,
    %c0_9 = arith.constant 0 : index
    %c0_10 = arith.constant 0 : index
    %c2 = arith.constant 2 : index
    %c0_11 = arith.constant 0 : index
    %8 = vector.load %arg1[%c0_9, %c0_10, %c2, %c0_11] : memref<1x18x18x64xbf16, #tpu.memory_space<vmem>>, vector<1x16x16x64xbf16>
    %9 = vector.shape_cast %8 : vector<1x16x16x64xbf16> to vector<16x16x64xbf16>
    %10 = vector.shape_cast %9 : vector<16x16x64xbf16> to vector<256x64xbf16>
    %c0_12 = arith.constant 0 : index
    %c128 = arith.constant 128 : index
    %11 = vector.load %arg6[%c0_12, %c128] : memref<256x576xbf16, #tpu.memory_space<vmem>>, vector<256x64xbf16>
    tpu.vector_store %arg6[%c0_12, %c128], %10 {strides = array<i32>} : memref<256x576xbf16, #tpu.memory_space<vmem>>, vector<256x64xbf16>,
    %c0_13 = arith.constant 0 : index
    %c1_14 = arith.constant 1 : index
    %c0_15 = arith.constant 0 : index
    %c0_16 = arith.constant 0 : index
    %12 = vector.load %arg1[%c0_13, %c1_14, %c0_15, %c0_16] : memref<1x18x18x64xbf16, #tpu.memory_space<vmem>>, vector<1x16x16x64xbf16>
    %13 = vector.shape_cast %12 : vector<1x16x16x64xbf16> to vector<16x16x64xbf16>
    %14 = vector.shape_cast %13 : vector<16x16x64xbf16> to vector<256x64xbf16>
    %c0_17 = arith.constant 0 : index
    %c192 = arith.constant 192 : index
    %15 = vector.load %arg6[%c0_17, %c192] : memref<256x576xbf16, #tpu.memory_space<vmem>>, vector<256x64xbf16>
    tpu.vector_store %arg6[%c0_17, %c192], %14 {strides = array<i32>} : memref<256x576xbf16, #tpu.memory_space<vmem>>, vector<256x64xbf16>,
    %c0_18 = arith.constant 0 : index
    %c1_19 = arith.constant 1 : index
    %c1_20 = arith.constant 1 : index
    %c0_21 = arith.constant 0 : index
    %16 = vector.load %arg1[%c0_18, %c1_19, %c1_20, %c0_21] : memref<1x18x18x64xbf16, #tpu.memory_space<vmem>>, vector<1x16x16x64xbf16>
    %17 = vector.shape_cast %16 : vector<1x16x16x64xbf16> to vector<16x16x64xbf16>
    %18 = vector.shape_cast %17 : vector<16x16x64xbf16> to vector<256x64xbf16>
    %c0_22 = arith.constant 0 : index
    %c256 = arith.constant 256 : index
    %19 = vector.load %arg6[%c0_22, %c256] : memref<256x576xbf16, #tpu.memory_space<vmem>>, vector<256x64xbf16>
    tpu.vector_store %arg6[%c0_22, %c256], %18 {strides = array<i32>} : memref<256x576xbf16, #tpu.memory_space<vmem>>, vector<256x64xbf16>,
    %c0_23 = arith.constant 0 : index
    %c1_24 = arith.constant 1 : index
    %c2_25 = arith.constant 2 : index
    %c0_26 = arith.constant 0 : index
    %20 = vector.load %arg1[%c0_23, %c1_24, %c2_25, %c0_26] : memref<1x18x18x64xbf16, #tpu.memory_space<vmem>>, vector<1x16x16x64xbf16>
    %21 = vector.shape_cast %20 : vector<1x16x16x64xbf16> to vector<16x16x64xbf16>
    %22 = vector.shape_cast %21 : vector<16x16x64xbf16> to vector<256x64xbf16>
    %c0_27 = arith.constant 0 : index
    %c320 = arith.constant 320 : index
    %23 = vector.load %arg6[%c0_27, %c320] : memref<256x576xbf16, #tpu.memory_space<vmem>>, vector<256x64xbf16>
    tpu.vector_store %arg6[%c0_27, %c320], %22 {strides = array<i32>} : memref<256x576xbf16, #tpu.memory_space<vmem>>, vector<256x64xbf16>,
    %c0_28 = arith.constant 0 : index
    %c2_29 = arith.constant 2 : index
    %c0_30 = arith.constant 0 : index
    %c0_31 = arith.constant 0 : index
    %24 = vector.load %arg1[%c0_28, %c2_29, %c0_30, %c0_31] : memref<1x18x18x64xbf16, #tpu.memory_space<vmem>>, vector<1x16x16x64xbf16>
    %25 = vector.shape_cast %24 : vector<1x16x16x64xbf16> to vector<16x16x64xbf16>
    %26 = vector.shape_cast %25 : vector<16x16x64xbf16> to vector<256x64xbf16>
    %c0_32 = arith.constant 0 : index
    %c384 = arith.constant 384 : index
    %27 = vector.load %arg6[%c0_32, %c384] : memref<256x576xbf16, #tpu.memory_space<vmem>>, vector<256x64xbf16>
    tpu.vector_store %arg6[%c0_32, %c384], %26 {strides = array<i32>} : memref<256x576xbf16, #tpu.memory_space<vmem>>, vector<256x64xbf16>,
    %c0_33 = arith.constant 0 : index
    %c2_34 = arith.constant 2 : index
    %c1_35 = arith.constant 1 : index
    %c0_36 = arith.constant 0 : index
    %28 = vector.load %arg1[%c0_33, %c2_34, %c1_35, %c0_36] : memref<1x18x18x64xbf16, #tpu.memory_space<vmem>>, vector<1x16x16x64xbf16>
    %29 = vector.shape_cast %28 : vector<1x16x16x64xbf16> to vector<16x16x64xbf16>
    %30 = vector.shape_cast %29 : vector<16x16x64xbf16> to vector<256x64xbf16>
    %c0_37 = arith.constant 0 : index
    %c448 = arith.constant 448 : index
    %31 = vector.load %arg6[%c0_37, %c448] : memref<256x576xbf16, #tpu.memory_space<vmem>>, vector<256x64xbf16>
    tpu.vector_store %arg6[%c0_37, %c448], %30 {strides = array<i32>} : memref<256x576xbf16, #tpu.memory_space<vmem>>, vector<256x64xbf16>,
    %c0_38 = arith.constant 0 : index
    %c2_39 = arith.constant 2 : index
    %c2_40 = arith.constant 2 : index
    %c0_41 = arith.constant 0 : index
    %32 = vector.load %arg1[%c0_38, %c2_39, %c2_40, %c0_41] : memref<1x18x18x64xbf16, #tpu.memory_space<vmem>>, vector<1x16x16x64xbf16>
    %33 = vector.shape_cast %32 : vector<1x16x16x64xbf16> to vector<16x16x64xbf16>
    %34 = vector.shape_cast %33 : vector<16x16x64xbf16> to vector<256x64xbf16>
    %c0_42 = arith.constant 0 : index
    %c512 = arith.constant 512 : index
    %35 = vector.load %arg6[%c0_42, %c512] : memref<256x576xbf16, #tpu.memory_space<vmem>>, vector<256x64xbf16>
    tpu.vector_store %arg6[%c0_42, %c512], %34 {strides = array<i32>} : memref<256x576xbf16, #tpu.memory_space<vmem>>, vector<256x64xbf16>,
    %c0_43 = arith.constant 0 : index
    %c0_44 = arith.constant 0 : index
    %36 = vector.load %arg6[%c0_43, %c0_44] : memref<256x576xbf16, #tpu.memory_space<vmem>>, vector<256x576xbf16>
    %c0_45 = arith.constant 0 : index
    %c0_46 = arith.constant 0 : index
    %37 = vector.load %arg2[%c0_45, %c0_46] : memref<576x128xbf16, #tpu.memory_space<vmem>>, vector<576x128xbf16>
    %cst = arith.constant dense<0.000000e+00> : vector<256x128xf32>
    %38 = tpu.matmul %36, %37, %cst {dimension_numbers = #tpu.dot_dimension_numbers<[1], [0], [0], [1], [0, 0, 1, 1], [], []>} : vector<256x576xbf16>, vector<576x128xbf16>, vector<256x128xf32> -> vector<256x128xf32>
    %c0_47 = arith.constant 0 : index
    %c0_48 = arith.constant 0 : index
    %39 = vector.load %arg3[%c0_47, %c0_48] : memref<1x128xf32, #tpu.memory_space<vmem>>, vector<1x128xf32>
    %40 = vector.broadcast %39 : vector<1x128xf32> to vector<256x128xf32>
    %41 = arith.addf %38, %40 : vector<256x128xf32>
    %cst_49 = arith.constant 0.000000e+00 : f32
    %42 = vector.broadcast %cst_49 : f32 to vector<256x128xf32>
    %43 = arith.maximumf %41, %42 : vector<256x128xf32>
    %cst_50 = arith.constant dense<0.000000e+00> : vector<128xf32>
    %44 = vector.multi_reduction <add>, %43, %cst_50 [0] : vector<256x128xf32> to vector<128xf32>
    %45 = vector.shape_cast %44 : vector<128xf32> to vector<1x128xf32>
    %cst_51 = arith.constant 3.906250e-03 : f32
    %46 = vector.broadcast %cst_51 : f32 to vector<1x128xf32>
    %47 = arith.mulf %45, %46 : vector<1x128xf32>
    %c0_52 = arith.constant 0 : index
    %c0_53 = arith.constant 0 : index
    %48 = vector.load %arg4[%c0_52, %c0_53] : memref<128x128xf32, #tpu.memory_space<vmem>>, vector<128x128xf32>
    %49 = vector.broadcast %47 : vector<1x128xf32> to vector<128x128xf32>
    %50 = arith.mulf %48, %49 : vector<128x128xf32>
    %cst_54 = arith.constant dense<0.000000e+00> : vector<128xf32>
    %51 = vector.multi_reduction <add>, %50, %cst_54 [1] : vector<128x128xf32> to vector<128xf32>
    %52 = vector.shape_cast %51 : vector<128xf32> to vector<128x1xf32>
    %53 = arith.negf %52 : vector<128x1xf32>
    %54 = math.exp %53 : vector<128x1xf32>
    %cst_55 = arith.constant 1.000000e+00 : f32
    %55 = vector.broadcast %cst_55 : f32 to vector<128x1xf32>
    %56 = arith.addf %55, %54 : vector<128x1xf32>
    %57 = arith.divf %55, %56 : vector<128x1xf32>
    %58 = tpu.transpose %43, [1, 0] : vector<256x128xf32> -> vector<128x256xf32>
    %59 = vector.broadcast %57 : vector<128x1xf32> to vector<128x256xf32>
    %60 = arith.mulf %58, %59 : vector<128x256xf32>
    %c0_56 = arith.constant 0 : index
    %c0_57 = arith.constant 0 : index
    %c0_58 = arith.constant 0 : index
    %61 = vector.load %arg5[%c0_56, %c0_57, %c0_58] : memref<1x128x256xf32, #tpu.memory_space<vmem>>, vector<1x128x256xf32>
    %62 = vector.shape_cast %61 : vector<1x128x256xf32> to vector<128x256xf32>
    %63 = vector.shape_cast %60 : vector<128x256xf32> to vector<1x128x256xf32>
    tpu.vector_store %arg5[%c0_56, %c0_57, %c0_58], %63 {strides = array<i32>} : memref<1x128x256xf32, #tpu.memory_space<vmem>>, vector<1x128x256xf32>,
    return
  }
  func.func @transform_0(%arg0: i32) -> (i32, i32, i32, i32) {
    %c0_i32 = arith.constant 0 : i32
    %c0_i32_0 = arith.constant 0 : i32
    %c0_i32_1 = arith.constant 0 : i32
    %c0_i32_2 = arith.constant 0 : i32
    return %arg0, %c0_i32, %c0_i32_0, %c0_i32_1 : i32, i32, i32, i32
  }
  func.func @transform_1(%arg0: i32) -> (i32, i32) {
    %c0_i32 = arith.constant 0 : i32
    %c0_i32_0 = arith.constant 0 : i32
    %c0_i32_1 = arith.constant 0 : i32
    return %c0_i32, %c0_i32_0 : i32, i32
  }
  func.func @transform_2(%arg0: i32) -> (i32, i32) {
    %c0_i32 = arith.constant 0 : i32
    %c0_i32_0 = arith.constant 0 : i32
    %c0_i32_1 = arith.constant 0 : i32
    return %c0_i32, %c0_i32_0 : i32, i32
  }
  func.func @transform_3(%arg0: i32) -> (i32, i32) {
    %c0_i32 = arith.constant 0 : i32
    %c0_i32_0 = arith.constant 0 : i32
    %c0_i32_1 = arith.constant 0 : i32
    return %c0_i32, %c0_i32_0 : i32, i32
  }
  func.func @transform_4(%arg0: i32) -> (i32, i32, i32) {
    %c0_i32 = arith.constant 0 : i32
    %c0_i32_0 = arith.constant 0 : i32
    %c0_i32_1 = arith.constant 0 : i32
    return %arg0, %c0_i32, %c0_i32_0 : i32, i32, i32
  }
}

</mosaic_0001>

<llo_original>
// kernel: attention_refinement_module.1
$region0: #{attention_refinement_module.1}
  #allocation0 [shape = 'u32[]', space=smem, size = 0x4, offset = 0x4, fixed_abs, tag = 'smem constant byte address 0x4 - core index']
  #allocation1 [shape = 'u32[144,128]{1,0:T(1,128)}', space=vmem, size = 0x12000, scoped, tag = 'internal scratch']
  #allocation2 [shape = 'bf16[256,576]{1,0:T(16,128)(2,1)}', space=vmem, size = 0x50000, scoped, tag = 'scratch operand']
  %s0 = inlined_call_operand.vmem [shape: bf16[2,18,18,64], index: 0, kind: input, shape index: {}]
  %s1 = inlined_call_operand.vmem [shape: bf16[576,128], index: 1, kind: input, shape index: {}]
  %s2 = inlined_call_operand.vmem [shape: f32[1,128], index: 2, kind: input, shape index: {}]
  %s3 = inlined_call_operand.vmem [shape: f32[128,128], index: 3, kind: input, shape index: {}]
  %s4 = inlined_call_operand.vmem [shape: f32[2,128,256], index: 4, kind: output, shape index: {}]
  %s5 = sld [smem:[#allocation0]]
  $region49: #{attention_refinement_module.1} parent=0
    _
  %s7 = ssub.s32 1, %s5
  %s8 = scalar_select 0, %s7, %s5
  loop: start=0, step=1, limit=4
  $region2: #{attention_refinement_module.1} parent=0 // loop_pre_header
    _
  $region3: #{attention_refinement_module.1} parent=0 // loop_header
    %s10 = sphi 0, %s14
    %p11 = scmp.ge.s32.totalorder %s10, 4
    %s20 = sphi 0, %s22
    %s23 = sphi 0, %s20
    %s24 = sphi 0, %s23
    %s40 = sphi 0, %s24
    %s44 = sphi 0, %s44
    %s46 = sphi 0, %s44
    %s47 = sphi 0, %s46
    %s61 = sphi 0, %s47
    %s65 = sphi 0, %s65
    %s67 = sphi 0, %s65
    %s68 = sphi 0, %s67
    %s82 = sphi 0, %s68
    %s86 = sphi 0, %s86
    %s88 = sphi 0, %s86
    %s89 = sphi 0, %s88
    %s103 = sphi 0, %s89
    %s109 = sphi 0, %s111
    %s112 = sphi 0, %s109
    %s113 = sphi 0, %s112
    %s129 = sphi 0, %s113
  $region4: #{attention_refinement_module.1} parent=0 // loop_header_branch
    %13 = sbr.rel (%p11) target = $region8
  $region5: #{attention_refinement_module.1} parent=0 // loop_body
    %s15 = ssub.s32 %s10, 1
    %s16 = ssub.s32 %s10, 2
    %s17 = sadd.s32 %s10, 1
    %s18 = ssub.s32 %s10, %s17
    %p19 = scmp.eq.s32.totalorder %s18, 0
    %s21 = sadd.s32 %s20, 1
    %s22 = scalar_select %p19, %s20, %s21
    %p25 = pneg %p19
    %p26 = scmp.eq.s32.totalorder %s10, 1
    %p27 = por %p25, %p26
    %p28 = scmp.ne.s32.totalorder %s20, %s23
    %p29 = scmp.eq.s32.totalorder %s10, 0
    %p30 = por %p28, %p29
    %p31 = scmp.ne.s32.totalorder %s20, %s23
    %p32 = scmp.eq.s32.totalorder %s15, 1
    %p33 = por %p31, %p32
    %p34 = scmp.ne.s32.totalorder %s23, %s24
    %p35 = scmp.eq.s32.totalorder %s15, 0
    %p36 = por %p34, %p35
    %p37 = scmp.ne.s32.totalorder %s23, %s24
    %p38 = scmp.eq.s32.totalorder %s16, 1
    %p39 = por %p37, %p38
    %p41 = scmp.ne.s32.totalorder %s24, %s40
    %p42 = scmp.eq.s32.totalorder %s16, 0
    %p43 = por %p41, %p42
    %s45 = sadd.s32 %s44, 1
    %p48 = scmp.eq.s32.totalorder %s10, 1
    %p49 = scmp.ne.s32.totalorder %s44, %s46
    %p50 = scmp.eq.s32.totalorder %s10, 0
    %p51 = por %p49, %p50
    %p52 = scmp.ne.s32.totalorder %s44, %s46
    %p53 = scmp.eq.s32.totalorder %s15, 1
    %p54 = por %p52, %p53
    %p55 = scmp.ne.s32.totalorder %s46, %s47
    %p56 = scmp.eq.s32.totalorder %s15, 0
    %p57 = por %p55, %p56
    %p58 = scmp.ne.s32.totalorder %s46, %s47
    %p59 = scmp.eq.s32.totalorder %s16, 1
    %p60 = por %p58, %p59
    %p62 = scmp.ne.s32.totalorder %s47, %s61
    %p63 = scmp.eq.s32.totalorder %s16, 0
    %p64 = por %p62, %p63
    %s66 = sadd.s32 %s65, 1
    %p69 = scmp.eq.s32.totalorder %s10, 1
    %p70 = scmp.ne.s32.totalorder %s65, %s67
    %p71 = scmp.eq.s32.totalorder %s10, 0
    %p72 = por %p70, %p71
    %p73 = scmp.ne.s32.totalorder %s65, %s67
    %p74 = scmp.eq.s32.totalorder %s15, 1
    %p75 = por %p73, %p74
    %p76 = scmp.ne.s32.totalorder %s67, %s68
    %p77 = scmp.eq.s32.totalorder %s15, 0
    %p78 = por %p76, %p77
    %p79 = scmp.ne.s32.totalorder %s67, %s68
    %p80 = scmp.eq.s32.totalorder %s16, 1
    %p81 = por %p79, %p80
    %p83 = scmp.ne.s32.totalorder %s68, %s82
    %p84 = scmp.eq.s32.totalorder %s16, 0
    %p85 = por %p83, %p84
    %s87 = sadd.s32 %s86, 1
    %p90 = scmp.eq.s32.totalorder %s10, 1
    %p91 = scmp.ne.s32.totalorder %s86, %s88
    %p92 = scmp.eq.s32.totalorder %s10, 0
    %p93 = por %p91, %p92
    %p94 = scmp.ne.s32.totalorder %s86, %s88
    %p95 = scmp.eq.s32.totalorder %s15, 1
    %p96 = por %p94, %p95
    %p97 = scmp.ne.s32.totalorder %s88, %s89
    %p98 = scmp.eq.s32.totalorder %s15, 0
    %p99 = por %p97, %p98
    %p100 = scmp.ne.s32.totalorder %s88, %s89
    %p101 = scmp.eq.s32.totalorder %s16, 1
    %p102 = por %p100, %p101
    %p104 = scmp.ne.s32.totalorder %s89, %s103
    %p105 = scmp.eq.s32.totalorder %s16, 0
    %p106 = por %p104, %p105
    %s107 = ssub.s32 %s10, %s17
    %p108 = scmp.eq.s32.totalorder %s107, 0
    %s110 = sadd.s32 %s109, 1
    %s111 = scalar_select %p108, %s109, %s110
    %p114 = pneg %p108
    %p115 = scmp.eq.s32.totalorder %s10, 1
    %p116 = por %p114, %p115
    %p117 = scmp.ne.s32.totalorder %s109, %s112
    %p118 = scmp.eq.s32.totalorder %s10, 0
    %p119 = por %p117, %p118
    %p120 = scmp.ne.s32.totalorder %s109, %s112
    %p121 = scmp.eq.s32.totalorder %s15, 1
    %p122 = por %p120, %p121
    %p123 = scmp.ne.s32.totalorder %s112, %s113
    %p124 = scmp.eq.s32.totalorder %s15, 0
    %p125 = por %p123, %p124
    %p126 = scmp.ne.s32.totalorder %s112, %s113
    %p127 = scmp.eq.s32.totalorder %s16, 1
    %p128 = por %p126, %p127
    %p130 = scmp.ne.s32.totalorder %s113, %s129
    %p131 = scmp.eq.s32.totalorder %s16, 0
    %p132 = por %p130, %p131
    %p133 = scmp.le.s32.totalorder 1, %s10
    %p134 = scmp.lt.s32.totalorder %s10, 3
    %p135 = pnand %p133, %p134
    %p136 = pneg %p135
    // Predicated region
    $region9: #{attention_refinement_module.1} parent=5 // pred_check
      _
    $region10: #{attention_refinement_module.1} parent=5 // pred_check_branch
      %138 = sbr.rel (%p135) target = $region12
    $region11: #{attention_refinement_module.1} parent=5 // pred_region
      %s139 = ssub.s32 %s10, 1
      // Predicated region
      $region13: #{attention_refinement_module.1} parent=11 // pred_check
        %p140 = pneg %p57
      $region14: #{attention_refinement_module.1} parent=11 // pred_check_branch
        %142 = sbr.rel (%p140) target = $region16
      $region15: #{attention_refinement_module.1} parent=11 // pred_region
        _
      $region16: #{attention_refinement_module.1} parent=11 // pred_fallthru
        _
      // Predicated region
      $region17: #{attention_refinement_module.1} parent=11 // pred_check
        %p143 = pneg %p78
      $region18: #{attention_refinement_module.1} parent=11 // pred_check_branch
        %145 = sbr.rel (%p143) target = $region20
      $region19: #{attention_refinement_module.1} parent=11 // pred_region
        _
      $region20: #{attention_refinement_module.1} parent=11 // pred_fallthru
        _
      // Predicated region
      $region21: #{attention_refinement_module.1} parent=11 // pred_check
        %p146 = pneg %p99
      $region22: #{attention_refinement_module.1} parent=11 // pred_check_branch
        %148 = sbr.rel (%p146) target = $region24
      $region23: #{attention_refinement_module.1} parent=11 // pred_region
        _
      $region24: #{attention_refinement_module.1} parent=11 // pred_fallthru
        _
    $region12: #{attention_refinement_module.1} parent=5 // pred_fallthru
      _
    %p149 = scmp.lt.s32.totalorder %s10, 2
    // Predicated region
    $region25: #{attention_refinement_module.1} parent=5 // pred_check
      %p150 = pneg %p149
    $region26: #{attention_refinement_module.1} parent=5 // pred_check_branch
      %152 = sbr.rel (%p150) target = $region28
    $region27: #{attention_refinement_module.1} parent=5 // pred_region
      // Predicated region
      $region29: #{attention_refinement_module.1} parent=27 // pred_check
        %p153 = pneg %p30
      $region30: #{attention_refinement_module.1} parent=27 // pred_check_branch
        %155 = sbr.rel (%p153) target = $region32
      $region31: #{attention_refinement_module.1} parent=27 // pred_region
        %p156 = scmp.lt.s32.totalorder %s10, 1
        %s157 = scalar_select %p156, %s10, 1
        %s158 = smul.addr %s157, 54
        %s159 = smul.addr %s158, 4
        %s160 = scalar_lea.vmem %s0, %s159
      $region32: #{attention_refinement_module.1} parent=27 // pred_fallthru
        _
    $region28: #{attention_refinement_module.1} parent=5 // pred_fallthru
      _
    %p161 = scmp.le.s32.totalorder 1, %s10
    %p162 = scmp.lt.s32.totalorder %s10, 3
    %p163 = pnand %p161, %p162
    %p164 = pneg %p163
    // Predicated region
    $region33: #{attention_refinement_module.1} parent=5 // pred_check
      _
    $region34: #{attention_refinement_module.1} parent=5 // pred_check_branch
      %166 = sbr.rel (%p163) target = $region36
    $region35: #{attention_refinement_module.1} parent=5 // pred_region
      %s167 = ssub.s32 %s10, 1
      %p168 = scmp.lt.s32.totalorder %s15, 1
      %s169 = scalar_select %p168, %s15, 1
      %s170 = smul.addr %s169, 54
      %s171 = smul.addr %s170, 4
      %s172 = scalar_lea.vmem %s0, %s171
      %p173 = pneg %p36
      %p174 = pneg %p33
      %p175 = pneg %p57
      %p176 = pneg %p54
      %p177 = pneg %p78
      %p178 = pneg %p75
      %p179 = pneg %p99
      %p180 = pneg %p96
      %p181 = pneg %p125
      %p182 = pneg %p122
      %p183 = scmp.lt.s32.totalorder %s15, 1
      %s184 = scalar_select %p183, %s15, 1
      %s185 = smul.addr %s184, 32
      %s186 = smul.addr %s185, 8
      %s187 = scalar_lea.vmem %s4, %s186
      %p188 = scmp.lt.s32.totalorder %s15, 1
      %s189 = scalar_select %p188, %s15, 1
      %s190 = smul.addr %s189, 54
      %s191 = smul.addr %s190, 4
      %s192 = scalar_lea.vmem %s0, %s191
      %p193 = scmp.lt.s32.totalorder %s15, 1
      %s194 = scalar_select %p193, %s15, 1
      %s195 = smul.addr %s194, 32
      %s196 = smul.addr %s195, 8
      %s197 = scalar_lea.vmem %s4, %s196
      %v199 = vld [vmem:[%s192] sm:$0xf]
      %v200 = vld [vmem:[%s192 + $0x4] sm:$0xf]
      %v201 = vld [vmem:[%s192 + $0xc] sm:$0xf]
      %v202 = vld [vmem:[%s192 + $0x10] sm:$0xf]
      %v203 = vld [vmem:[%s192 + $0x18] sm:$0xf]
      %v204 = vld [vmem:[%s192 + $0x1c] sm:$0xf]
      %v205 = vld [vmem:[%s192 + $0x24] sm:$0xf]
      %v206 = vld [vmem:[%s192 + $0x28] sm:$0xf]
      %v207 = vld [vmem:[%s192 + $0x30] sm:$0xf]
      %v208 = vld [vmem:[%s192 + $0x34] sm:$0xf]
      %v209 = vld [vmem:[%s192 + $0x3c] sm:$0xf]
      %v210 = vld [vmem:[%s192 + $0x40] sm:$0xf]
      %v211 = vld [vmem:[%s192 + $0x48] sm:$0xf]
      %v212 = vld [vmem:[%s192 + $0x4c] sm:$0xf]
      %v213 = vld [vmem:[%s192 + $0x54] sm:$0xf]
      %v214 = vld [vmem:[%s192 + $0x58] sm:$0xf]
      %v215 = vld [vmem:[%s192 + $0x60] sm:$0xf]
      %v216 = vld [vmem:[%s192 + $0x64] sm:$0xf]
      %v217 = vld [vmem:[%s192 + $0x6c] sm:$0xf]
      %v218 = vld [vmem:[%s192 + $0x70] sm:$0xf]
      %v219 = vld [vmem:[%s192 + $0x78] sm:$0xf]
      %v220 = vld [vmem:[%s192 + $0x7c] sm:$0xf]
      %v221 = vld [vmem:[%s192 + $0x84] sm:$0xf]
      %v222 = vld [vmem:[%s192 + $0x88] sm:$0xf]
      %v223 = vld [vmem:[%s192 + $0x90] sm:$0xf]
      %v224 = vld [vmem:[%s192 + $0x94] sm:$0xf]
      %v225 = vld [vmem:[%s192 + $0x9c] sm:$0xf]
      %v226 = vld [vmem:[%s192 + $0xa0] sm:$0xf]
      %v227 = vld [vmem:[%s192 + $0xa8] sm:$0xf]
      %v228 = vld [vmem:[%s192 + $0xac] sm:$0xf]
      %v229 = vld [vmem:[%s192 + $0xb4] sm:$0xf]
      %v230 = vld [vmem:[%s192 + $0xb8] sm:$0xf]
      %v263 = vunpack.c.l.b16 %v199
      %v264 = vunpack.c.l.b16 %v200
      %v265 = vunpack.c.l.b16 %v201
      %v266 = vunpack.c.l.b16 %v202
      %v267 = vunpack.c.l.b16 %v203
      %v268 = vunpack.c.l.b16 %v204
      %v269 = vunpack.c.l.b16 %v205
      %v270 = vunpack.c.l.b16 %v206
      %v271 = vunpack.c.l.b16 %v207
      %v272 = vunpack.c.l.b16 %v208
      %v273 = vunpack.c.l.b16 %v209
      %v274 = vunpack.c.l.b16 %v210
      %v275 = vunpack.c.l.b16 %v211
      %v276 = vunpack.c.l.b16 %v212
      %v277 = vunpack.c.l.b16 %v213
      %v278 = vunpack.c.l.b16 %v214
      %v279 = vunpack.c.l.b16 %v215
      %v280 = vunpack.c.l.b16 %v216
      %v281 = vunpack.c.l.b16 %v217
      %v282 = vunpack.c.l.b16 %v218
      %v283 = vunpack.c.l.b16 %v219
      %v284 = vunpack.c.l.b16 %v220
      %v285 = vunpack.c.l.b16 %v221
      %v286 = vunpack.c.l.b16 %v222
      %v287 = vunpack.c.l.b16 %v223
      %v288 = vunpack.c.l.b16 %v224
      %v289 = vunpack.c.l.b16 %v225
      %v290 = vunpack.c.l.b16 %v226
      %v291 = vunpack.c.l.b16 %v227
      %v292 = vunpack.c.l.b16 %v228
      %v293 = vunpack.c.l.b16 %v229
      %v294 = vunpack.c.l.b16 %v230
      %v295 = vpack.c.b16 %v264, %v263
      %v296 = vpack.c.b16 %v266, %v265
      %v297 = vpack.c.b16 %v268, %v267
      %v298 = vpack.c.b16 %v270, %v269
      %v299 = vpack.c.b16 %v272, %v271
      %v300 = vpack.c.b16 %v274, %v273
      %v301 = vpack.c.b16 %v276, %v275
      %v302 = vpack.c.b16 %v278, %v277
      %v303 = vpack.c.b16 %v280, %v279
      %v304 = vpack.c.b16 %v282, %v281
      %v305 = vpack.c.b16 %v284, %v283
      %v306 = vpack.c.b16 %v286, %v285
      %v307 = vpack.c.b16 %v288, %v287
      %v308 = vpack.c.b16 %v290, %v289
      %v309 = vpack.c.b16 %v292, %v291
      %v310 = vpack.c.b16 %v294, %v293
      %vm327 = vcmask 523264
      %328 = vst.msk [vmem:[#allocation2] sm:$0xff] %vm327, %v295
      %329 = vst.msk [vmem:[#allocation2 + $0x28] sm:$0xff] %vm327, %v296
      %330 = vst.msk [vmem:[#allocation2 + $0x50] sm:$0xff] %vm327, %v297
      %331 = vst.msk [vmem:[#allocation2 + $0x78] sm:$0xff] %vm327, %v298
      %332 = vst.msk [vmem:[#allocation2 + $0xa0] sm:$0xff] %vm327, %v299
      %333 = vst.msk [vmem:[#allocation2 + $0xc8] sm:$0xff] %vm327, %v300
      %334 = vst.msk [vmem:[#allocation2 + $0xf0] sm:$0xff] %vm327, %v301
      %335 = vst.msk [vmem:[#allocation2 + $0x118] sm:$0xff] %vm327, %v302
      %336 = vst.msk [vmem:[#allocation2 + $0x140] sm:$0xff] %vm327, %v303
      %337 = vst.msk [vmem:[#allocation2 + $0x168] sm:$0xff] %vm327, %v304
      %338 = vst.msk [vmem:[#allocation2 + $0x190] sm:$0xff] %vm327, %v305
      %339 = vst.msk [vmem:[#allocation2 + $0x1b8] sm:$0xff] %vm327, %v306
      %340 = vst.msk [vmem:[#allocation2 + $0x1e0] sm:$0xff] %vm327, %v307
      %341 = vst.msk [vmem:[#allocation2 + $0x208] sm:$0xff] %vm327, %v308
      %342 = vst.msk [vmem:[#allocation2 + $0x230] sm:$0xff] %vm327, %v309
      %343 = vst.msk [vmem:[#allocation2 + $0x258] sm:$0xff] %vm327, %v310
      %v344 = vld [vmem:[%s192] sm:$0xf]
      %v345 = vld [vmem:[%s192 + $0x4] sm:$0xf]
      %v346 = vld [vmem:[%s192 + $0x8] sm:$0x1]
      %v347 = vld [vmem:[%s192 + $0xc] sm:$0xf]
      %v348 = vld [vmem:[%s192 + $0x10] sm:$0xf]
      %v349 = vld [vmem:[%s192 + $0x14] sm:$0x1]
      %v350 = vld [vmem:[%s192 + $0x18] sm:$0xf]
      %v351 = vld [vmem:[%s192 + $0x1c] sm:$0xf]
      %v352 = vld [vmem:[%s192 + $0x20] sm:$0x1]
      %v353 = vld [vmem:[%s192 + $0x24] sm:$0xf]
      %v354 = vld [vmem:[%s192 + $0x28] sm:$0xf]
      %v355 = vld [vmem:[%s192 + $0x2c] sm:$0x1]
      %v356 = vld [vmem:[%s192 + $0x30] sm:$0xf]
      %v357 = vld [vmem:[%s192 + $0x34] sm:$0xf]
      %v358 = vld [vmem:[%s192 + $0x38] sm:$0x1]
      %v359 = vld [vmem:[%s192 + $0x3c] sm:$0xf]
      %v360 = vld [vmem:[%s192 + $0x40] sm:$0xf]
      %v361 = vld [vmem:[%s192 + $0x44] sm:$0x1]
      %v362 = vld [vmem:[%s192 + $0x48] sm:$0xf]
      %v363 = vld [vmem:[%s192 + $0x4c] sm:$0xf]
      %v364 = vld [vmem:[%s192 + $0x50] sm:$0x1]
      %v365 = vld [vmem:[%s192 + $0x54] sm:$0xf]
      %v366 = vld [vmem:[%s192 + $0x58] sm:$0xf]
      %v367 = vld [vmem:[%s192 + $0x5c] sm:$0x1]
      %v368 = vld [vmem:[%s192 + $0x60] sm:$0xf]
      %v369 = vld [vmem:[%s192 + $0x64] sm:$0xf]
      %v370 = vld [vmem:[%s192 + $0x68] sm:$0x1]
      %v371 = vld [vmem:[%s192 + $0x6c] sm:$0xf]
      %v372 = vld [vmem:[%s192 + $0x70] sm:$0xf]
      %v373 = vld [vmem:[%s192 + $0x74] sm:$0x1]
      %v374 = vld [vmem:[%s192 + $0x78] sm:$0xf]
      %v375 = vld [vmem:[%s192 + $0x7c] sm:$0xf]
      %v376 = vld [vmem:[%s192 + $0x80] sm:$0x1]
      %v377 = vld [vmem:[%s192 + $0x84] sm:$0xf]
      %v378 = vld [vmem:[%s192 + $0x88] sm:$0xf]
      %v379 = vld [vmem:[%s192 + $0x8c] sm:$0x1]
      %v380 = vld [vmem:[%s192 + $0x90] sm:$0xf]
      %v381 = vld [vmem:[%s192 + $0x94] sm:$0xf]
      %v382 = vld [vmem:[%s192 + $0x98] sm:$0x1]
      %v383 = vld [vmem:[%s192 + $0x9c] sm:$0xf]
      %v384 = vld [vmem:[%s192 + $0xa0] sm:$0xf]
      %v385 = vld [vmem:[%s192 + $0xa4] sm:$0x1]
      %v386 = vld [vmem:[%s192 + $0xa8] sm:$0xf]
      %v387 = vld [vmem:[%s192 + $0xac] sm:$0xf]
      %v388 = vld [vmem:[%s192 + $0xb0] sm:$0x1]
      %v389 = vld [vmem:[%s192 + $0xb4] sm:$0xf]
      %v390 = vld [vmem:[%s192 + $0xb8] sm:$0xf]
      %v391 = vld [vmem:[%s192 + $0xbc] sm:$0x1]
      %vm392 = vsmask.f32 3328
      %vm393 = vsmask.f32 7440
      %vm394 = vmor %vm392, %vm393
      %v396 = vshrl.u32 %v344, 16
      %v398 = vrot.slane %v396, 4
      %v399 = vshll.u32 %v344, 16
      %v401 = vrot.slane %v399, 5
      %v402 = vor.u32 %v398, %v401
      %v403 = vrot.slane %v402, 4
      %v405 = vshll.u32 %v345, 16
      %v407 = vrot.slane %v405, 5
      %v408 = vsel %vm394, %v403, %v407
      %v409 = vshrl.u32 %v345, 16
      %v411 = vrot.slane %v409, 4
      %v412 = vor.u32 %v411, %v407
      %v413 = vrot.slane %v412, 4
      %v415 = vshll.u32 %v346, 16
      %v417 = vrot.slane %v415, 5
      %v418 = vsel %vm394, %v413, %v417
      %v420 = vshrl.u32 %v347, 16
      %v422 = vrot.slane %v420, 4
      %v423 = vshll.u32 %v347, 16
      %v425 = vrot.slane %v423, 5
      %v426 = vor.u32 %v422, %v425
      %v427 = vrot.slane %v426, 4
      %v429 = vshll.u32 %v348, 16
      %v431 = vrot.slane %v429, 5
      %v432 = vsel %vm394, %v427, %v431
      %v433 = vshrl.u32 %v348, 16
      %v435 = vrot.slane %v433, 4
      %v436 = vor.u32 %v435, %v431
      %v437 = vrot.slane %v436, 4
      %v439 = vshll.u32 %v349, 16
      %v441 = vrot.slane %v439, 5
      %v442 = vsel %vm394, %v437, %v441
      %v444 = vshrl.u32 %v350, 16
      %v446 = vrot.slane %v444, 4
      %v447 = vshll.u32 %v350, 16
      %v449 = vrot.slane %v447, 5
      %v450 = vor.u32 %v446, %v449
      %v451 = vrot.slane %v450, 4
      %v453 = vshll.u32 %v351, 16
      %v455 = vrot.slane %v453, 5
      %v456 = vsel %vm394, %v451, %v455
      %v457 = vshrl.u32 %v351, 16
      %v459 = vrot.slane %v457, 4
      %v460 = vor.u32 %v459, %v455
      %v461 = vrot.slane %v460, 4
      %v463 = vshll.u32 %v352, 16
      %v465 = vrot.slane %v463, 5
      %v466 = vsel %vm394, %v461, %v465
      %v468 = vshrl.u32 %v353, 16
      %v470 = vrot.slane %v468, 4
      %v471 = vshll.u32 %v353, 16
      %v473 = vrot.slane %v471, 5
      %v474 = vor.u32 %v470, %v473
      %v475 = vrot.slane %v474, 4
      %v477 = vshll.u32 %v354, 16
      %v479 = vrot.slane %v477, 5
      %v480 = vsel %vm394, %v475, %v479
      %v481 = vshrl.u32 %v354, 16
      %v483 = vrot.slane %v481, 4
      %v484 = vor.u32 %v483, %v479
      %v485 = vrot.slane %v484, 4
      %v487 = vshll.u32 %v355, 16
      %v489 = vrot.slane %v487, 5
      %v490 = vsel %vm394, %v485, %v489
      %v492 = vshrl.u32 %v356, 16
      %v494 = vrot.slane %v492, 4
      %v495 = vshll.u32 %v356, 16
      %v497 = vrot.slane %v495, 5
      %v498 = vor.u32 %v494, %v497
      %v499 = vrot.slane %v498, 4
      %v501 = vshll.u32 %v357, 16
      %v503 = vrot.slane %v501, 5
      %v504 = vsel %vm394, %v499, %v503
      %v505 = vshrl.u32 %v357, 16
      %v507 = vrot.slane %v505, 4
      %v508 = vor.u32 %v507, %v503
      %v509 = vrot.slane %v508, 4
      %v511 = vshll.u32 %v358, 16
      %v513 = vrot.slane %v511, 5
      %v514 = vsel %vm394, %v509, %v513
      %v516 = vshrl.u32 %v359, 16
      %v518 = vrot.slane %v516, 4
      %v519 = vshll.u32 %v359, 16
      %v521 = vrot.slane %v519, 5
      %v522 = vor.u32 %v518, %v521
      %v523 = vrot.slane %v522, 4
      %v525 = vshll.u32 %v360, 16
      %v527 = vrot.slane %v525, 5
      %v528 = vsel %vm394, %v523, %v527
      %v529 = vshrl.u32 %v360, 16
      %v531 = vrot.slane %v529, 4
      %v532 = vor.u32 %v531, %v527
      %v533 = vrot.slane %v532, 4
      %v535 = vshll.u32 %v361, 16
      %v537 = vrot.slane %v535, 5
      %v538 = vsel %vm394, %v533, %v537
      %v540 = vshrl.u32 %v362, 16
      %v542 = vrot.slane %v540, 4
      %v543 = vshll.u32 %v362, 16
      %v545 = vrot.slane %v543, 5
      %v546 = vor.u32 %v542, %v545
      %v547 = vrot.slane %v546, 4
      %v549 = vshll.u32 %v363, 16
      %v551 = vrot.slane %v549, 5
      %v552 = vsel %vm394, %v547, %v551
      %v553 = vshrl.u32 %v363, 16
      %v555 = vrot.slane %v553, 4
      %v556 = vor.u32 %v555, %v551
      %v557 = vrot.slane %v556, 4
      %v559 = vshll.u32 %v364, 16
      %v561 = vrot.slane %v559, 5
      %v562 = vsel %vm394, %v557, %v561
      %v564 = vshrl.u32 %v365, 16
      %v566 = vrot.slane %v564, 4
      %v567 = vshll.u32 %v365, 16
      %v569 = vrot.slane %v567, 5
      %v570 = vor.u32 %v566, %v569
      %v571 = vrot.slane %v570, 4
      %v573 = vshll.u32 %v366, 16
      %v575 = vrot.slane %v573, 5
      %v576 = vsel %vm394, %v571, %v575
      %v577 = vshrl.u32 %v366, 16
      %v579 = vrot.slane %v577, 4
      %v580 = vor.u32 %v579, %v575
      %v581 = vrot.slane %v580, 4
      %v583 = vshll.u32 %v367, 16
      %v585 = vrot.slane %v583, 5
      %v586 = vsel %vm394, %v581, %v585
      %v588 = vshrl.u32 %v368, 16
      %v590 = vrot.slane %v588, 4
      %v591 = vshll.u32 %v368, 16
      %v593 = vrot.slane %v591, 5
      %v594 = vor.u32 %v590, %v593
      %v595 = vrot.slane %v594, 4
      %v597 = vshll.u32 %v369, 16
      %v599 = vrot.slane %v597, 5
      %v600 = vsel %vm394, %v595, %v599
      %v601 = vshrl.u32 %v369, 16
      %v603 = vrot.slane %v601, 4
      %v604 = vor.u32 %v603, %v599
      %v605 = vrot.slane %v604, 4
      %v607 = vshll.u32 %v370, 16
      %v609 = vrot.slane %v607, 5
      %v610 = vsel %vm394, %v605, %v609
      %v612 = vshrl.u32 %v371, 16
      %v614 = vrot.slane %v612, 4
      %v615 = vshll.u32 %v371, 16
      %v617 = vrot.slane %v615, 5
      %v618 = vor.u32 %v614, %v617
      %v619 = vrot.slane %v618, 4
      %v621 = vshll.u32 %v372, 16
      %v623 = vrot.slane %v621, 5
      %v624 = vsel %vm394, %v619, %v623
      %v625 = vshrl.u32 %v372, 16
      %v627 = vrot.slane %v625, 4
      %v628 = vor.u32 %v627, %v623
      %v629 = vrot.slane %v628, 4
      %v631 = vshll.u32 %v373, 16
      %v633 = vrot.slane %v631, 5
      %v634 = vsel %vm394, %v629, %v633
      %v636 = vshrl.u32 %v374, 16
      %v638 = vrot.slane %v636, 4
      %v639 = vshll.u32 %v374, 16
      %v641 = vrot.slane %v639, 5
      %v642 = vor.u32 %v638, %v641
      %v643 = vrot.slane %v642, 4
      %v645 = vshll.u32 %v375, 16
      %v647 = vrot.slane %v645, 5
      %v648 = vsel %vm394, %v643, %v647
      %v649 = vshrl.u32 %v375, 16
      %v651 = vrot.slane %v649, 4
      %v652 = vor.u32 %v651, %v647
      %v653 = vrot.slane %v652, 4
      %v655 = vshll.u32 %v376, 16
      %v657 = vrot.slane %v655, 5
      %v658 = vsel %vm394, %v653, %v657
      %v660 = vshrl.u32 %v377, 16
      %v662 = vrot.slane %v660, 4
      %v663 = vshll.u32 %v377, 16
      %v665 = vrot.slane %v663, 5
      %v666 = vor.u32 %v662, %v665
      %v667 = vrot.slane %v666, 4
      %v669 = vshll.u32 %v378, 16
      %v671 = vrot.slane %v669, 5
      %v672 = vsel %vm394, %v667, %v671
      %v673 = vshrl.u32 %v378, 16
      %v675 = vrot.slane %v673, 4
      %v676 = vor.u32 %v675, %v671
      %v677 = vrot.slane %v676, 4
      %v679 = vshll.u32 %v379, 16
      %v681 = vrot.slane %v679, 5
      %v682 = vsel %vm394, %v677, %v681
      %v684 = vshrl.u32 %v380, 16
      %v686 = vrot.slane %v684, 4
      %v687 = vshll.u32 %v380, 16
      %v689 = vrot.slane %v687, 5
      %v690 = vor.u32 %v686, %v689
      %v691 = vrot.slane %v690, 4
      %v693 = vshll.u32 %v381, 16
      %v695 = vrot.slane %v693, 5
      %v696 = vsel %vm394, %v691, %v695
      %v697 = vshrl.u32 %v381, 16
      %v699 = vrot.slane %v697, 4
      %v700 = vor.u32 %v699, %v695
      %v701 = vrot.slane %v700, 4
      %v703 = vshll.u32 %v382, 16
      %v705 = vrot.slane %v703, 5
      %v706 = vsel %vm394, %v701, %v705
      %v708 = vshrl.u32 %v383, 16
      %v710 = vrot.slane %v708, 4
      %v711 = vshll.u32 %v383, 16
      %v713 = vrot.slane %v711, 5
      %v714 = vor.u32 %v710, %v713
      %v715 = vrot.slane %v714, 4
      %v717 = vshll.u32 %v384, 16
      %v719 = vrot.slane %v717, 5
      %v720 = vsel %vm394, %v715, %v719
      %v721 = vshrl.u32 %v384, 16
      %v723 = vrot.slane %v721, 4
      %v724 = vor.u32 %v723, %v719
      %v725 = vrot.slane %v724, 4
      %v727 = vshll.u32 %v385, 16
      %v729 = vrot.slane %v727, 5
      %v730 = vsel %vm394, %v725, %v729
      %v732 = vshrl.u32 %v386, 16
      %v734 = vrot.slane %v732, 4
      %v735 = vshll.u32 %v386, 16
      %v737 = vrot.slane %v735, 5
      %v738 = vor.u32 %v734, %v737
      %v739 = vrot.slane %v738, 4
      %v741 = vshll.u32 %v387, 16
      %v743 = vrot.slane %v741, 5
      %v744 = vsel %vm394, %v739, %v743
      %v745 = vshrl.u32 %v387, 16
      %v747 = vrot.slane %v745, 4
      %v748 = vor.u32 %v747, %v743
      %v749 = vrot.slane %v748, 4
      %v751 = vshll.u32 %v388, 16
      %v753 = vrot.slane %v751, 5
      %v754 = vsel %vm394, %v749, %v753
      %v756 = vshrl.u32 %v389, 16
      %v758 = vrot.slane %v756, 4
      %v759 = vshll.u32 %v389, 16
      %v761 = vrot.slane %v759, 5
      %v762 = vor.u32 %v758, %v761
      %v763 = vrot.slane %v762, 4
      %v765 = vshll.u32 %v390, 16
      %v767 = vrot.slane %v765, 5
      %v768 = vsel %vm394, %v763, %v767
      %v769 = vshrl.u32 %v390, 16
      %v771 = vrot.slane %v769, 4
      %v772 = vor.u32 %v771, %v767
      %v773 = vrot.slane %v772, 4
      %v775 = vshll.u32 %v391, 16
      %v777 = vrot.slane %v775, 5
      %v778 = vsel %vm394, %v773, %v777
      %v779 = vunpack.c.l.b16 %v408
      %v780 = vunpack.c.l.b16 %v418
      %v781 = vunpack.c.l.b16 %v432
      %v782 = vunpack.c.l.b16 %v442
      %v783 = vunpack.c.l.b16 %v456
      %v784 = vunpack.c.l.b16 %v466
      %v785 = vunpack.c.l.b16 %v480
      %v786 = vunpack.c.l.b16 %v490
      %v787 = vunpack.c.l.b16 %v504
      %v788 = vunpack.c.l.b16 %v514
      %v789 = vunpack.c.l.b16 %v528
      %v790 = vunpack.c.l.b16 %v538
      %v791 = vunpack.c.l.b16 %v552
      %v792 = vunpack.c.l.b16 %v562
      %v793 = vunpack.c.l.b16 %v576
      %v794 = vunpack.c.l.b16 %v586
      %v795 = vunpack.c.l.b16 %v600
      %v796 = vunpack.c.l.b16 %v610
      %v797 = vunpack.c.l.b16 %v624
      %v798 = vunpack.c.l.b16 %v634
      %v799 = vunpack.c.l.b16 %v648
      %v800 = vunpack.c.l.b16 %v658
      %v801 = vunpack.c.l.b16 %v672
      %v802 = vunpack.c.l.b16 %v682
      %v803 = vunpack.c.l.b16 %v696
      %v804 = vunpack.c.l.b16 %v706
      %v805 = vunpack.c.l.b16 %v720
      %v806 = vunpack.c.l.b16 %v730
      %v807 = vunpack.c.l.b16 %v744
      %v808 = vunpack.c.l.b16 %v754
      %v809 = vunpack.c.l.b16 %v768
      %v810 = vunpack.c.l.b16 %v778
      %v811 = vpack.c.b16 %v780, %v779
      %v812 = vpack.c.b16 %v782, %v781
      %v813 = vpack.c.b16 %v784, %v783
      %v814 = vpack.c.b16 %v786, %v785
      %v815 = vpack.c.b16 %v788, %v787
      %v816 = vpack.c.b16 %v790, %v789
      %v817 = vpack.c.b16 %v792, %v791
      %v818 = vpack.c.b16 %v794, %v793
      %v819 = vpack.c.b16 %v796, %v795
      %v820 = vpack.c.b16 %v798, %v797
      %v821 = vpack.c.b16 %v800, %v799
      %v822 = vpack.c.b16 %v802, %v801
      %v823 = vpack.c.b16 %v804, %v803
      %v824 = vpack.c.b16 %v806, %v805
      %v825 = vpack.c.b16 %v808, %v807
      %v826 = vpack.c.b16 %v810, %v809
      %827 = vrot.lane.b32.xlu0 %v811, 64
      %v828 = vpop.permute.xlu0 %827
      %829 = vrot.lane.b32.xlu0 %v812, 64
      %v830 = vpop.permute.xlu0 %829
      %831 = vrot.lane.b32.xlu0 %v813, 64
      %v832 = vpop.permute.xlu0 %831
      %833 = vrot.lane.b32.xlu0 %v814, 64
      %v834 = vpop.permute.xlu0 %833
      %835 = vrot.lane.b32.xlu0 %v815, 64
      %v836 = vpop.permute.xlu0 %835
      %837 = vrot.lane.b32.xlu0 %v816, 64
      %v838 = vpop.permute.xlu0 %837
      %839 = vrot.lane.b32.xlu0 %v817, 64
      %v840 = vpop.permute.xlu0 %839
      %841 = vrot.lane.b32.xlu0 %v818, 64
      %v842 = vpop.permute.xlu0 %841
      %843 = vrot.lane.b32.xlu0 %v819, 64
      %v844 = vpop.permute.xlu0 %843
      %845 = vrot.lane.b32.xlu0 %v820, 64
      %v846 = vpop.permute.xlu0 %845
      %847 = vrot.lane.b32.xlu0 %v821, 64
      %v848 = vpop.permute.xlu0 %847
      %849 = vrot.lane.b32.xlu0 %v822, 64
      %v850 = vpop.permute.xlu0 %849
      %851 = vrot.lane.b32.xlu0 %v823, 64
      %v852 = vpop.permute.xlu0 %851
      %853 = vrot.lane.b32.xlu0 %v824, 64
      %v854 = vpop.permute.xlu0 %853
      %855 = vrot.lane.b32.xlu0 %v825, 64
      %v856 = vpop.permute.xlu0 %855
      %857 = vrot.lane.b32.xlu0 %v826, 64
      %v858 = vpop.permute.xlu0 %857
      %vm875 = vcmask 1048064
      %876 = vst.msk [vmem:[#allocation2] sm:$0xff] %vm875, %v828
      %877 = vst.msk [vmem:[#allocation2 + $0x28] sm:$0xff] %vm875, %v830
      %878 = vst.msk [vmem:[#allocation2 + $0x50] sm:$0xff] %vm875, %v832
      %879 = vst.msk [vmem:[#allocation2 + $0x78] sm:$0xff] %vm875, %v834
      %880 = vst.msk [vmem:[#allocation2 + $0xa0] sm:$0xff] %vm875, %v836
      %881 = vst.msk [vmem:[#allocation2 + $0xc8] sm:$0xff] %vm875, %v838
      %882 = vst.msk [vmem:[#allocation2 + $0xf0] sm:$0xff] %vm875, %v840
      %883 = vst.msk [vmem:[#allocation2 + $0x118] sm:$0xff] %vm875, %v842
      %884 = vst.msk [vmem:[#allocation2 + $0x140] sm:$0xff] %vm875, %v844
      %885 = vst.msk [vmem:[#allocation2 + $0x168] sm:$0xff] %vm875, %v846
      %886 = vst.msk [vmem:[#allocation2 + $0x190] sm:$0xff] %vm875, %v848
      %887 = vst.msk [vmem:[#allocation2 + $0x1b8] sm:$0xff] %vm875, %v850
      %888 = vst.msk [vmem:[#allocation2 + $0x1e0] sm:$0xff] %vm875, %v852
      %889 = vst.msk [vmem:[#allocation2 + $0x208] sm:$0xff] %vm875, %v854
      %890 = vst.msk [vmem:[#allocation2 + $0x230] sm:$0xff] %vm875, %v856
      %891 = vst.msk [vmem:[#allocation2 + $0x258] sm:$0xff] %vm875, %v858
      %v892 = vld [vmem:[%s192] sm:$0xe]
      %v893 = vld [vmem:[%s192 + $0x4] sm:$0xf]
      %v894 = vld [vmem:[%s192 + $0x8] sm:$0x1]
      %v895 = vld [vmem:[%s192 + $0xc] sm:$0xe]
      %v896 = vld [vmem:[%s192 + $0x10] sm:$0xf]
      %v897 = vld [vmem:[%s192 + $0x14] sm:$0x1]
      %v898 = vld [vmem:[%s192 + $0x18] sm:$0xe]
      %v899 = vld [vmem:[%s192 + $0x1c] sm:$0xf]
      %v900 = vld [vmem:[%s192 + $0x20] sm:$0x1]
      %v901 = vld [vmem:[%s192 + $0x24] sm:$0xe]
      %v902 = vld [vmem:[%s192 + $0x28] sm:$0xf]
      %v903 = vld [vmem:[%s192 + $0x2c] sm:$0x1]
      %v904 = vld [vmem:[%s192 + $0x30] sm:$0xe]
      %v905 = vld [vmem:[%s192 + $0x34] sm:$0xf]
      %v906 = vld [vmem:[%s192 + $0x38] sm:$0x1]
      %v907 = vld [vmem:[%s192 + $0x3c] sm:$0xe]
      %v908 = vld [vmem:[%s192 + $0x40] sm:$0xf]
      %v909 = vld [vmem:[%s192 + $0x44] sm:$0x1]
      %v910 = vld [vmem:[%s192 + $0x48] sm:$0xe]
      %v911 = vld [vmem:[%s192 + $0x4c] sm:$0xf]
      %v912 = vld [vmem:[%s192 + $0x50] sm:$0x1]
      %v913 = vld [vmem:[%s192 + $0x54] sm:$0xe]
      %v914 = vld [vmem:[%s192 + $0x58] sm:$0xf]
      %v915 = vld [vmem:[%s192 + $0x5c] sm:$0x1]
      %v916 = vld [vmem:[%s192 + $0x60] sm:$0xe]
      %v917 = vld [vmem:[%s192 + $0x64] sm:$0xf]
      %v918 = vld [vmem:[%s192 + $0x68] sm:$0x1]
      %v919 = vld [vmem:[%s192 + $0x6c] sm:$0xe]
      %v920 = vld [vmem:[%s192 + $0x70] sm:$0xf]
      %v921 = vld [vmem:[%s192 + $0x74] sm:$0x1]
      %v922 = vld [vmem:[%s192 + $0x78] sm:$0xe]
      %v923 = vld [vmem:[%s192 + $0x7c] sm:$0xf]
      %v924 = vld [vmem:[%s192 + $0x80] sm:$0x1]
      %v925 = vld [vmem:[%s192 + $0x84] sm:$0xe]
      %v926 = vld [vmem:[%s192 + $0x88] sm:$0xf]
      %v927 = vld [vmem:[%s192 + $0x8c] sm:$0x1]
      %v928 = vld [vmem:[%s192 + $0x90] sm:$0xe]
      %v929 = vld [vmem:[%s192 + $0x94] sm:$0xf]
      %v930 = vld [vmem:[%s192 + $0x98] sm:$0x1]
      %v931 = vld [vmem:[%s192 + $0x9c] sm:$0xe]
      %v932 = vld [vmem:[%s192 + $0xa0] sm:$0xf]
      %v933 = vld [vmem:[%s192 + $0xa4] sm:$0x1]
      %v934 = vld [vmem:[%s192 + $0xa8] sm:$0xe]
      %v935 = vld [vmem:[%s192 + $0xac] sm:$0xf]
      %v936 = vld [vmem:[%s192 + $0xb0] sm:$0x1]
      %v937 = vld [vmem:[%s192 + $0xb4] sm:$0xe]
      %v938 = vld [vmem:[%s192 + $0xb8] sm:$0xf]
      %v939 = vld [vmem:[%s192 + $0xbc] sm:$0x1]
      %vm988 = vcmask 1042432
      %vm989 = vcmask 1046532
      %vm990 = vmor %vm988, %vm989
      %v991 = vrot.slane %v892, 5
      %v992 = vrot.slane %v991, 4
      %v993 = vrot.slane %v893, 5
      %v994 = vsel %vm990, %v992, %v993
      %v995 = vrot.slane %v993, 4
      %v996 = vrot.slane %v894, 5
      %v997 = vsel %vm990, %v995, %v996
      %v998 = vrot.slane %v895, 5
      %v999 = vrot.slane %v998, 4
      %v1000 = vrot.slane %v896, 5
      %v1001 = vsel %vm990, %v999, %v1000
      %v1002 = vrot.slane %v1000, 4
      %v1003 = vrot.slane %v897, 5
      %v1004 = vsel %vm990, %v1002, %v1003
      %v1005 = vrot.slane %v898, 5
      %v1006 = vrot.slane %v1005, 4
      %v1007 = vrot.slane %v899, 5
      %v1008 = vsel %vm990, %v1006, %v1007
      %v1009 = vrot.slane %v1007, 4
      %v1010 = vrot.slane %v900, 5
      %v1011 = vsel %vm990, %v1009, %v1010
      %v1012 = vrot.slane %v901, 5
      %v1013 = vrot.slane %v1012, 4
      %v1014 = vrot.slane %v902, 5
      %v1015 = vsel %vm990, %v1013, %v1014
      %v1016 = vrot.slane %v1014, 4
      %v1017 = vrot.slane %v903, 5
      %v1018 = vsel %vm990, %v1016, %v1017
      %v1019 = vrot.slane %v904, 5
      %v1020 = vrot.slane %v1019, 4
      %v1021 = vrot.slane %v905, 5
      %v1022 = vsel %vm990, %v1020, %v1021
      %v1023 = vrot.slane %v1021, 4
      %v1024 = vrot.slane %v906, 5
      %v1025 = vsel %vm990, %v1023, %v1024
      %v1026 = vrot.slane %v907, 5
      %v1027 = vrot.slane %v1026, 4
      %v1028 = vrot.slane %v908, 5
      %v1029 = vsel %vm990, %v1027, %v1028
      %v1030 = vrot.slane %v1028, 4
      %v1031 = vrot.slane %v909, 5
      %v1032 = vsel %vm990, %v1030, %v1031
      %v1033 = vrot.slane %v910, 5
      %v1034 = vrot.slane %v1033, 4
      %v1035 = vrot.slane %v911, 5
      %v1036 = vsel %vm990, %v1034, %v1035
      %v1037 = vrot.slane %v1035, 4
      %v1038 = vrot.slane %v912, 5
      %v1039 = vsel %vm990, %v1037, %v1038
      %v1040 = vrot.slane %v913, 5
      %v1041 = vrot.slane %v1040, 4
      %v1042 = vrot.slane %v914, 5
      %v1043 = vsel %vm990, %v1041, %v1042
      %v1044 = vrot.slane %v1042, 4
      %v1045 = vrot.slane %v915, 5
      %v1046 = vsel %vm990, %v1044, %v1045
      %v1047 = vrot.slane %v916, 5
      %v1048 = vrot.slane %v1047, 4
      %v1049 = vrot.slane %v917, 5
      %v1050 = vsel %vm990, %v1048, %v1049
      %v1051 = vrot.slane %v1049, 4
      %v1052 = vrot.slane %v918, 5
      %v1053 = vsel %vm990, %v1051, %v1052
      %v1054 = vrot.slane %v919, 5
      %v1055 = vrot.slane %v1054, 4
      %v1056 = vrot.slane %v920, 5
      %v1057 = vsel %vm990, %v1055, %v1056
      %v1058 = vrot.slane %v1056, 4
      %v1059 = vrot.slane %v921, 5
      %v1060 = vsel %vm990, %v1058, %v1059
      %v1061 = vrot.slane %v922, 5
      %v1062 = vrot.slane %v1061, 4
      %v1063 = vrot.slane %v923, 5
      %v1064 = vsel %vm990, %v1062, %v1063
      %v1065 = vrot.slane %v1063, 4
      %v1066 = vrot.slane %v924, 5
      %v1067 = vsel %vm990, %v1065, %v1066
      %v1068 = vrot.slane %v925, 5
      %v1069 = vrot.slane %v1068, 4
      %v1070 = vrot.slane %v926, 5
      %v1071 = vsel %vm990, %v1069, %v1070
      %v1072 = vrot.slane %v1070, 4
      %v1073 = vrot.slane %v927, 5
      %v1074 = vsel %vm990, %v1072, %v1073
      %v1075 = vrot.slane %v928, 5
      %v1076 = vrot.slane %v1075, 4
      %v1077 = vrot.slane %v929, 5
      %v1078 = vsel %vm990, %v1076, %v1077
      %v1079 = vrot.slane %v1077, 4
      %v1080 = vrot.slane %v930, 5
      %v1081 = vsel %vm990, %v1079, %v1080
      %v1082 = vrot.slane %v931, 5
      %v1083 = vrot.slane %v1082, 4
      %v1084 = vrot.slane %v932, 5
      %v1085 = vsel %vm990, %v1083, %v1084
      %v1086 = vrot.slane %v1084, 4
      %v1087 = vrot.slane %v933, 5
      %v1088 = vsel %vm990, %v1086, %v1087
      %v1089 = vrot.slane %v934, 5
      %v1090 = vrot.slane %v1089, 4
      %v1091 = vrot.slane %v935, 5
      %v1092 = vsel %vm990, %v1090, %v1091
      %v1093 = vrot.slane %v1091, 4
      %v1094 = vrot.slane %v936, 5
      %v1095 = vsel %vm990, %v1093, %v1094
      %v1096 = vrot.slane %v937, 5
      %v1097 = vrot.slane %v1096, 4
      %v1098 = vrot.slane %v938, 5
      %v1099 = vsel %vm990, %v1097, %v1098
      %v1100 = vrot.slane %v1098, 4
      %v1101 = vrot.slane %v939, 5
      %v1102 = vsel %vm990, %v1100, %v1101
      %v1103 = vunpack.c.l.b16 %v994
      %v1104 = vunpack.c.l.b16 %v997
      %v1105 = vunpack.c.l.b16 %v1001
      %v1106 = vunpack.c.l.b16 %v1004
      %v1107 = vunpack.c.l.b16 %v1008
      %v1108 = vunpack.c.l.b16 %v1011
      %v1109 = vunpack.c.l.b16 %v1015
      %v1110 = vunpack.c.l.b16 %v1018
      %v1111 = vunpack.c.l.b16 %v1022
      %v1112 = vunpack.c.l.b16 %v1025
      %v1113 = vunpack.c.l.b16 %v1029
      %v1114 = vunpack.c.l.b16 %v1032
      %v1115 = vunpack.c.l.b16 %v1036
      %v1116 = vunpack.c.l.b16 %v1039
      %v1117 = vunpack.c.l.b16 %v1043
      %v1118 = vunpack.c.l.b16 %v1046
      %v1119 = vunpack.c.l.b16 %v1050
      %v1120 = vunpack.c.l.b16 %v1053
      %v1121 = vunpack.c.l.b16 %v1057
      %v1122 = vunpack.c.l.b16 %v1060
      %v1123 = vunpack.c.l.b16 %v1064
      %v1124 = vunpack.c.l.b16 %v1067
      %v1125 = vunpack.c.l.b16 %v1071
      %v1126 = vunpack.c.l.b16 %v1074
      %v1127 = vunpack.c.l.b16 %v1078
      %v1128 = vunpack.c.l.b16 %v1081
      %v1129 = vunpack.c.l.b16 %v1085
      %v1130 = vunpack.c.l.b16 %v1088
      %v1131 = vunpack.c.l.b16 %v1092
      %v1132 = vunpack.c.l.b16 %v1095
      %v1133 = vunpack.c.l.b16 %v1099
      %v1134 = vunpack.c.l.b16 %v1102
      %v1135 = vpack.c.b16 %v1104, %v1103
      %v1136 = vpack.c.b16 %v1106, %v1105
      %v1137 = vpack.c.b16 %v1108, %v1107
      %v1138 = vpack.c.b16 %v1110, %v1109
      %v1139 = vpack.c.b16 %v1112, %v1111
      %v1140 = vpack.c.b16 %v1114, %v1113
      %v1141 = vpack.c.b16 %v1116, %v1115
      %v1142 = vpack.c.b16 %v1118, %v1117
      %v1143 = vpack.c.b16 %v1120, %v1119
      %v1144 = vpack.c.b16 %v1122, %v1121
      %v1145 = vpack.c.b16 %v1124, %v1123
      %v1146 = vpack.c.b16 %v1126, %v1125
      %v1147 = vpack.c.b16 %v1128, %v1127
      %v1148 = vpack.c.b16 %v1130, %v1129
      %v1149 = vpack.c.b16 %v1132, %v1131
      %v1150 = vpack.c.b16 %v1134, %v1133
      %1167 = vst.msk [vmem:[#allocation2 + $0x8] sm:$0xff] %vm327, %v1135
      %1168 = vst.msk [vmem:[#allocation2 + $0x30] sm:$0xff] %vm327, %v1136
      %1169 = vst.msk [vmem:[#allocation2 + $0x58] sm:$0xff] %vm327, %v1137
      %1170 = vst.msk [vmem:[#allocation2 + $0x80] sm:$0xff] %vm327, %v1138
      %1171 = vst.msk [vmem:[#allocation2 + $0xa8] sm:$0xff] %vm327, %v1139
      %1172 = vst.msk [vmem:[#allocation2 + $0xd0] sm:$0xff] %vm327, %v1140
      %1173 = vst.msk [vmem:[#allocation2 + $0xf8] sm:$0xff] %vm327, %v1141
      %1174 = vst.msk [vmem:[#allocation2 + $0x120] sm:$0xff] %vm327, %v1142
      %1175 = vst.msk [vmem:[#allocation2 + $0x148] sm:$0xff] %vm327, %v1143
      %1176 = vst.msk [vmem:[#allocation2 + $0x170] sm:$0xff] %vm327, %v1144
      %1177 = vst.msk [vmem:[#allocation2 + $0x198] sm:$0xff] %vm327, %v1145
      %1178 = vst.msk [vmem:[#allocation2 + $0x1c0] sm:$0xff] %vm327, %v1146
      %1179 = vst.msk [vmem:[#allocation2 + $0x1e8] sm:$0xff] %vm327, %v1147
      %1180 = vst.msk [vmem:[#allocation2 + $0x210] sm:$0xff] %vm327, %v1148
      %1181 = vst.msk [vmem:[#allocation2 + $0x238] sm:$0xff] %vm327, %v1149
      %1182 = vst.msk [vmem:[#allocation2 + $0x260] sm:$0xff] %vm327, %v1150
      %s1183 = scalar_lea.vmem %s192, 12
      %v1184 = vld [vmem:[%s1183] sm:$0xf]
      %v1185 = vld [vmem:[%s1183 + $0x4] sm:$0xf]
      %v1186 = vld [vmem:[%s1183 + $0xc] sm:$0xf]
      %v1187 = vld [vmem:[%s1183 + $0x10] sm:$0xf]
      %v1188 = vld [vmem:[%s1183 + $0x18] sm:$0xf]
      %v1189 = vld [vmem:[%s1183 + $0x1c] sm:$0xf]
      %v1190 = vld [vmem:[%s1183 + $0x24] sm:$0xf]
      %v1191 = vld [vmem:[%s1183 + $0x28] sm:$0xf]
      %v1192 = vld [vmem:[%s1183 + $0x30] sm:$0xf]
      %v1193 = vld [vmem:[%s1183 + $0x34] sm:$0xf]
      %v1194 = vld [vmem:[%s1183 + $0x3c] sm:$0xf]
      %v1195 = vld [vmem:[%s1183 + $0x40] sm:$0xf]
      %v1196 = vld [vmem:[%s1183 + $0x48] sm:$0xf]
      %v1197 = vld [vmem:[%s1183 + $0x4c] sm:$0xf]
      %v1198 = vld [vmem:[%s1183 + $0x54] sm:$0xf]
      %v1199 = vld [vmem:[%s1183 + $0x58] sm:$0xf]
      %v1200 = vld [vmem:[%s1183 + $0x60] sm:$0xf]
      %v1201 = vld [vmem:[%s1183 + $0x64] sm:$0xf]
      %v1202 = vld [vmem:[%s1183 + $0x6c] sm:$0xf]
      %v1203 = vld [vmem:[%s1183 + $0x70] sm:$0xf]
      %v1204 = vld [vmem:[%s1183 + $0x78] sm:$0xf]
      %v1205 = vld [vmem:[%s1183 + $0x7c] sm:$0xf]
      %v1206 = vld [vmem:[%s1183 + $0x84] sm:$0xf]
      %v1207 = vld [vmem:[%s1183 + $0x88] sm:$0xf]
      %v1208 = vld [vmem:[%s1183 + $0x90] sm:$0xf]
      %v1209 = vld [vmem:[%s1183 + $0x94] sm:$0xf]
      %v1210 = vld [vmem:[%s1183 + $0x9c] sm:$0xf]
      %v1211 = vld [vmem:[%s1183 + $0xa0] sm:$0xf]
      %v1212 = vld [vmem:[%s1183 + $0xa8] sm:$0xf]
      %v1213 = vld [vmem:[%s1183 + $0xac] sm:$0xf]
      %v1214 = vld [vmem:[%s1183 + $0xb4] sm:$0xf]
      %v1215 = vld [vmem:[%s1183 + $0xb8] sm:$0xf]
      %v1248 = vunpack.c.l.b16 %v1184
      %v1249 = vunpack.c.l.b16 %v1185
      %v1250 = vunpack.c.l.b16 %v1186
      %v1251 = vunpack.c.l.b16 %v1187
      %v1252 = vunpack.c.l.b16 %v1188
      %v1253 = vunpack.c.l.b16 %v1189
      %v1254 = vunpack.c.l.b16 %v1190
      %v1255 = vunpack.c.l.b16 %v1191
      %v1256 = vunpack.c.l.b16 %v1192
      %v1257 = vunpack.c.l.b16 %v1193
      %v1258 = vunpack.c.l.b16 %v1194
      %v1259 = vunpack.c.l.b16 %v1195
      %v1260 = vunpack.c.l.b16 %v1196
      %v1261 = vunpack.c.l.b16 %v1197
      %v1262 = vunpack.c.l.b16 %v1198
      %v1263 = vunpack.c.l.b16 %v1199
      %v1264 = vunpack.c.l.b16 %v1200
      %v1265 = vunpack.c.l.b16 %v1201
      %v1266 = vunpack.c.l.b16 %v1202
      %v1267 = vunpack.c.l.b16 %v1203
      %v1268 = vunpack.c.l.b16 %v1204
      %v1269 = vunpack.c.l.b16 %v1205
      %v1270 = vunpack.c.l.b16 %v1206
      %v1271 = vunpack.c.l.b16 %v1207
      %v1272 = vunpack.c.l.b16 %v1208
      %v1273 = vunpack.c.l.b16 %v1209
      %v1274 = vunpack.c.l.b16 %v1210
      %v1275 = vunpack.c.l.b16 %v1211
      %v1276 = vunpack.c.l.b16 %v1212
      %v1277 = vunpack.c.l.b16 %v1213
      %v1278 = vunpack.c.l.b16 %v1214
      %v1279 = vunpack.c.l.b16 %v1215
      %v1280 = vpack.c.b16 %v1249, %v1248
      %v1281 = vpack.c.b16 %v1251, %v1250
      %v1282 = vpack.c.b16 %v1253, %v1252
      %v1283 = vpack.c.b16 %v1255, %v1254
      %v1284 = vpack.c.b16 %v1257, %v1256
      %v1285 = vpack.c.b16 %v1259, %v1258
      %v1286 = vpack.c.b16 %v1261, %v1260
      %v1287 = vpack.c.b16 %v1263, %v1262
      %v1288 = vpack.c.b16 %v1265, %v1264
      %v1289 = vpack.c.b16 %v1267, %v1266
      %v1290 = vpack.c.b16 %v1269, %v1268
      %v1291 = vpack.c.b16 %v1271, %v1270
      %v1292 = vpack.c.b16 %v1273, %v1272
      %v1293 = vpack.c.b16 %v1275, %v1274
      %v1294 = vpack.c.b16 %v1277, %v1276
      %v1295 = vpack.c.b16 %v1279, %v1278
      %1296 = vrot.lane.b32.xlu0 %v1280, 64
      %v1297 = vpop.permute.xlu0 %1296
      %1298 = vrot.lane.b32.xlu0 %v1281, 64
      %v1299 = vpop.permute.xlu0 %1298
      %1300 = vrot.lane.b32.xlu0 %v1282, 64
      %v1301 = vpop.permute.xlu0 %1300
      %1302 = vrot.lane.b32.xlu0 %v1283, 64
      %v1303 = vpop.permute.xlu0 %1302
      %1304 = vrot.lane.b32.xlu0 %v1284, 64
      %v1305 = vpop.permute.xlu0 %1304
      %1306 = vrot.lane.b32.xlu0 %v1285, 64
      %v1307 = vpop.permute.xlu0 %1306
      %1308 = vrot.lane.b32.xlu0 %v1286, 64
      %v1309 = vpop.permute.xlu0 %1308
      %1310 = vrot.lane.b32.xlu0 %v1287, 64
      %v1311 = vpop.permute.xlu0 %1310
      %1312 = vrot.lane.b32.xlu0 %v1288, 64
      %v1313 = vpop.permute.xlu0 %1312
      %1314 = vrot.lane.b32.xlu0 %v1289, 64
      %v1315 = vpop.permute.xlu0 %1314
      %1316 = vrot.lane.b32.xlu0 %v1290, 64
      %v1317 = vpop.permute.xlu0 %1316
      %1318 = vrot.lane.b32.xlu0 %v1291, 64
      %v1319 = vpop.permute.xlu0 %1318
      %1320 = vrot.lane.b32.xlu0 %v1292, 64
      %v1321 = vpop.permute.xlu0 %1320
      %1322 = vrot.lane.b32.xlu0 %v1293, 64
      %v1323 = vpop.permute.xlu0 %1322
      %1324 = vrot.lane.b32.xlu0 %v1294, 64
      %v1325 = vpop.permute.xlu0 %1324
      %1326 = vrot.lane.b32.xlu0 %v1295, 64
      %v1327 = vpop.permute.xlu0 %1326
      %1344 = vst.msk [vmem:[#allocation2 + $0x8] sm:$0xff] %vm875, %v1297
      %1345 = vst.msk [vmem:[#allocation2 + $0x30] sm:$0xff] %vm875, %v1299
      %1346 = vst.msk [vmem:[#allocation2 + $0x58] sm:$0xff] %vm875, %v1301
      %1347 = vst.msk [vmem:[#allocation2 + $0x80] sm:$0xff] %vm875, %v1303
      %1348 = vst.msk [vmem:[#allocation2 + $0xa8] sm:$0xff] %vm875, %v1305
      %1349 = vst.msk [vmem:[#allocation2 + $0xd0] sm:$0xff] %vm875, %v1307
      %1350 = vst.msk [vmem:[#allocation2 + $0xf8] sm:$0xff] %vm875, %v1309
      %1351 = vst.msk [vmem:[#allocation2 + $0x120] sm:$0xff] %vm875, %v1311
      %1352 = vst.msk [vmem:[#allocation2 + $0x148] sm:$0xff] %vm875, %v1313
      %1353 = vst.msk [vmem:[#allocation2 + $0x170] sm:$0xff] %vm875, %v1315
      %1354 = vst.msk [vmem:[#allocation2 + $0x198] sm:$0xff] %vm875, %v1317
      %1355 = vst.msk [vmem:[#allocation2 + $0x1c0] sm:$0xff] %vm875, %v1319
      %1356 = vst.msk [vmem:[#allocation2 + $0x1e8] sm:$0xff] %vm875, %v1321
      %1357 = vst.msk [vmem:[#allocation2 + $0x210] sm:$0xff] %vm875, %v1323
      %1358 = vst.msk [vmem:[#allocation2 + $0x238] sm:$0xff] %vm875, %v1325
      %1359 = vst.msk [vmem:[#allocation2 + $0x260] sm:$0xff] %vm875, %v1327
      %v1360 = vld [vmem:[%s1183] sm:$0xf]
      %v1361 = vld [vmem:[%s1183 + $0x4] sm:$0xf]
      %v1362 = vld [vmem:[%s1183 + $0x8] sm:$0x1]
      %v1363 = vld [vmem:[%s1183 + $0xc] sm:$0xf]
      %v1364 = vld [vmem:[%s1183 + $0x10] sm:$0xf]
      %v1365 = vld [vmem:[%s1183 + $0x14] sm:$0x1]
      %v1366 = vld [vmem:[%s1183 + $0x18] sm:$0xf]
      %v1367 = vld [vmem:[%s1183 + $0x1c] sm:$0xf]
      %v1368 = vld [vmem:[%s1183 + $0x20] sm:$0x1]
      %v1369 = vld [vmem:[%s1183 + $0x24] sm:$0xf]
      %v1370 = vld [vmem:[%s1183 + $0x28] sm:$0xf]
      %v1371 = vld [vmem:[%s1183 + $0x2c] sm:$0x1]
      %v1372 = vld [vmem:[%s1183 + $0x30] sm:$0xf]
      %v1373 = vld [vmem:[%s1183 + $0x34] sm:$0xf]
      %v1374 = vld [vmem:[%s1183 + $0x38] sm:$0x1]
      %v1375 = vld [vmem:[%s1183 + $0x3c] sm:$0xf]
      %v1376 = vld [vmem:[%s1183 + $0x40] sm:$0xf]
      %v1377 = vld [vmem:[%s1183 + $0x44] sm:$0x1]
      %v1378 = vld [vmem:[%s1183 + $0x48] sm:$0xf]
      %v1379 = vld [vmem:[%s1183 + $0x4c] sm:$0xf]
      %v1380 = vld [vmem:[%s1183 + $0x50] sm:$0x1]
      %v1381 = vld [vmem:[%s1183 + $0x54] sm:$0xf]
      %v1382 = vld [vmem:[%s1183 + $0x58] sm:$0xf]
      %v1383 = vld [vmem:[%s1183 + $0x5c] sm:$0x1]
      %v1384 = vld [vmem:[%s1183 + $0x60] sm:$0xf]
      %v1385 = vld [vmem:[%s1183 + $0x64] sm:$0xf]
      %v1386 = vld [vmem:[%s1183 + $0x68] sm:$0x1]
      %v1387 = vld [vmem:[%s1183 + $0x6c] sm:$0xf]
      %v1388 = vld [vmem:[%s1183 + $0x70] sm:$0xf]
      %v1389 = vld [vmem:[%s1183 + $0x74] sm:$0x1]
      %v1390 = vld [vmem:[%s1183 + $0x78] sm:$0xf]
      %v1391 = vld [vmem:[%s1183 + $0x7c] sm:$0xf]
      %v1392 = vld [vmem:[%s1183 + $0x80] sm:$0x1]
      %v1393 = vld [vmem:[%s1183 + $0x84] sm:$0xf]
      %v1394 = vld [vmem:[%s1183 + $0x88] sm:$0xf]
      %v1395 = vld [vmem:[%s1183 + $0x8c] sm:$0x1]
      %v1396 = vld [vmem:[%s1183 + $0x90] sm:$0xf]
      %v1397 = vld [vmem:[%s1183 + $0x94] sm:$0xf]
      %v1398 = vld [vmem:[%s1183 + $0x98] sm:$0x1]
      %v1399 = vld [vmem:[%s1183 + $0x9c] sm:$0xf]
      %v1400 = vld [vmem:[%s1183 + $0xa0] sm:$0xf]
      %v1401 = vld [vmem:[%s1183 + $0xa4] sm:$0x1]
      %v1402 = vld [vmem:[%s1183 + $0xa8] sm:$0xf]
      %v1403 = vld [vmem:[%s1183 + $0xac] sm:$0xf]
      %v1404 = vld [vmem:[%s1183 + $0xb0] sm:$0x1]
      %v1405 = vld [vmem:[%s1183 + $0xb4] sm:$0xf]
      %v1406 = vld [vmem:[%s1183 + $0xb8] sm:$0xf]
      %v1407 = vld [vmem:[%s1183 + $0xbc] sm:$0x1]
      %v1409 = vshrl.u32 %v1360, 16
      %v1411 = vrot.slane %v1409, 4
      %v1412 = vshll.u32 %v1360, 16
      %v1414 = vrot.slane %v1412, 5
      %v1415 = vor.u32 %v1411, %v1414
      %v1416 = vrot.slane %v1415, 4
      %v1418 = vshll.u32 %v1361, 16
      %v1420 = vrot.slane %v1418, 5
      %v1421 = vsel %vm394, %v1416, %v1420
      %v1422 = vshrl.u32 %v1361, 16
      %v1424 = vrot.slane %v1422, 4
      %v1425 = vor.u32 %v1424, %v1420
      %v1426 = vrot.slane %v1425, 4
      %v1428 = vshll.u32 %v1362, 16
      %v1430 = vrot.slane %v1428, 5
      %v1431 = vsel %vm394, %v1426, %v1430
      %v1433 = vshrl.u32 %v1363, 16
      %v1435 = vrot.slane %v1433, 4
      %v1436 = vshll.u32 %v1363, 16
      %v1438 = vrot.slane %v1436, 5
      %v1439 = vor.u32 %v1435, %v1438
      %v1440 = vrot.slane %v1439, 4
      %v1442 = vshll.u32 %v1364, 16
      %v1444 = vrot.slane %v1442, 5
      %v1445 = vsel %vm394, %v1440, %v1444
      %v1446 = vshrl.u32 %v1364, 16
      %v1448 = vrot.slane %v1446, 4
      %v1449 = vor.u32 %v1448, %v1444
      %v1450 = vrot.slane %v1449, 4
      %v1452 = vshll.u32 %v1365, 16
      %v1454 = vrot.slane %v1452, 5
      %v1455 = vsel %vm394, %v1450, %v1454
      %v1457 = vshrl.u32 %v1366, 16
      %v1459 = vrot.slane %v1457, 4
      %v1460 = vshll.u32 %v1366, 16
      %v1462 = vrot.slane %v1460, 5
      %v1463 = vor.u32 %v1459, %v1462
      %v1464 = vrot.slane %v1463, 4
      %v1466 = vshll.u32 %v1367, 16
      %v1468 = vrot.slane %v1466, 5
      %v1469 = vsel %vm394, %v1464, %v1468
      %v1470 = vshrl.u32 %v1367, 16
      %v1472 = vrot.slane %v1470, 4
      %v1473 = vor.u32 %v1472, %v1468
      %v1474 = vrot.slane %v1473, 4
      %v1476 = vshll.u32 %v1368, 16
      %v1478 = vrot.slane %v1476, 5
      %v1479 = vsel %vm394, %v1474, %v1478
      %v1481 = vshrl.u32 %v1369, 16
      %v1483 = vrot.slane %v1481, 4
      %v1484 = vshll.u32 %v1369, 16
      %v1486 = vrot.slane %v1484, 5
      %v1487 = vor.u32 %v1483, %v1486
      %v1488 = vrot.slane %v1487, 4
      %v1490 = vshll.u32 %v1370, 16
      %v1492 = vrot.slane %v1490, 5
      %v1493 = vsel %vm394, %v1488, %v1492
      %v1494 = vshrl.u32 %v1370, 16
      %v1496 = vrot.slane %v1494, 4
      %v1497 = vor.u32 %v1496, %v1492
      %v1498 = vrot.slane %v1497, 4
      %v1500 = vshll.u32 %v1371, 16
      %v1502 = vrot.slane %v1500, 5
      %v1503 = vsel %vm394, %v1498, %v1502
      %v1505 = vshrl.u32 %v1372, 16
      %v1507 = vrot.slane %v1505, 4
      %v1508 = vshll.u32 %v1372, 16
      %v1510 = vrot.slane %v1508, 5
      %v1511 = vor.u32 %v1507, %v1510
      %v1512 = vrot.slane %v1511, 4
      %v1514 = vshll.u32 %v1373, 16
      %v1516 = vrot.slane %v1514, 5
      %v1517 = vsel %vm394, %v1512, %v1516
      %v1518 = vshrl.u32 %v1373, 16
      %v1520 = vrot.slane %v1518, 4
      %v1521 = vor.u32 %v1520, %v1516
      %v1522 = vrot.slane %v1521, 4
      %v1524 = vshll.u32 %v1374, 16
      %v1526 = vrot.slane %v1524, 5
      %v1527 = vsel %vm394, %v1522, %v1526
      %v1529 = vshrl.u32 %v1375, 16
      %v1531 = vrot.slane %v1529, 4
      %v1532 = vshll.u32 %v1375, 16
      %v1534 = vrot.slane %v1532, 5
      %v1535 = vor.u32 %v1531, %v1534
      %v1536 = vrot.slane %v1535, 4
      %v1538 = vshll.u32 %v1376, 16
      %v1540 = vrot.slane %v1538, 5
      %v1541 = vsel %vm394, %v1536, %v1540
      %v1542 = vshrl.u32 %v1376, 16
      %v1544 = vrot.slane %v1542, 4
      %v1545 = vor.u32 %v1544, %v1540
      %v1546 = vrot.slane %v1545, 4
      %v1548 = vshll.u32 %v1377, 16
      %v1550 = vrot.slane %v1548, 5
      %v1551 = vsel %vm394, %v1546, %v1550
      %v1553 = vshrl.u32 %v1378, 16
      %v1555 = vrot.slane %v1553, 4
      %v1556 = vshll.u32 %v1378, 16
      %v1558 = vrot.slane %v1556, 5
      %v1559 = vor.u32 %v1555, %v1558
      %v1560 = vrot.slane %v1559, 4
      %v1562 = vshll.u32 %v1379, 16
      %v1564 = vrot.slane %v1562, 5
      %v1565 = vsel %vm394, %v1560, %v1564
      %v1566 = vshrl.u32 %v1379, 16
      %v1568 = vrot.slane %v1566, 4
      %v1569 = vor.u32 %v1568, %v1564
      %v1570 = vrot.slane %v1569, 4
      %v1572 = vshll.u32 %v1380, 16
      %v1574 = vrot.slane %v1572, 5
      %v1575 = vsel %vm394, %v1570, %v1574
      %v1577 = vshrl.u32 %v1381, 16
      %v1579 = vrot.slane %v1577, 4
      %v1580 = vshll.u32 %v1381, 16
      %v1582 = vrot.slane %v1580, 5
      %v1583 = vor.u32 %v1579, %v1582
      %v1584 = vrot.slane %v1583, 4
      %v1586 = vshll.u32 %v1382, 16
      %v1588 = vrot.slane %v1586, 5
      %v1589 = vsel %vm394, %v1584, %v1588
      %v1590 = vshrl.u32 %v1382, 16
      %v1592 = vrot.slane %v1590, 4
      %v1593 = vor.u32 %v1592, %v1588
      %v1594 = vrot.slane %v1593, 4
      %v1596 = vshll.u32 %v1383, 16
      %v1598 = vrot.slane %v1596, 5
      %v1599 = vsel %vm394, %v1594, %v1598
      %v1601 = vshrl.u32 %v1384, 16
      %v1603 = vrot.slane %v1601, 4
      %v1604 = vshll.u32 %v1384, 16
      %v1606 = vrot.slane %v1604, 5
      %v1607 = vor.u32 %v1603, %v1606
      %v1608 = vrot.slane %v1607, 4
      %v1610 = vshll.u32 %v1385, 16
      %v1612 = vrot.slane %v1610, 5
      %v1613 = vsel %vm394, %v1608, %v1612
      %v1614 = vshrl.u32 %v1385, 16
      %v1616 = vrot.slane %v1614, 4
      %v1617 = vor.u32 %v1616, %v1612
      %v1618 = vrot.slane %v1617, 4
      %v1620 = vshll.u32 %v1386, 16
      %v1622 = vrot.slane %v1620, 5
      %v1623 = vsel %vm394, %v1618, %v1622
      %v1625 = vshrl.u32 %v1387, 16
      %v1627 = vrot.slane %v1625, 4
      %v1628 = vshll.u32 %v1387, 16
      %v1630 = vrot.slane %v1628, 5
      %v1631 = vor.u32 %v1627, %v1630
      %v1632 = vrot.slane %v1631, 4
      %v1634 = vshll.u32 %v1388, 16
      %v1636 = vrot.slane %v1634, 5
      %v1637 = vsel %vm394, %v1632, %v1636
      %v1638 = vshrl.u32 %v1388, 16
      %v1640 = vrot.slane %v1638, 4
      %v1641 = vor.u32 %v1640, %v1636
      %v1642 = vrot.slane %v1641, 4
      %v1644 = vshll.u32 %v1389, 16
      %v1646 = vrot.slane %v1644, 5
      %v1647 = vsel %vm394, %v1642, %v1646
      %v1649 = vshrl.u32 %v1390, 16
      %v1651 = vrot.slane %v1649, 4
      %v1652 = vshll.u32 %v1390, 16
      %v1654 = vrot.slane %v1652, 5
      %v1655 = vor.u32 %v1651, %v1654
      %v1656 = vrot.slane %v1655, 4
      %v1658 = vshll.u32 %v1391, 16
      %v1660 = vrot.slane %v1658, 5
      %v1661 = vsel %vm394, %v1656, %v1660
      %v1662 = vshrl.u32 %v1391, 16
      %v1664 = vrot.slane %v1662, 4
      %v1665 = vor.u32 %v1664, %v1660
      %v1666 = vrot.slane %v1665, 4
      %v1668 = vshll.u32 %v1392, 16
      %v1670 = vrot.slane %v1668, 5
      %v1671 = vsel %vm394, %v1666, %v1670
      %v1673 = vshrl.u32 %v1393, 16
      %v1675 = vrot.slane %v1673, 4
      %v1676 = vshll.u32 %v1393, 16
      %v1678 = vrot.slane %v1676, 5
      %v1679 = vor.u32 %v1675, %v1678
      %v1680 = vrot.slane %v1679, 4
      %v1682 = vshll.u32 %v1394, 16
      %v1684 = vrot.slane %v1682, 5
      %v1685 = vsel %vm394, %v1680, %v1684
      %v1686 = vshrl.u32 %v1394, 16
      %v1688 = vrot.slane %v1686, 4
      %v1689 = vor.u32 %v1688, %v1684
      %v1690 = vrot.slane %v1689, 4
      %v1692 = vshll.u32 %v1395, 16
      %v1694 = vrot.slane %v1692, 5
      %v1695 = vsel %vm394, %v1690, %v1694
      %v1697 = vshrl.u32 %v1396, 16
      %v1699 = vrot.slane %v1697, 4
      %v1700 = vshll.u32 %v1396, 16
      %v1702 = vrot.slane %v1700, 5
      %v1703 = vor.u32 %v1699, %v1702
      %v1704 = vrot.slane %v1703, 4
      %v1706 = vshll.u32 %v1397, 16
      %v1708 = vrot.slane %v1706, 5
      %v1709 = vsel %vm394, %v1704, %v1708
      %v1710 = vshrl.u32 %v1397, 16
      %v1712 = vrot.slane %v1710, 4
      %v1713 = vor.u32 %v1712, %v1708
      %v1714 = vrot.slane %v1713, 4
      %v1716 = vshll.u32 %v1398, 16
      %v1718 = vrot.slane %v1716, 5
      %v1719 = vsel %vm394, %v1714, %v1718
      %v1721 = vshrl.u32 %v1399, 16
      %v1723 = vrot.slane %v1721, 4
      %v1724 = vshll.u32 %v1399, 16
      %v1726 = vrot.slane %v1724, 5
      %v1727 = vor.u32 %v1723, %v1726
      %v1728 = vrot.slane %v1727, 4
      %v1730 = vshll.u32 %v1400, 16
      %v1732 = vrot.slane %v1730, 5
      %v1733 = vsel %vm394, %v1728, %v1732
      %v1734 = vshrl.u32 %v1400, 16
      %v1736 = vrot.slane %v1734, 4
      %v1737 = vor.u32 %v1736, %v1732
      %v1738 = vrot.slane %v1737, 4
      %v1740 = vshll.u32 %v1401, 16
      %v1742 = vrot.slane %v1740, 5
      %v1743 = vsel %vm394, %v1738, %v1742
      %v1745 = vshrl.u32 %v1402, 16
      %v1747 = vrot.slane %v1745, 4
      %v1748 = vshll.u32 %v1402, 16
      %v1750 = vrot.slane %v1748, 5
      %v1751 = vor.u32 %v1747, %v1750
      %v1752 = vrot.slane %v1751, 4
      %v1754 = vshll.u32 %v1403, 16
      %v1756 = vrot.slane %v1754, 5
      %v1757 = vsel %vm394, %v1752, %v1756
      %v1758 = vshrl.u32 %v1403, 16
      %v1760 = vrot.slane %v1758, 4
      %v1761 = vor.u32 %v1760, %v1756
      %v1762 = vrot.slane %v1761, 4
      %v1764 = vshll.u32 %v1404, 16
      %v1766 = vrot.slane %v1764, 5
      %v1767 = vsel %vm394, %v1762, %v1766
      %v1769 = vshrl.u32 %v1405, 16
      %v1771 = vrot.slane %v1769, 4
      %v1772 = vshll.u32 %v1405, 16
      %v1774 = vrot.slane %v1772, 5
      %v1775 = vor.u32 %v1771, %v1774
      %v1776 = vrot.slane %v1775, 4
      %v1778 = vshll.u32 %v1406, 16
      %v1780 = vrot.slane %v1778, 5
      %v1781 = vsel %vm394, %v1776, %v1780
      %v1782 = vshrl.u32 %v1406, 16
      %v1784 = vrot.slane %v1782, 4
      %v1785 = vor.u32 %v1784, %v1780
      %v1786 = vrot.slane %v1785, 4
      %v1788 = vshll.u32 %v1407, 16
      %v1790 = vrot.slane %v1788, 5
      %v1791 = vsel %vm394, %v1786, %v1790
      %v1792 = vunpack.c.l.b16 %v1421
      %v1793 = vunpack.c.l.b16 %v1431
      %v1794 = vunpack.c.l.b16 %v1445
      %v1795 = vunpack.c.l.b16 %v1455
      %v1796 = vunpack.c.l.b16 %v1469
      %v1797 = vunpack.c.l.b16 %v1479
      %v1798 = vunpack.c.l.b16 %v1493
      %v1799 = vunpack.c.l.b16 %v1503
      %v1800 = vunpack.c.l.b16 %v1517
      %v1801 = vunpack.c.l.b16 %v1527
      %v1802 = vunpack.c.l.b16 %v1541
      %v1803 = vunpack.c.l.b16 %v1551
      %v1804 = vunpack.c.l.b16 %v1565
      %v1805 = vunpack.c.l.b16 %v1575
      %v1806 = vunpack.c.l.b16 %v1589
      %v1807 = vunpack.c.l.b16 %v1599
      %v1808 = vunpack.c.l.b16 %v1613
      %v1809 = vunpack.c.l.b16 %v1623
      %v1810 = vunpack.c.l.b16 %v1637
      %v1811 = vunpack.c.l.b16 %v1647
      %v1812 = vunpack.c.l.b16 %v1661
      %v1813 = vunpack.c.l.b16 %v1671
      %v1814 = vunpack.c.l.b16 %v1685
      %v1815 = vunpack.c.l.b16 %v1695
      %v1816 = vunpack.c.l.b16 %v1709
      %v1817 = vunpack.c.l.b16 %v1719
      %v1818 = vunpack.c.l.b16 %v1733
      %v1819 = vunpack.c.l.b16 %v1743
      %v1820 = vunpack.c.l.b16 %v1757
      %v1821 = vunpack.c.l.b16 %v1767
      %v1822 = vunpack.c.l.b16 %v1781
      %v1823 = vunpack.c.l.b16 %v1791
      %v1824 = vpack.c.b16 %v1793, %v1792
      %v1825 = vpack.c.b16 %v1795, %v1794
      %v1826 = vpack.c.b16 %v1797, %v1796
      %v1827 = vpack.c.b16 %v1799, %v1798
      %v1828 = vpack.c.b16 %v1801, %v1800
      %v1829 = vpack.c.b16 %v1803, %v1802
      %v1830 = vpack.c.b16 %v1805, %v1804
      %v1831 = vpack.c.b16 %v1807, %v1806
      %v1832 = vpack.c.b16 %v1809, %v1808
      %v1833 = vpack.c.b16 %v1811, %v1810
      %v1834 = vpack.c.b16 %v1813, %v1812
      %v1835 = vpack.c.b16 %v1815, %v1814
      %v1836 = vpack.c.b16 %v1817, %v1816
      %v1837 = vpack.c.b16 %v1819, %v1818
      %v1838 = vpack.c.b16 %v1821, %v1820
      %v1839 = vpack.c.b16 %v1823, %v1822
      %1856 = vst.msk [vmem:[#allocation2 + $0x10] sm:$0xff] %vm327, %v1824
      %1857 = vst.msk [vmem:[#allocation2 + $0x38] sm:$0xff] %vm327, %v1825
      %1858 = vst.msk [vmem:[#allocation2 + $0x60] sm:$0xff] %vm327, %v1826
      %1859 = vst.msk [vmem:[#allocation2 + $0x88] sm:$0xff] %vm327, %v1827
      %1860 = vst.msk [vmem:[#allocation2 + $0xb0] sm:$0xff] %vm327, %v1828
      %1861 = vst.msk [vmem:[#allocation2 + $0xd8] sm:$0xff] %vm327, %v1829
      %1862 = vst.msk [vmem:[#allocation2 + $0x100] sm:$0xff] %vm327, %v1830
      %1863 = vst.msk [vmem:[#allocation2 + $0x128] sm:$0xff] %vm327, %v1831
      %1864 = vst.msk [vmem:[#allocation2 + $0x150] sm:$0xff] %vm327, %v1832
      %1865 = vst.msk [vmem:[#allocation2 + $0x178] sm:$0xff] %vm327, %v1833
      %1866 = vst.msk [vmem:[#allocation2 + $0x1a0] sm:$0xff] %vm327, %v1834
      %1867 = vst.msk [vmem:[#allocation2 + $0x1c8] sm:$0xff] %vm327, %v1835
      %1868 = vst.msk [vmem:[#allocation2 + $0x1f0] sm:$0xff] %vm327, %v1836
      %1869 = vst.msk [vmem:[#allocation2 + $0x218] sm:$0xff] %vm327, %v1837
      %1870 = vst.msk [vmem:[#allocation2 + $0x240] sm:$0xff] %vm327, %v1838
      %1871 = vst.msk [vmem:[#allocation2 + $0x268] sm:$0xff] %vm327, %v1839
      %v1872 = vld [vmem:[%s1183] sm:$0xe]
      %v1873 = vld [vmem:[%s1183 + $0x4] sm:$0xf]
      %v1874 = vld [vmem:[%s1183 + $0x8] sm:$0x1]
      %v1875 = vld [vmem:[%s1183 + $0xc] sm:$0xe]
      %v1876 = vld [vmem:[%s1183 + $0x10] sm:$0xf]
      %v1877 = vld [vmem:[%s1183 + $0x14] sm:$0x1]
      %v1878 = vld [vmem:[%s1183 + $0x18] sm:$0xe]
      %v1879 = vld [vmem:[%s1183 + $0x1c] sm:$0xf]
      %v1880 = vld [vmem:[%s1183 + $0x20] sm:$0x1]
      %v1881 = vld [vmem:[%s1183 + $0x24] sm:$0xe]
      %v1882 = vld [vmem:[%s1183 + $0x28] sm:$0xf]
      %v1883 = vld [vmem:[%s1183 + $0x2c] sm:$0x1]
      %v1884 = vld [vmem:[%s1183 + $0x30] sm:$0xe]
      %v1885 = vld [vmem:[%s1183 + $0x34] sm:$0xf]
      %v1886 = vld [vmem:[%s1183 + $0x38] sm:$0x1]
      %v1887 = vld [vmem:[%s1183 + $0x3c] sm:$0xe]
      %v1888 = vld [vmem:[%s1183 + $0x40] sm:$0xf]
      %v1889 = vld [vmem:[%s1183 + $0x44] sm:$0x1]
      %v1890 = vld [vmem:[%s1183 + $0x48] sm:$0xe]
      %v1891 = vld [vmem:[%s1183 + $0x4c] sm:$0xf]
      %v1892 = vld [vmem:[%s1183 + $0x50] sm:$0x1]
      %v1893 = vld [vmem:[%s1183 + $0x54] sm:$0xe]
      %v1894 = vld [vmem:[%s1183 + $0x58] sm:$0xf]
      %v1895 = vld [vmem:[%s1183 + $0x5c] sm:$0x1]
      %v1896 = vld [vmem:[%s1183 + $0x60] sm:$0xe]
      %v1897 = vld [vmem:[%s1183 + $0x64] sm:$0xf]
      %v1898 = vld [vmem:[%s1183 + $0x68] sm:$0x1]
      %v1899 = vld [vmem:[%s1183 + $0x6c] sm:$0xe]
      %v1900 = vld [vmem:[%s1183 + $0x70] sm:$0xf]
      %v1901 = vld [vmem:[%s1183 + $0x74] sm:$0x1]
      %v1902 = vld [vmem:[%s1183 + $0x78] sm:$0xe]
      %v1903 = vld [vmem:[%s1183 + $0x7c] sm:$0xf]
      %v1904 = vld [vmem:[%s1183 + $0x80] sm:$0x1]
      %v1905 = vld [vmem:[%s1183 + $0x84] sm:$0xe]
      %v1906 = vld [vmem:[%s1183 + $0x88] sm:$0xf]
      %v1907 = vld [vmem:[%s1183 + $0x8c] sm:$0x1]
      %v1908 = vld [vmem:[%s1183 + $0x90] sm:$0xe]
      %v1909 = vld [vmem:[%s1183 + $0x94] sm:$0xf]
      %v1910 = vld [vmem:[%s1183 + $0x98] sm:$0x1]
      %v1911 = vld [vmem:[%s1183 + $0x9c] sm:$0xe]
      %v1912 = vld [vmem:[%s1183 + $0xa0] sm:$0xf]
      %v1913 = vld [vmem:[%s1183 + $0xa4] sm:$0x1]
      %v1914 = vld [vmem:[%s1183 + $0xa8] sm:$0xe]
      %v1915 = vld [vmem:[%s1183 + $0xac] sm:$0xf]
      %v1916 = vld [vmem:[%s1183 + $0xb0] sm:$0x1]
      %v1917 = vld [vmem:[%s1183 + $0xb4] sm:$0xe]
      %v1918 = vld [vmem:[%s1183 + $0xb8] sm:$0xf]
      %v1919 = vld [vmem:[%s1183 + $0xbc] sm:$0x1]
      %v1968 = vrot.slane %v1872, 5
      %v1969 = vrot.slane %v1968, 4
      %v1970 = vrot.slane %v1873, 5
      %v1971 = vsel %vm990, %v1969, %v1970
      %v1972 = vrot.slane %v1970, 4
      %v1973 = vrot.slane %v1874, 5
      %v1974 = vsel %vm990, %v1972, %v1973
      %v1975 = vrot.slane %v1875, 5
      %v1976 = vrot.slane %v1975, 4
      %v1977 = vrot.slane %v1876, 5
      %v1978 = vsel %vm990, %v1976, %v1977
      %v1979 = vrot.slane %v1977, 4
      %v1980 = vrot.slane %v1877, 5
      %v1981 = vsel %vm990, %v1979, %v1980
      %v1982 = vrot.slane %v1878, 5
      %v1983 = vrot.slane %v1982, 4
      %v1984 = vrot.slane %v1879, 5
      %v1985 = vsel %vm990, %v1983, %v1984
      %v1986 = vrot.slane %v1984, 4
      %v1987 = vrot.slane %v1880, 5
      %v1988 = vsel %vm990, %v1986, %v1987
      %v1989 = vrot.slane %v1881, 5
      %v1990 = vrot.slane %v1989, 4
      %v1991 = vrot.slane %v1882, 5
      %v1992 = vsel %vm990, %v1990, %v1991
      %v1993 = vrot.slane %v1991, 4
      %v1994 = vrot.slane %v1883, 5
      %v1995 = vsel %vm990, %v1993, %v1994
      %v1996 = vrot.slane %v1884, 5
      %v1997 = vrot.slane %v1996, 4
      %v1998 = vrot.slane %v1885, 5
      %v1999 = vsel %vm990, %v1997, %v1998
      %v2000 = vrot.slane %v1998, 4
      %v2001 = vrot.slane %v1886, 5
      %v2002 = vsel %vm990, %v2000, %v2001
      %v2003 = vrot.slane %v1887, 5
      %v2004 = vrot.slane %v2003, 4
      %v2005 = vrot.slane %v1888, 5
      %v2006 = vsel %vm990, %v2004, %v2005
      %v2007 = vrot.slane %v2005, 4
      %v2008 = vrot.slane %v1889, 5
      %v2009 = vsel %vm990, %v2007, %v2008
      %v2010 = vrot.slane %v1890, 5
      %v2011 = vrot.slane %v2010, 4
      %v2012 = vrot.slane %v1891, 5
      %v2013 = vsel %vm990, %v2011, %v2012
      %v2014 = vrot.slane %v2012, 4
      %v2015 = vrot.slane %v1892, 5
      %v2016 = vsel %vm990, %v2014, %v2015
      %v2017 = vrot.slane %v1893, 5
      %v2018 = vrot.slane %v2017, 4
      %v2019 = vrot.slane %v1894, 5
      %v2020 = vsel %vm990, %v2018, %v2019
      %v2021 = vrot.slane %v2019, 4
      %v2022 = vrot.slane %v1895, 5
      %v2023 = vsel %vm990, %v2021, %v2022
      %v2024 = vrot.slane %v1896, 5
      %v2025 = vrot.slane %v2024, 4
      %v2026 = vrot.slane %v1897, 5
      %v2027 = vsel %vm990, %v2025, %v2026
      %v2028 = vrot.slane %v2026, 4
      %v2029 = vrot.slane %v1898, 5
      %v2030 = vsel %vm990, %v2028, %v2029
      %v2031 = vrot.slane %v1899, 5
      %v2032 = vrot.slane %v2031, 4
      %v2033 = vrot.slane %v1900, 5
      %v2034 = vsel %vm990, %v2032, %v2033
      %v2035 = vrot.slane %v2033, 4
      %v2036 = vrot.slane %v1901, 5
      %v2037 = vsel %vm990, %v2035, %v2036
      %v2038 = vrot.slane %v1902, 5
      %v2039 = vrot.slane %v2038, 4
      %v2040 = vrot.slane %v1903, 5
      %v2041 = vsel %vm990, %v2039, %v2040
      %v2042 = vrot.slane %v2040, 4
      %v2043 = vrot.slane %v1904, 5
      %v2044 = vsel %vm990, %v2042, %v2043
      %v2045 = vrot.slane %v1905, 5
      %v2046 = vrot.slane %v2045, 4
      %v2047 = vrot.slane %v1906, 5
      %v2048 = vsel %vm990, %v2046, %v2047
      %v2049 = vrot.slane %v2047, 4
      %v2050 = vrot.slane %v1907, 5
      %v2051 = vsel %vm990, %v2049, %v2050
      %v2052 = vrot.slane %v1908, 5
      %v2053 = vrot.slane %v2052, 4
      %v2054 = vrot.slane %v1909, 5
      %v2055 = vsel %vm990, %v2053, %v2054
      %v2056 = vrot.slane %v2054, 4
      %v2057 = vrot.slane %v1910, 5
      %v2058 = vsel %vm990, %v2056, %v2057
      %v2059 = vrot.slane %v1911, 5
      %v2060 = vrot.slane %v2059, 4
      %v2061 = vrot.slane %v1912, 5
      %v2062 = vsel %vm990, %v2060, %v2061
      %v2063 = vrot.slane %v2061, 4
      %v2064 = vrot.slane %v1913, 5
      %v2065 = vsel %vm990, %v2063, %v2064
      %v2066 = vrot.slane %v1914, 5
      %v2067 = vrot.slane %v2066, 4
      %v2068 = vrot.slane %v1915, 5
      %v2069 = vsel %vm990, %v2067, %v2068
      %v2070 = vrot.slane %v2068, 4
      %v2071 = vrot.slane %v1916, 5
      %v2072 = vsel %vm990, %v2070, %v2071
      %v2073 = vrot.slane %v1917, 5
      %v2074 = vrot.slane %v2073, 4
      %v2075 = vrot.slane %v1918, 5
      %v2076 = vsel %vm990, %v2074, %v2075
      %v2077 = vrot.slane %v2075, 4
      %v2078 = vrot.slane %v1919, 5
      %v2079 = vsel %vm990, %v2077, %v2078
      %v2080 = vunpack.c.l.b16 %v1971
      %v2081 = vunpack.c.l.b16 %v1974
      %v2082 = vunpack.c.l.b16 %v1978
      %v2083 = vunpack.c.l.b16 %v1981
      %v2084 = vunpack.c.l.b16 %v1985
      %v2085 = vunpack.c.l.b16 %v1988
      %v2086 = vunpack.c.l.b16 %v1992
      %v2087 = vunpack.c.l.b16 %v1995
      %v2088 = vunpack.c.l.b16 %v1999
      %v2089 = vunpack.c.l.b16 %v2002
      %v2090 = vunpack.c.l.b16 %v2006
      %v2091 = vunpack.c.l.b16 %v2009
      %v2092 = vunpack.c.l.b16 %v2013
      %v2093 = vunpack.c.l.b16 %v2016
      %v2094 = vunpack.c.l.b16 %v2020
      %v2095 = vunpack.c.l.b16 %v2023
      %v2096 = vunpack.c.l.b16 %v2027
      %v2097 = vunpack.c.l.b16 %v2030
      %v2098 = vunpack.c.l.b16 %v2034
      %v2099 = vunpack.c.l.b16 %v2037
      %v2100 = vunpack.c.l.b16 %v2041
      %v2101 = vunpack.c.l.b16 %v2044
      %v2102 = vunpack.c.l.b16 %v2048
      %v2103 = vunpack.c.l.b16 %v2051
      %v2104 = vunpack.c.l.b16 %v2055
      %v2105 = vunpack.c.l.b16 %v2058
      %v2106 = vunpack.c.l.b16 %v2062
      %v2107 = vunpack.c.l.b16 %v2065
      %v2108 = vunpack.c.l.b16 %v2069
      %v2109 = vunpack.c.l.b16 %v2072
      %v2110 = vunpack.c.l.b16 %v2076
      %v2111 = vunpack.c.l.b16 %v2079
      %v2112 = vpack.c.b16 %v2081, %v2080
      %v2113 = vpack.c.b16 %v2083, %v2082
      %v2114 = vpack.c.b16 %v2085, %v2084
      %v2115 = vpack.c.b16 %v2087, %v2086
      %v2116 = vpack.c.b16 %v2089, %v2088
      %v2117 = vpack.c.b16 %v2091, %v2090
      %v2118 = vpack.c.b16 %v2093, %v2092
      %v2119 = vpack.c.b16 %v2095, %v2094
      %v2120 = vpack.c.b16 %v2097, %v2096
      %v2121 = vpack.c.b16 %v2099, %v2098
      %v2122 = vpack.c.b16 %v2101, %v2100
      %v2123 = vpack.c.b16 %v2103, %v2102
      %v2124 = vpack.c.b16 %v2105, %v2104
      %v2125 = vpack.c.b16 %v2107, %v2106
      %v2126 = vpack.c.b16 %v2109, %v2108
      %v2127 = vpack.c.b16 %v2111, %v2110
      %2128 = vrot.lane.b32.xlu0 %v2112, 64
      %v2129 = vpop.permute.xlu0 %2128
      %2130 = vrot.lane.b32.xlu0 %v2113, 64
      %v2131 = vpop.permute.xlu0 %2130
      %2132 = vrot.lane.b32.xlu0 %v2114, 64
      %v2133 = vpop.permute.xlu0 %2132
      %2134 = vrot.lane.b32.xlu0 %v2115, 64
      %v2135 = vpop.permute.xlu0 %2134
      %2136 = vrot.lane.b32.xlu0 %v2116, 64
      %v2137 = vpop.permute.xlu0 %2136
      %2138 = vrot.lane.b32.xlu0 %v2117, 64
      %v2139 = vpop.permute.xlu0 %2138
      %2140 = vrot.lane.b32.xlu0 %v2118, 64
      %v2141 = vpop.permute.xlu0 %2140
      %2142 = vrot.lane.b32.xlu0 %v2119, 64
      %v2143 = vpop.permute.xlu0 %2142
      %2144 = vrot.lane.b32.xlu0 %v2120, 64
      %v2145 = vpop.permute.xlu0 %2144
      %2146 = vrot.lane.b32.xlu0 %v2121, 64
      %v2147 = vpop.permute.xlu0 %2146
      %2148 = vrot.lane.b32.xlu0 %v2122, 64
      %v2149 = vpop.permute.xlu0 %2148
      %2150 = vrot.lane.b32.xlu0 %v2123, 64
      %v2151 = vpop.permute.xlu0 %2150
      %2152 = vrot.lane.b32.xlu0 %v2124, 64
      %v2153 = vpop.permute.xlu0 %2152
      %2154 = vrot.lane.b32.xlu0 %v2125, 64
      %v2155 = vpop.permute.xlu0 %2154
      %2156 = vrot.lane.b32.xlu0 %v2126, 64
      %v2157 = vpop.permute.xlu0 %2156
      %2158 = vrot.lane.b32.xlu0 %v2127, 64
      %v2159 = vpop.permute.xlu0 %2158
      %2176 = vst.msk [vmem:[#allocation2 + $0x10] sm:$0xff] %vm875, %v2129
      %2177 = vst.msk [vmem:[#allocation2 + $0x38] sm:$0xff] %vm875, %v2131
      %2178 = vst.msk [vmem:[#allocation2 + $0x60] sm:$0xff] %vm875, %v2133
      %2179 = vst.msk [vmem:[#allocation2 + $0x88] sm:$0xff] %vm875, %v2135
      %2180 = vst.msk [vmem:[#allocation2 + $0xb0] sm:$0xff] %vm875, %v2137
      %2181 = vst.msk [vmem:[#allocation2 + $0xd8] sm:$0xff] %vm875, %v2139
      %2182 = vst.msk [vmem:[#allocation2 + $0x100] sm:$0xff] %vm875, %v2141
      %2183 = vst.msk [vmem:[#allocation2 + $0x128] sm:$0xff] %vm875, %v2143
      %2184 = vst.msk [vmem:[#allocation2 + $0x150] sm:$0xff] %vm875, %v2145
      %2185 = vst.msk [vmem:[#allocation2 + $0x178] sm:$0xff] %vm875, %v2147
      %2186 = vst.msk [vmem:[#allocation2 + $0x1a0] sm:$0xff] %vm875, %v2149
      %2187 = vst.msk [vmem:[#allocation2 + $0x1c8] sm:$0xff] %vm875, %v2151
      %2188 = vst.msk [vmem:[#allocation2 + $0x1f0] sm:$0xff] %vm875, %v2153
      %2189 = vst.msk [vmem:[#allocation2 + $0x218] sm:$0xff] %vm875, %v2155
      %2190 = vst.msk [vmem:[#allocation2 + $0x240] sm:$0xff] %vm875, %v2157
      %2191 = vst.msk [vmem:[#allocation2 + $0x268] sm:$0xff] %vm875, %v2159
      %s2192 = scalar_lea.vmem %s192, 24
      %v2193 = vld [vmem:[%s2192] sm:$0xf]
      %v2194 = vld [vmem:[%s2192 + $0x4] sm:$0xf]
      %v2195 = vld [vmem:[%s2192 + $0xc] sm:$0xf]
      %v2196 = vld [vmem:[%s2192 + $0x10] sm:$0xf]
      %v2197 = vld [vmem:[%s2192 + $0x18] sm:$0xf]
      %v2198 = vld [vmem:[%s2192 + $0x1c] sm:$0xf]
      %v2199 = vld [vmem:[%s2192 + $0x24] sm:$0xf]
      %v2200 = vld [vmem:[%s2192 + $0x28] sm:$0xf]
      %v2201 = vld [vmem:[%s2192 + $0x30] sm:$0xf]
      %v2202 = vld [vmem:[%s2192 + $0x34] sm:$0xf]
      %v2203 = vld [vmem:[%s2192 + $0x3c] sm:$0xf]
      %v2204 = vld [vmem:[%s2192 + $0x40] sm:$0xf]
      %v2205 = vld [vmem:[%s2192 + $0x48] sm:$0xf]
      %v2206 = vld [vmem:[%s2192 + $0x4c] sm:$0xf]
      %v2207 = vld [vmem:[%s2192 + $0x54] sm:$0xf]
      %v2208 = vld [vmem:[%s2192 + $0x58] sm:$0xf]
      %v2209 = vld [vmem:[%s2192 + $0x60] sm:$0xf]
      %v2210 = vld [vmem:[%s2192 + $0x64] sm:$0xf]
      %v2211 = vld [vmem:[%s2192 + $0x6c] sm:$0xf]
      %v2212 = vld [vmem:[%s2192 + $0x70] sm:$0xf]
      %v2213 = vld [vmem:[%s2192 + $0x78] sm:$0xf]
      %v2214 = vld [vmem:[%s2192 + $0x7c] sm:$0xf]
      %v2215 = vld [vmem:[%s2192 + $0x84] sm:$0xf]
      %v2216 = vld [vmem:[%s2192 + $0x88] sm:$0xf]
      %v2217 = vld [vmem:[%s2192 + $0x90] sm:$0xf]
      %v2218 = vld [vmem:[%s2192 + $0x94] sm:$0xf]
      %v2219 = vld [vmem:[%s2192 + $0x9c] sm:$0xf]
      %v2220 = vld [vmem:[%s2192 + $0xa0] sm:$0xf]
      %v2221 = vld [vmem:[%s2192 + $0xa8] sm:$0xf]
      %v2222 = vld [vmem:[%s2192 + $0xac] sm:$0xf]
      %v2223 = vld [vmem:[%s2192 + $0xb4] sm:$0xf]
      %v2224 = vld [vmem:[%s2192 + $0xb8] sm:$0xf]
      %v2257 = vunpack.c.l.b16 %v2193
      %v2258 = vunpack.c.l.b16 %v2194
      %v2259 = vunpack.c.l.b16 %v2195
      %v2260 = vunpack.c.l.b16 %v2196
      %v2261 = vunpack.c.l.b16 %v2197
      %v2262 = vunpack.c.l.b16 %v2198
      %v2263 = vunpack.c.l.b16 %v2199
      %v2264 = vunpack.c.l.b16 %v2200
      %v2265 = vunpack.c.l.b16 %v2201
      %v2266 = vunpack.c.l.b16 %v2202
      %v2267 = vunpack.c.l.b16 %v2203
      %v2268 = vunpack.c.l.b16 %v2204
      %v2269 = vunpack.c.l.b16 %v2205
      %v2270 = vunpack.c.l.b16 %v2206
      %v2271 = vunpack.c.l.b16 %v2207
      %v2272 = vunpack.c.l.b16 %v2208
      %v2273 = vunpack.c.l.b16 %v2209
      %v2274 = vunpack.c.l.b16 %v2210
      %v2275 = vunpack.c.l.b16 %v2211
      %v2276 = vunpack.c.l.b16 %v2212
      %v2277 = vunpack.c.l.b16 %v2213
      %v2278 = vunpack.c.l.b16 %v2214
      %v2279 = vunpack.c.l.b16 %v2215
      %v2280 = vunpack.c.l.b16 %v2216
      %v2281 = vunpack.c.l.b16 %v2217
      %v2282 = vunpack.c.l.b16 %v2218
      %v2283 = vunpack.c.l.b16 %v2219
      %v2284 = vunpack.c.l.b16 %v2220
      %v2285 = vunpack.c.l.b16 %v2221
      %v2286 = vunpack.c.l.b16 %v2222
      %v2287 = vunpack.c.l.b16 %v2223
      %v2288 = vunpack.c.l.b16 %v2224
      %v2289 = vpack.c.b16 %v2258, %v2257
      %v2290 = vpack.c.b16 %v2260, %v2259
      %v2291 = vpack.c.b16 %v2262, %v2261
      %v2292 = vpack.c.b16 %v2264, %v2263
      %v2293 = vpack.c.b16 %v2266, %v2265
      %v2294 = vpack.c.b16 %v2268, %v2267
      %v2295 = vpack.c.b16 %v2270, %v2269
      %v2296 = vpack.c.b16 %v2272, %v2271
      %v2297 = vpack.c.b16 %v2274, %v2273
      %v2298 = vpack.c.b16 %v2276, %v2275
      %v2299 = vpack.c.b16 %v2278, %v2277
      %v2300 = vpack.c.b16 %v2280, %v2279
      %v2301 = vpack.c.b16 %v2282, %v2281
      %v2302 = vpack.c.b16 %v2284, %v2283
      %v2303 = vpack.c.b16 %v2286, %v2285
      %v2304 = vpack.c.b16 %v2288, %v2287
      %2321 = vst.msk [vmem:[#allocation2 + $0x18] sm:$0xff] %vm327, %v2289
      %2322 = vst.msk [vmem:[#allocation2 + $0x40] sm:$0xff] %vm327, %v2290
      %2323 = vst.msk [vmem:[#allocation2 + $0x68] sm:$0xff] %vm327, %v2291
      %2324 = vst.msk [vmem:[#allocation2 + $0x90] sm:$0xff] %vm327, %v2292
      %2325 = vst.msk [vmem:[#allocation2 + $0xb8] sm:$0xff] %vm327, %v2293
      %2326 = vst.msk [vmem:[#allocation2 + $0xe0] sm:$0xff] %vm327, %v2294
      %2327 = vst.msk [vmem:[#allocation2 + $0x108] sm:$0xff] %vm327, %v2295
      %2328 = vst.msk [vmem:[#allocation2 + $0x130] sm:$0xff] %vm327, %v2296
      %2329 = vst.msk [vmem:[#allocation2 + $0x158] sm:$0xff] %vm327, %v2297
      %2330 = vst.msk [vmem:[#allocation2 + $0x180] sm:$0xff] %vm327, %v2298
      %2331 = vst.msk [vmem:[#allocation2 + $0x1a8] sm:$0xff] %vm327, %v2299
      %2332 = vst.msk [vmem:[#allocation2 + $0x1d0] sm:$0xff] %vm327, %v2300
      %2333 = vst.msk [vmem:[#allocation2 + $0x1f8] sm:$0xff] %vm327, %v2301
      %2334 = vst.msk [vmem:[#allocation2 + $0x220] sm:$0xff] %vm327, %v2302
      %2335 = vst.msk [vmem:[#allocation2 + $0x248] sm:$0xff] %vm327, %v2303
      %2336 = vst.msk [vmem:[#allocation2 + $0x270] sm:$0xff] %vm327, %v2304
      %v2337 = vld [vmem:[%s2192] sm:$0xf]
      %v2338 = vld [vmem:[%s2192 + $0x4] sm:$0xf]
      %v2339 = vld [vmem:[%s2192 + $0x8] sm:$0x1]
      %v2340 = vld [vmem:[%s2192 + $0xc] sm:$0xf]
      %v2341 = vld [vmem:[%s2192 + $0x10] sm:$0xf]
      %v2342 = vld [vmem:[%s2192 + $0x14] sm:$0x1]
      %v2343 = vld [vmem:[%s2192 + $0x18] sm:$0xf]
      %v2344 = vld [vmem:[%s2192 + $0x1c] sm:$0xf]
      %v2345 = vld [vmem:[%s2192 + $0x20] sm:$0x1]
      %v2346 = vld [vmem:[%s2192 + $0x24] sm:$0xf]
      %v2347 = vld [vmem:[%s2192 + $0x28] sm:$0xf]
      %v2348 = vld [vmem:[%s2192 + $0x2c] sm:$0x1]
      %v2349 = vld [vmem:[%s2192 + $0x30] sm:$0xf]
      %v2350 = vld [vmem:[%s2192 + $0x34] sm:$0xf]
      %v2351 = vld [vmem:[%s2192 + $0x38] sm:$0x1]
      %v2352 = vld [vmem:[%s2192 + $0x3c] sm:$0xf]
      %v2353 = vld [vmem:[%s2192 + $0x40] sm:$0xf]
      %v2354 = vld [vmem:[%s2192 + $0x44] sm:$0x1]
      %v2355 = vld [vmem:[%s2192 + $0x48] sm:$0xf]
      %v2356 = vld [vmem:[%s2192 + $0x4c] sm:$0xf]
      %v2357 = vld [vmem:[%s2192 + $0x50] sm:$0x1]
      %v2358 = vld [vmem:[%s2192 + $0x54] sm:$0xf]
      %v2359 = vld [vmem:[%s2192 + $0x58] sm:$0xf]
      %v2360 = vld [vmem:[%s2192 + $0x5c] sm:$0x1]
      %v2361 = vld [vmem:[%s2192 + $0x60] sm:$0xf]
      %v2362 = vld [vmem:[%s2192 + $0x64] sm:$0xf]
      %v2363 = vld [vmem:[%s2192 + $0x68] sm:$0x1]
      %v2364 = vld [vmem:[%s2192 + $0x6c] sm:$0xf]
      %v2365 = vld [vmem:[%s2192 + $0x70] sm:$0xf]
      %v2366 = vld [vmem:[%s2192 + $0x74] sm:$0x1]
      %v2367 = vld [vmem:[%s2192 + $0x78] sm:$0xf]
      %v2368 = vld [vmem:[%s2192 + $0x7c] sm:$0xf]
      %v2369 = vld [vmem:[%s2192 + $0x80] sm:$0x1]
      %v2370 = vld [vmem:[%s2192 + $0x84] sm:$0xf]
      %v2371 = vld [vmem:[%s2192 + $0x88] sm:$0xf]
      %v2372 = vld [vmem:[%s2192 + $0x8c] sm:$0x1]
      %v2373 = vld [vmem:[%s2192 + $0x90] sm:$0xf]
      %v2374 = vld [vmem:[%s2192 + $0x94] sm:$0xf]
      %v2375 = vld [vmem:[%s2192 + $0x98] sm:$0x1]
      %v2376 = vld [vmem:[%s2192 + $0x9c] sm:$0xf]
      %v2377 = vld [vmem:[%s2192 + $0xa0] sm:$0xf]
      %v2378 = vld [vmem:[%s2192 + $0xa4] sm:$0x1]
      %v2379 = vld [vmem:[%s2192 + $0xa8] sm:$0xf]
      %v2380 = vld [vmem:[%s2192 + $0xac] sm:$0xf]
      %v2381 = vld [vmem:[%s2192 + $0xb0] sm:$0x1]
      %v2382 = vld [vmem:[%s2192 + $0xb4] sm:$0xf]
      %v2383 = vld [vmem:[%s2192 + $0xb8] sm:$0xf]
      %v2384 = vld [vmem:[%s2192 + $0xbc] sm:$0x1]
      %v2386 = vshrl.u32 %v2337, 16
      %v2388 = vrot.slane %v2386, 4
      %v2389 = vshll.u32 %v2337, 16
      %v2391 = vrot.slane %v2389, 5
      %v2392 = vor.u32 %v2388, %v2391
      %v2393 = vrot.slane %v2392, 4
      %v2395 = vshll.u32 %v2338, 16
      %v2397 = vrot.slane %v2395, 5
      %v2398 = vsel %vm394, %v2393, %v2397
      %v2399 = vshrl.u32 %v2338, 16
      %v2401 = vrot.slane %v2399, 4
      %v2402 = vor.u32 %v2401, %v2397
      %v2403 = vrot.slane %v2402, 4
      %v2405 = vshll.u32 %v2339, 16
      %v2407 = vrot.slane %v2405, 5
      %v2408 = vsel %vm394, %v2403, %v2407
      %v2410 = vshrl.u32 %v2340, 16
      %v2412 = vrot.slane %v2410, 4
      %v2413 = vshll.u32 %v2340, 16
      %v2415 = vrot.slane %v2413, 5
      %v2416 = vor.u32 %v2412, %v2415
      %v2417 = vrot.slane %v2416, 4
      %v2419 = vshll.u32 %v2341, 16
      %v2421 = vrot.slane %v2419, 5
      %v2422 = vsel %vm394, %v2417, %v2421
      %v2423 = vshrl.u32 %v2341, 16
      %v2425 = vrot.slane %v2423, 4
      %v2426 = vor.u32 %v2425, %v2421
      %v2427 = vrot.slane %v2426, 4
      %v2429 = vshll.u32 %v2342, 16
      %v2431 = vrot.slane %v2429, 5
      %v2432 = vsel %vm394, %v2427, %v2431
      %v2434 = vshrl.u32 %v2343, 16
      %v2436 = vrot.slane %v2434, 4
      %v2437 = vshll.u32 %v2343, 16
      %v2439 = vrot.slane %v2437, 5
      %v2440 = vor.u32 %v2436, %v2439
      %v2441 = vrot.slane %v2440, 4
      %v2443 = vshll.u32 %v2344, 16
      %v2445 = vrot.slane %v2443, 5
      %v2446 = vsel %vm394, %v2441, %v2445
      %v2447 = vshrl.u32 %v2344, 16
      %v2449 = vrot.slane %v2447, 4
      %v2450 = vor.u32 %v2449, %v2445
      %v2451 = vrot.slane %v2450, 4
      %v2453 = vshll.u32 %v2345, 16
      %v2455 = vrot.slane %v2453, 5
      %v2456 = vsel %vm394, %v2451, %v2455
      %v2458 = vshrl.u32 %v2346, 16
      %v2460 = vrot.slane %v2458, 4
      %v2461 = vshll.u32 %v2346, 16
      %v2463 = vrot.slane %v2461, 5
      %v2464 = vor.u32 %v2460, %v2463
      %v2465 = vrot.slane %v2464, 4
      %v2467 = vshll.u32 %v2347, 16
      %v2469 = vrot.slane %v2467, 5
      %v2470 = vsel %vm394, %v2465, %v2469
      %v2471 = vshrl.u32 %v2347, 16
      %v2473 = vrot.slane %v2471, 4
      %v2474 = vor.u32 %v2473, %v2469
      %v2475 = vrot.slane %v2474, 4
      %v2477 = vshll.u32 %v2348, 16
      %v2479 = vrot.slane %v2477, 5
      %v2480 = vsel %vm394, %v2475, %v2479
      %v2482 = vshrl.u32 %v2349, 16
      %v2484 = vrot.slane %v2482, 4
      %v2485 = vshll.u32 %v2349, 16
      %v2487 = vrot.slane %v2485, 5
      %v2488 = vor.u32 %v2484, %v2487
      %v2489 = vrot.slane %v2488, 4
      %v2491 = vshll.u32 %v2350, 16
      %v2493 = vrot.slane %v2491, 5
      %v2494 = vsel %vm394, %v2489, %v2493
      %v2495 = vshrl.u32 %v2350, 16
      %v2497 = vrot.slane %v2495, 4
      %v2498 = vor.u32 %v2497, %v2493
      %v2499 = vrot.slane %v2498, 4
      %v2501 = vshll.u32 %v2351, 16
      %v2503 = vrot.slane %v2501, 5
      %v2504 = vsel %vm394, %v2499, %v2503
      %v2506 = vshrl.u32 %v2352, 16
      %v2508 = vrot.slane %v2506, 4
      %v2509 = vshll.u32 %v2352, 16
      %v2511 = vrot.slane %v2509, 5
      %v2512 = vor.u32 %v2508, %v2511
      %v2513 = vrot.slane %v2512, 4
      %v2515 = vshll.u32 %v2353, 16
      %v2517 = vrot.slane %v2515, 5
      %v2518 = vsel %vm394, %v2513, %v2517
      %v2519 = vshrl.u32 %v2353, 16
      %v2521 = vrot.slane %v2519, 4
      %v2522 = vor.u32 %v2521, %v2517
      %v2523 = vrot.slane %v2522, 4
      %v2525 = vshll.u32 %v2354, 16
      %v2527 = vrot.slane %v2525, 5
      %v2528 = vsel %vm394, %v2523, %v2527
      %v2530 = vshrl.u32 %v2355, 16
      %v2532 = vrot.slane %v2530, 4
      %v2533 = vshll.u32 %v2355, 16
      %v2535 = vrot.slane %v2533, 5
      %v2536 = vor.u32 %v2532, %v2535
      %v2537 = vrot.slane %v2536, 4
      %v2539 = vshll.u32 %v2356, 16
      %v2541 = vrot.slane %v2539, 5
      %v2542 = vsel %vm394, %v2537, %v2541
      %v2543 = vshrl.u32 %v2356, 16
      %v2545 = vrot.slane %v2543, 4
      %v2546 = vor.u32 %v2545, %v2541
      %v2547 = vrot.slane %v2546, 4
      %v2549 = vshll.u32 %v2357, 16
      %v2551 = vrot.slane %v2549, 5
      %v2552 = vsel %vm394, %v2547, %v2551
      %v2554 = vshrl.u32 %v2358, 16
      %v2556 = vrot.slane %v2554, 4
      %v2557 = vshll.u32 %v2358, 16
      %v2559 = vrot.slane %v2557, 5
      %v2560 = vor.u32 %v2556, %v2559
      %v2561 = vrot.slane %v2560, 4
      %v2563 = vshll.u32 %v2359, 16
      %v2565 = vrot.slane %v2563, 5
      %v2566 = vsel %vm394, %v2561, %v2565
      %v2567 = vshrl.u32 %v2359, 16
      %v2569 = vrot.slane %v2567, 4
      %v2570 = vor.u32 %v2569, %v2565
      %v2571 = vrot.slane %v2570, 4
      %v2573 = vshll.u32 %v2360, 16
      %v2575 = vrot.slane %v2573, 5
      %v2576 = vsel %vm394, %v2571, %v2575
      %v2578 = vshrl.u32 %v2361, 16
      %v2580 = vrot.slane %v2578, 4
      %v2581 = vshll.u32 %v2361, 16
      %v2583 = vrot.slane %v2581, 5
      %v2584 = vor.u32 %v2580, %v2583
      %v2585 = vrot.slane %v2584, 4
      %v2587 = vshll.u32 %v2362, 16
      %v2589 = vrot.slane %v2587, 5
      %v2590 = vsel %vm394, %v2585, %v2589
      %v2591 = vshrl.u32 %v2362, 16
      %v2593 = vrot.slane %v2591, 4
      %v2594 = vor.u32 %v2593, %v2589
      %v2595 = vrot.slane %v2594, 4
      %v2597 = vshll.u32 %v2363, 16
      %v2599 = vrot.slane %v2597, 5
      %v2600 = vsel %vm394, %v2595, %v2599
      %v2602 = vshrl.u32 %v2364, 16
      %v2604 = vrot.slane %v2602, 4
      %v2605 = vshll.u32 %v2364, 16
      %v2607 = vrot.slane %v2605, 5
      %v2608 = vor.u32 %v2604, %v2607
      %v2609 = vrot.slane %v2608, 4
      %v2611 = vshll.u32 %v2365, 16
      %v2613 = vrot.slane %v2611, 5
      %v2614 = vsel %vm394, %v2609, %v2613
      %v2615 = vshrl.u32 %v2365, 16
      %v2617 = vrot.slane %v2615, 4
      %v2618 = vor.u32 %v2617, %v2613
      %v2619 = vrot.slane %v2618, 4
      %v2621 = vshll.u32 %v2366, 16
      %v2623 = vrot.slane %v2621, 5
      %v2624 = vsel %vm394, %v2619, %v2623
      %v2626 = vshrl.u32 %v2367, 16
      %v2628 = vrot.slane %v2626, 4
      %v2629 = vshll.u32 %v2367, 16
      %v2631 = vrot.slane %v2629, 5
      %v2632 = vor.u32 %v2628, %v2631
      %v2633 = vrot.slane %v2632, 4
      %v2635 = vshll.u32 %v2368, 16
      %v2637 = vrot.slane %v2635, 5
      %v2638 = vsel %vm394, %v2633, %v2637
      %v2639 = vshrl.u32 %v2368, 16
      %v2641 = vrot.slane %v2639, 4
      %v2642 = vor.u32 %v2641, %v2637
      %v2643 = vrot.slane %v2642, 4
      %v2645 = vshll.u32 %v2369, 16
      %v2647 = vrot.slane %v2645, 5
      %v2648 = vsel %vm394, %v2643, %v2647
      %v2650 = vshrl.u32 %v2370, 16
      %v2652 = vrot.slane %v2650, 4
      %v2653 = vshll.u32 %v2370, 16
      %v2655 = vrot.slane %v2653, 5
      %v2656 = vor.u32 %v2652, %v2655
      %v2657 = vrot.slane %v2656, 4
      %v2659 = vshll.u32 %v2371, 16
      %v2661 = vrot.slane %v2659, 5
      %v2662 = vsel %vm394, %v2657, %v2661
      %v2663 = vshrl.u32 %v2371, 16
      %v2665 = vrot.slane %v2663, 4
      %v2666 = vor.u32 %v2665, %v2661
      %v2667 = vrot.slane %v2666, 4
      %v2669 = vshll.u32 %v2372, 16
      %v2671 = vrot.slane %v2669, 5
      %v2672 = vsel %vm394, %v2667, %v2671
      %v2674 = vshrl.u32 %v2373, 16
      %v2676 = vrot.slane %v2674, 4
      %v2677 = vshll.u32 %v2373, 16
      %v2679 = vrot.slane %v2677, 5
      %v2680 = vor.u32 %v2676, %v2679
      %v2681 = vrot.slane %v2680, 4
      %v2683 = vshll.u32 %v2374, 16
      %v2685 = vrot.slane %v2683, 5
      %v2686 = vsel %vm394, %v2681, %v2685
      %v2687 = vshrl.u32 %v2374, 16
      %v2689 = vrot.slane %v2687, 4
      %v2690 = vor.u32 %v2689, %v2685
      %v2691 = vrot.slane %v2690, 4
      %v2693 = vshll.u32 %v2375, 16
      %v2695 = vrot.slane %v2693, 5
      %v2696 = vsel %vm394, %v2691, %v2695
      %v2698 = vshrl.u32 %v2376, 16
      %v2700 = vrot.slane %v2698, 4
      %v2701 = vshll.u32 %v2376, 16
      %v2703 = vrot.slane %v2701, 5
      %v2704 = vor.u32 %v2700, %v2703
      %v2705 = vrot.slane %v2704, 4
      %v2707 = vshll.u32 %v2377, 16
      %v2709 = vrot.slane %v2707, 5
      %v2710 = vsel %vm394, %v2705, %v2709
      %v2711 = vshrl.u32 %v2377, 16
      %v2713 = vrot.slane %v2711, 4
      %v2714 = vor.u32 %v2713, %v2709
      %v2715 = vrot.slane %v2714, 4
      %v2717 = vshll.u32 %v2378, 16
      %v2719 = vrot.slane %v2717, 5
      %v2720 = vsel %vm394, %v2715, %v2719
      %v2722 = vshrl.u32 %v2379, 16
      %v2724 = vrot.slane %v2722, 4
      %v2725 = vshll.u32 %v2379, 16
      %v2727 = vrot.slane %v2725, 5
      %v2728 = vor.u32 %v2724, %v2727
      %v2729 = vrot.slane %v2728, 4
      %v2731 = vshll.u32 %v2380, 16
      %v2733 = vrot.slane %v2731, 5
      %v2734 = vsel %vm394, %v2729, %v2733
      %v2735 = vshrl.u32 %v2380, 16
      %v2737 = vrot.slane %v2735, 4
      %v2738 = vor.u32 %v2737, %v2733
      %v2739 = vrot.slane %v2738, 4
      %v2741 = vshll.u32 %v2381, 16
      %v2743 = vrot.slane %v2741, 5
      %v2744 = vsel %vm394, %v2739, %v2743
      %v2746 = vshrl.u32 %v2382, 16
      %v2748 = vrot.slane %v2746, 4
      %v2749 = vshll.u32 %v2382, 16
      %v2751 = vrot.slane %v2749, 5
      %v2752 = vor.u32 %v2748, %v2751
      %v2753 = vrot.slane %v2752, 4
      %v2755 = vshll.u32 %v2383, 16
      %v2757 = vrot.slane %v2755, 5
      %v2758 = vsel %vm394, %v2753, %v2757
      %v2759 = vshrl.u32 %v2383, 16
      %v2761 = vrot.slane %v2759, 4
      %v2762 = vor.u32 %v2761, %v2757
      %v2763 = vrot.slane %v2762, 4
      %v2765 = vshll.u32 %v2384, 16
      %v2767 = vrot.slane %v2765, 5
      %v2768 = vsel %vm394, %v2763, %v2767
      %v2769 = vunpack.c.l.b16 %v2398
      %v2770 = vunpack.c.l.b16 %v2408
      %v2771 = vunpack.c.l.b16 %v2422
      %v2772 = vunpack.c.l.b16 %v2432
      %v2773 = vunpack.c.l.b16 %v2446
      %v2774 = vunpack.c.l.b16 %v2456
      %v2775 = vunpack.c.l.b16 %v2470
      %v2776 = vunpack.c.l.b16 %v2480
      %v2777 = vunpack.c.l.b16 %v2494
      %v2778 = vunpack.c.l.b16 %v2504
      %v2779 = vunpack.c.l.b16 %v2518
      %v2780 = vunpack.c.l.b16 %v2528
      %v2781 = vunpack.c.l.b16 %v2542
      %v2782 = vunpack.c.l.b16 %v2552
      %v2783 = vunpack.c.l.b16 %v2566
      %v2784 = vunpack.c.l.b16 %v2576
      %v2785 = vunpack.c.l.b16 %v2590
      %v2786 = vunpack.c.l.b16 %v2600
      %v2787 = vunpack.c.l.b16 %v2614
      %v2788 = vunpack.c.l.b16 %v2624
      %v2789 = vunpack.c.l.b16 %v2638
      %v2790 = vunpack.c.l.b16 %v2648
      %v2791 = vunpack.c.l.b16 %v2662
      %v2792 = vunpack.c.l.b16 %v2672
      %v2793 = vunpack.c.l.b16 %v2686
      %v2794 = vunpack.c.l.b16 %v2696
      %v2795 = vunpack.c.l.b16 %v2710
      %v2796 = vunpack.c.l.b16 %v2720
      %v2797 = vunpack.c.l.b16 %v2734
      %v2798 = vunpack.c.l.b16 %v2744
      %v2799 = vunpack.c.l.b16 %v2758
      %v2800 = vunpack.c.l.b16 %v2768
      %v2801 = vpack.c.b16 %v2770, %v2769
      %v2802 = vpack.c.b16 %v2772, %v2771
      %v2803 = vpack.c.b16 %v2774, %v2773
      %v2804 = vpack.c.b16 %v2776, %v2775
      %v2805 = vpack.c.b16 %v2778, %v2777
      %v2806 = vpack.c.b16 %v2780, %v2779
      %v2807 = vpack.c.b16 %v2782, %v2781
      %v2808 = vpack.c.b16 %v2784, %v2783
      %v2809 = vpack.c.b16 %v2786, %v2785
      %v2810 = vpack.c.b16 %v2788, %v2787
      %v2811 = vpack.c.b16 %v2790, %v2789
      %v2812 = vpack.c.b16 %v2792, %v2791
      %v2813 = vpack.c.b16 %v2794, %v2793
      %v2814 = vpack.c.b16 %v2796, %v2795
      %v2815 = vpack.c.b16 %v2798, %v2797
      %v2816 = vpack.c.b16 %v2800, %v2799
      %2817 = vrot.lane.b32.xlu0 %v2801, 64
      %v2818 = vpop.permute.xlu0 %2817
      %2819 = vrot.lane.b32.xlu0 %v2802, 64
      %v2820 = vpop.permute.xlu0 %2819
      %2821 = vrot.lane.b32.xlu0 %v2803, 64
      %v2822 = vpop.permute.xlu0 %2821
      %2823 = vrot.lane.b32.xlu0 %v2804, 64
      %v2824 = vpop.permute.xlu0 %2823
      %2825 = vrot.lane.b32.xlu0 %v2805, 64
      %v2826 = vpop.permute.xlu0 %2825
      %2827 = vrot.lane.b32.xlu0 %v2806, 64
      %v2828 = vpop.permute.xlu0 %2827
      %2829 = vrot.lane.b32.xlu0 %v2807, 64
      %v2830 = vpop.permute.xlu0 %2829
      %2831 = vrot.lane.b32.xlu0 %v2808, 64
      %v2832 = vpop.permute.xlu0 %2831
      %2833 = vrot.lane.b32.xlu0 %v2809, 64
      %v2834 = vpop.permute.xlu0 %2833
      %2835 = vrot.lane.b32.xlu0 %v2810, 64
      %v2836 = vpop.permute.xlu0 %2835
      %2837 = vrot.lane.b32.xlu0 %v2811, 64
      %v2838 = vpop.permute.xlu0 %2837
      %2839 = vrot.lane.b32.xlu0 %v2812, 64
      %v2840 = vpop.permute.xlu0 %2839
      %2841 = vrot.lane.b32.xlu0 %v2813, 64
      %v2842 = vpop.permute.xlu0 %2841
      %2843 = vrot.lane.b32.xlu0 %v2814, 64
      %v2844 = vpop.permute.xlu0 %2843
      %2845 = vrot.lane.b32.xlu0 %v2815, 64
      %v2846 = vpop.permute.xlu0 %2845
      %2847 = vrot.lane.b32.xlu0 %v2816, 64
      %v2848 = vpop.permute.xlu0 %2847
      %2865 = vst.msk [vmem:[#allocation2 + $0x18] sm:$0xff] %vm875, %v2818
      %2866 = vst.msk [vmem:[#allocation2 + $0x40] sm:$0xff] %vm875, %v2820
      %2867 = vst.msk [vmem:[#allocation2 + $0x68] sm:$0xff] %vm875, %v2822
      %2868 = vst.msk [vmem:[#allocation2 + $0x90] sm:$0xff] %vm875, %v2824
      %2869 = vst.msk [vmem:[#allocation2 + $0xb8] sm:$0xff] %vm875, %v2826
      %2870 = vst.msk [vmem:[#allocation2 + $0xe0] sm:$0xff] %vm875, %v2828
      %2871 = vst.msk [vmem:[#allocation2 + $0x108] sm:$0xff] %vm875, %v2830
      %2872 = vst.msk [vmem:[#allocation2 + $0x130] sm:$0xff] %vm875, %v2832
      %2873 = vst.msk [vmem:[#allocation2 + $0x158] sm:$0xff] %vm875, %v2834
      %2874 = vst.msk [vmem:[#allocation2 + $0x180] sm:$0xff] %vm875, %v2836
      %2875 = vst.msk [vmem:[#allocation2 + $0x1a8] sm:$0xff] %vm875, %v2838
      %2876 = vst.msk [vmem:[#allocation2 + $0x1d0] sm:$0xff] %vm875, %v2840
      %2877 = vst.msk [vmem:[#allocation2 + $0x1f8] sm:$0xff] %vm875, %v2842
      %2878 = vst.msk [vmem:[#allocation2 + $0x220] sm:$0xff] %vm875, %v2844
      %2879 = vst.msk [vmem:[#allocation2 + $0x248] sm:$0xff] %vm875, %v2846
      %2880 = vst.msk [vmem:[#allocation2 + $0x270] sm:$0xff] %vm875, %v2848
      %v2881 = vld [vmem:[%s2192] sm:$0xe]
      %v2882 = vld [vmem:[%s2192 + $0x4] sm:$0xf]
      %v2883 = vld [vmem:[%s2192 + $0x8] sm:$0x1]
      %v2884 = vld [vmem:[%s2192 + $0xc] sm:$0xe]
      %v2885 = vld [vmem:[%s2192 + $0x10] sm:$0xf]
      %v2886 = vld [vmem:[%s2192 + $0x14] sm:$0x1]
      %v2887 = vld [vmem:[%s2192 + $0x18] sm:$0xe]
      %v2888 = vld [vmem:[%s2192 + $0x1c] sm:$0xf]
      %v2889 = vld [vmem:[%s2192 + $0x20] sm:$0x1]
      %v2890 = vld [vmem:[%s2192 + $0x24] sm:$0xe]
      %v2891 = vld [vmem:[%s2192 + $0x28] sm:$0xf]
      %v2892 = vld [vmem:[%s2192 + $0x2c] sm:$0x1]
      %v2893 = vld [vmem:[%s2192 + $0x30] sm:$0xe]
      %v2894 = vld [vmem:[%s2192 + $0x34] sm:$0xf]
      %v2895 = vld [vmem:[%s2192 + $0x38] sm:$0x1]
      %v2896 = vld [vmem:[%s2192 + $0x3c] sm:$0xe]
      %v2897 = vld [vmem:[%s2192 + $0x40] sm:$0xf]
      %v2898 = vld [vmem:[%s2192 + $0x44] sm:$0x1]
      %v2899 = vld [vmem:[%s2192 + $0x48] sm:$0xe]
      %v2900 = vld [vmem:[%s2192 + $0x4c] sm:$0xf]
      %v2901 = vld [vmem:[%s2192 + $0x50] sm:$0x1]
      %v2902 = vld [vmem:[%s2192 + $0x54] sm:$0xe]
      %v2903 = vld [vmem:[%s2192 + $0x58] sm:$0xf]
      %v2904 = vld [vmem:[%s2192 + $0x5c] sm:$0x1]
      %v2905 = vld [vmem:[%s2192 + $0x60] sm:$0xe]
      %v2906 = vld [vmem:[%s2192 + $0x64] sm:$0xf]
      %v2907 = vld [vmem:[%s2192 + $0x68] sm:$0x1]
      %v2908 = vld [vmem:[%s2192 + $0x6c] sm:$0xe]
      %v2909 = vld [vmem:[%s2192 + $0x70] sm:$0xf]
      %v2910 = vld [vmem:[%s2192 + $0x74] sm:$0x1]
      %v2911 = vld [vmem:[%s2192 + $0x78] sm:$0xe]
      %v2912 = vld [vmem:[%s2192 + $0x7c] sm:$0xf]
      %v2913 = vld [vmem:[%s2192 + $0x80] sm:$0x1]
      %v2914 = vld [vmem:[%s2192 + $0x84] sm:$0xe]
      %v2915 = vld [vmem:[%s2192 + $0x88] sm:$0xf]
      %v2916 = vld [vmem:[%s2192 + $0x8c] sm:$0x1]
      %v2917 = vld [vmem:[%s2192 + $0x90] sm:$0xe]
      %v2918 = vld [vmem:[%s2192 + $0x94] sm:$0xf]
      %v2919 = vld [vmem:[%s2192 + $0x98] sm:$0x1]
      %v2920 = vld [vmem:[%s2192 + $0x9c] sm:$0xe]
      %v2921 = vld [vmem:[%s2192 + $0xa0] sm:$0xf]
      %v2922 = vld [vmem:[%s2192 + $0xa4] sm:$0x1]
      %v2923 = vld [vmem:[%s2192 + $0xa8] sm:$0xe]
      %v2924 = vld [vmem:[%s2192 + $0xac] sm:$0xf]
      %v2925 = vld [vmem:[%s2192 + $0xb0] sm:$0x1]
      %v2926 = vld [vmem:[%s2192 + $0xb4] sm:$0xe]
      %v2927 = vld [vmem:[%s2192 + $0xb8] sm:$0xf]
      %v2928 = vld [vmem:[%s2192 + $0xbc] sm:$0x1]
      %v2977 = vrot.slane %v2881, 5
      %v2978 = vrot.slane %v2977, 4
      %v2979 = vrot.slane %v2882, 5
      %v2980 = vsel %vm990, %v2978, %v2979
      %v2981 = vrot.slane %v2979, 4
      %v2982 = vrot.slane %v2883, 5
      %v2983 = vsel %vm990, %v2981, %v2982
      %v2984 = vrot.slane %v2884, 5
      %v2985 = vrot.slane %v2984, 4
      %v2986 = vrot.slane %v2885, 5
      %v2987 = vsel %vm990, %v2985, %v2986
      %v2988 = vrot.slane %v2986, 4
      %v2989 = vrot.slane %v2886, 5
      %v2990 = vsel %vm990, %v2988, %v2989
      %v2991 = vrot.slane %v2887, 5
      %v2992 = vrot.slane %v2991, 4
      %v2993 = vrot.slane %v2888, 5
      %v2994 = vsel %vm990, %v2992, %v2993
      %v2995 = vrot.slane %v2993, 4
      %v2996 = vrot.slane %v2889, 5
      %v2997 = vsel %vm990, %v2995, %v2996
      %v2998 = vrot.slane %v2890, 5
      %v2999 = vrot.slane %v2998, 4
      %v3000 = vrot.slane %v2891, 5
      %v3001 = vsel %vm990, %v2999, %v3000
      %v3002 = vrot.slane %v3000, 4
      %v3003 = vrot.slane %v2892, 5
      %v3004 = vsel %vm990, %v3002, %v3003
      %v3005 = vrot.slane %v2893, 5
      %v3006 = vrot.slane %v3005, 4
      %v3007 = vrot.slane %v2894, 5
      %v3008 = vsel %vm990, %v3006, %v3007
      %v3009 = vrot.slane %v3007, 4
      %v3010 = vrot.slane %v2895, 5
      %v3011 = vsel %vm990, %v3009, %v3010
      %v3012 = vrot.slane %v2896, 5
      %v3013 = vrot.slane %v3012, 4
      %v3014 = vrot.slane %v2897, 5
      %v3015 = vsel %vm990, %v3013, %v3014
      %v3016 = vrot.slane %v3014, 4
      %v3017 = vrot.slane %v2898, 5
      %v3018 = vsel %vm990, %v3016, %v3017
      %v3019 = vrot.slane %v2899, 5
      %v3020 = vrot.slane %v3019, 4
      %v3021 = vrot.slane %v2900, 5
      %v3022 = vsel %vm990, %v3020, %v3021
      %v3023 = vrot.slane %v3021, 4
      %v3024 = vrot.slane %v2901, 5
      %v3025 = vsel %vm990, %v3023, %v3024
      %v3026 = vrot.slane %v2902, 5
      %v3027 = vrot.slane %v3026, 4
      %v3028 = vrot.slane %v2903, 5
      %v3029 = vsel %vm990, %v3027, %v3028
      %v3030 = vrot.slane %v3028, 4
      %v3031 = vrot.slane %v2904, 5
      %v3032 = vsel %vm990, %v3030, %v3031
      %v3033 = vrot.slane %v2905, 5
      %v3034 = vrot.slane %v3033, 4
      %v3035 = vrot.slane %v2906, 5
      %v3036 = vsel %vm990, %v3034, %v3035
      %v3037 = vrot.slane %v3035, 4
      %v3038 = vrot.slane %v2907, 5
      %v3039 = vsel %vm990, %v3037, %v3038
      %v3040 = vrot.slane %v2908, 5
      %v3041 = vrot.slane %v3040, 4
      %v3042 = vrot.slane %v2909, 5
      %v3043 = vsel %vm990, %v3041, %v3042
      %v3044 = vrot.slane %v3042, 4
      %v3045 = vrot.slane %v2910, 5
      %v3046 = vsel %vm990, %v3044, %v3045
      %v3047 = vrot.slane %v2911, 5
      %v3048 = vrot.slane %v3047, 4
      %v3049 = vrot.slane %v2912, 5
      %v3050 = vsel %vm990, %v3048, %v3049
      %v3051 = vrot.slane %v3049, 4
      %v3052 = vrot.slane %v2913, 5
      %v3053 = vsel %vm990, %v3051, %v3052
      %v3054 = vrot.slane %v2914, 5
      %v3055 = vrot.slane %v3054, 4
      %v3056 = vrot.slane %v2915, 5
      %v3057 = vsel %vm990, %v3055, %v3056
      %v3058 = vrot.slane %v3056, 4
      %v3059 = vrot.slane %v2916, 5
      %v3060 = vsel %vm990, %v3058, %v3059
      %v3061 = vrot.slane %v2917, 5
      %v3062 = vrot.slane %v3061, 4
      %v3063 = vrot.slane %v2918, 5
      %v3064 = vsel %vm990, %v3062, %v3063
      %v3065 = vrot.slane %v3063, 4
      %v3066 = vrot.slane %v2919, 5
      %v3067 = vsel %vm990, %v3065, %v3066
      %v3068 = vrot.slane %v2920, 5
      %v3069 = vrot.slane %v3068, 4
      %v3070 = vrot.slane %v2921, 5
      %v3071 = vsel %vm990, %v3069, %v3070
      %v3072 = vrot.slane %v3070, 4
      %v3073 = vrot.slane %v2922, 5
      %v3074 = vsel %vm990, %v3072, %v3073
      %v3075 = vrot.slane %v2923, 5
      %v3076 = vrot.slane %v3075, 4
      %v3077 = vrot.slane %v2924, 5
      %v3078 = vsel %vm990, %v3076, %v3077
      %v3079 = vrot.slane %v3077, 4
      %v3080 = vrot.slane %v2925, 5
      %v3081 = vsel %vm990, %v3079, %v3080
      %v3082 = vrot.slane %v2926, 5
      %v3083 = vrot.slane %v3082, 4
      %v3084 = vrot.slane %v2927, 5
      %v3085 = vsel %vm990, %v3083, %v3084
      %v3086 = vrot.slane %v3084, 4
      %v3087 = vrot.slane %v2928, 5
      %v3088 = vsel %vm990, %v3086, %v3087
      %v3089 = vunpack.c.l.b16 %v2980
      %v3090 = vunpack.c.l.b16 %v2983
      %v3091 = vunpack.c.l.b16 %v2987
      %v3092 = vunpack.c.l.b16 %v2990
      %v3093 = vunpack.c.l.b16 %v2994
      %v3094 = vunpack.c.l.b16 %v2997
      %v3095 = vunpack.c.l.b16 %v3001
      %v3096 = vunpack.c.l.b16 %v3004
      %v3097 = vunpack.c.l.b16 %v3008
      %v3098 = vunpack.c.l.b16 %v3011
      %v3099 = vunpack.c.l.b16 %v3015
      %v3100 = vunpack.c.l.b16 %v3018
      %v3101 = vunpack.c.l.b16 %v3022
      %v3102 = vunpack.c.l.b16 %v3025
      %v3103 = vunpack.c.l.b16 %v3029
      %v3104 = vunpack.c.l.b16 %v3032
      %v3105 = vunpack.c.l.b16 %v3036
      %v3106 = vunpack.c.l.b16 %v3039
      %v3107 = vunpack.c.l.b16 %v3043
      %v3108 = vunpack.c.l.b16 %v3046
      %v3109 = vunpack.c.l.b16 %v3050
      %v3110 = vunpack.c.l.b16 %v3053
      %v3111 = vunpack.c.l.b16 %v3057
      %v3112 = vunpack.c.l.b16 %v3060
      %v3113 = vunpack.c.l.b16 %v3064
      %v3114 = vunpack.c.l.b16 %v3067
      %v3115 = vunpack.c.l.b16 %v3071
      %v3116 = vunpack.c.l.b16 %v3074
      %v3117 = vunpack.c.l.b16 %v3078
      %v3118 = vunpack.c.l.b16 %v3081
      %v3119 = vunpack.c.l.b16 %v3085
      %v3120 = vunpack.c.l.b16 %v3088
      %v3121 = vpack.c.b16 %v3090, %v3089
      %v3122 = vpack.c.b16 %v3092, %v3091
      %v3123 = vpack.c.b16 %v3094, %v3093
      %v3124 = vpack.c.b16 %v3096, %v3095
      %v3125 = vpack.c.b16 %v3098, %v3097
      %v3126 = vpack.c.b16 %v3100, %v3099
      %v3127 = vpack.c.b16 %v3102, %v3101
      %v3128 = vpack.c.b16 %v3104, %v3103
      %v3129 = vpack.c.b16 %v3106, %v3105
      %v3130 = vpack.c.b16 %v3108, %v3107
      %v3131 = vpack.c.b16 %v3110, %v3109
      %v3132 = vpack.c.b16 %v3112, %v3111
      %v3133 = vpack.c.b16 %v3114, %v3113
      %v3134 = vpack.c.b16 %v3116, %v3115
      %v3135 = vpack.c.b16 %v3118, %v3117
      %v3136 = vpack.c.b16 %v3120, %v3119
      %3153 = vst.msk [vmem:[#allocation2 + $0x20] sm:$0xff] %vm327, %v3121
      %3154 = vst.msk [vmem:[#allocation2 + $0x48] sm:$0xff] %vm327, %v3122
      %3155 = vst.msk [vmem:[#allocation2 + $0x70] sm:$0xff] %vm327, %v3123
      %3156 = vst.msk [vmem:[#allocation2 + $0x98] sm:$0xff] %vm327, %v3124
      %3157 = vst.msk [vmem:[#allocation2 + $0xc0] sm:$0xff] %vm327, %v3125
      %3158 = vst.msk [vmem:[#allocation2 + $0xe8] sm:$0xff] %vm327, %v3126
      %3159 = vst.msk [vmem:[#allocation2 + $0x110] sm:$0xff] %vm327, %v3127
      %3160 = vst.msk [vmem:[#allocation2 + $0x138] sm:$0xff] %vm327, %v3128
      %3161 = vst.msk [vmem:[#allocation2 + $0x160] sm:$0xff] %vm327, %v3129
      %3162 = vst.msk [vmem:[#allocation2 + $0x188] sm:$0xff] %vm327, %v3130
      %3163 = vst.msk [vmem:[#allocation2 + $0x1b0] sm:$0xff] %vm327, %v3131
      %3164 = vst.msk [vmem:[#allocation2 + $0x1d8] sm:$0xff] %vm327, %v3132
      %3165 = vst.msk [vmem:[#allocation2 + $0x200] sm:$0xff] %vm327, %v3133
      %3166 = vst.msk [vmem:[#allocation2 + $0x228] sm:$0xff] %vm327, %v3134
      %3167 = vst.msk [vmem:[#allocation2 + $0x250] sm:$0xff] %vm327, %v3135
      %3168 = vst.msk [vmem:[#allocation2 + $0x278] sm:$0xff] %vm327, %v3136
      %v3169 = vld [vmem:[#allocation2] sm:$0xff]
      %v3170 = vld [vmem:[#allocation2 + $0x8] sm:$0xff]
      %v3171 = vld [vmem:[#allocation2 + $0x10] sm:$0xff]
      %v3172 = vld [vmem:[#allocation2 + $0x18] sm:$0xff]
      %v3173 = vld [vmem:[#allocation2 + $0x20] sm:$0xff]
      %v3174 = vld [vmem:[#allocation2 + $0x28] sm:$0xff]
      %v3175 = vld [vmem:[#allocation2 + $0x30] sm:$0xff]
      %v3176 = vld [vmem:[#allocation2 + $0x38] sm:$0xff]
      %v3177 = vld [vmem:[#allocation2 + $0x40] sm:$0xff]
      %v3178 = vld [vmem:[#allocation2 + $0x48] sm:$0xff]
      %v3179 = vld [vmem:[#allocation2 + $0x50] sm:$0xff]
      %v3180 = vld [vmem:[#allocation2 + $0x58] sm:$0xff]
      %v3181 = vld [vmem:[#allocation2 + $0x60] sm:$0xff]
      %v3182 = vld [vmem:[#allocation2 + $0x68] sm:$0xff]
      %v3183 = vld [vmem:[#allocation2 + $0x70] sm:$0xff]
      %v3184 = vld [vmem:[#allocation2 + $0x78] sm:$0xff]
      %v3185 = vld [vmem:[#allocation2 + $0x80] sm:$0xff]
      %v3186 = vld [vmem:[#allocation2 + $0x88] sm:$0xff]
      %v3187 = vld [vmem:[#allocation2 + $0x90] sm:$0xff]
      %v3188 = vld [vmem:[#allocation2 + $0x98] sm:$0xff]
      %v3189 = vld [vmem:[#allocation2 + $0xa0] sm:$0xff]
      %v3190 = vld [vmem:[#allocation2 + $0xa8] sm:$0xff]
      %v3191 = vld [vmem:[#allocation2 + $0xb0] sm:$0xff]
      %v3192 = vld [vmem:[#allocation2 + $0xb8] sm:$0xff]
      %v3193 = vld [vmem:[#allocation2 + $0xc0] sm:$0xff]
      %v3194 = vld [vmem:[#allocation2 + $0xc8] sm:$0xff]
      %v3195 = vld [vmem:[#allocation2 + $0xd0] sm:$0xff]
      %v3196 = vld [vmem:[#allocation2 + $0xd8] sm:$0xff]
      %v3197 = vld [vmem:[#allocation2 + $0xe0] sm:$0xff]
      %v3198 = vld [vmem:[#allocation2 + $0xe8] sm:$0xff]
      %v3199 = vld [vmem:[#allocation2 + $0xf0] sm:$0xff]
      %v3200 = vld [vmem:[#allocation2 + $0xf8] sm:$0xff]
      %v3201 = vld [vmem:[#allocation2 + $0x100] sm:$0xff]
      %v3202 = vld [vmem:[#allocation2 + $0x108] sm:$0xff]
      %v3203 = vld [vmem:[#allocation2 + $0x110] sm:$0xff]
      %v3204 = vld [vmem:[#allocation2 + $0x118] sm:$0xff]
      %v3205 = vld [vmem:[#allocation2 + $0x120] sm:$0xff]
      %v3206 = vld [vmem:[#allocation2 + $0x128] sm:$0xff]
      %v3207 = vld [vmem:[#allocation2 + $0x130] sm:$0xff]
      %v3208 = vld [vmem:[#allocation2 + $0x138] sm:$0xff]
      %v3209 = vld [vmem:[#allocation2 + $0x140] sm:$0xff]
      %v3210 = vld [vmem:[#allocation2 + $0x148] sm:$0xff]
      %v3211 = vld [vmem:[#allocation2 + $0x150] sm:$0xff]
      %v3212 = vld [vmem:[#allocation2 + $0x158] sm:$0xff]
      %v3213 = vld [vmem:[#allocation2 + $0x160] sm:$0xff]
      %v3214 = vld [vmem:[#allocation2 + $0x168] sm:$0xff]
      %v3215 = vld [vmem:[#allocation2 + $0x170] sm:$0xff]
      %v3216 = vld [vmem:[#allocation2 + $0x178] sm:$0xff]
      %v3217 = vld [vmem:[#allocation2 + $0x180] sm:$0xff]
      %v3218 = vld [vmem:[#allocation2 + $0x188] sm:$0xff]
      %v3219 = vld [vmem:[#allocation2 + $0x190] sm:$0xff]
      %v3220 = vld [vmem:[#allocation2 + $0x198] sm:$0xff]
      %v3221 = vld [vmem:[#allocation2 + $0x1a0] sm:$0xff]
      %v3222 = vld [vmem:[#allocation2 + $0x1a8] sm:$0xff]
      %v3223 = vld [vmem:[#allocation2 + $0x1b0] sm:$0xff]
      %v3224 = vld [vmem:[#allocation2 + $0x1b8] sm:$0xff]
      %v3225 = vld [vmem:[#allocation2 + $0x1c0] sm:$0xff]
      %v3226 = vld [vmem:[#allocation2 + $0x1c8] sm:$0xff]
      %v3227 = vld [vmem:[#allocation2 + $0x1d0] sm:$0xff]
      %v3228 = vld [vmem:[#allocation2 + $0x1d8] sm:$0xff]
      %v3229 = vld [vmem:[#allocation2 + $0x1e0] sm:$0xff]
      %v3230 = vld [vmem:[#allocation2 + $0x1e8] sm:$0xff]
      %v3231 = vld [vmem:[#allocation2 + $0x1f0] sm:$0xff]
      %v3232 = vld [vmem:[#allocation2 + $0x1f8] sm:$0xff]
      %v3233 = vld [vmem:[#allocation2 + $0x200] sm:$0xff]
      %v3234 = vld [vmem:[#allocation2 + $0x208] sm:$0xff]
      %v3235 = vld [vmem:[#allocation2 + $0x210] sm:$0xff]
      %v3236 = vld [vmem:[#allocation2 + $0x218] sm:$0xff]
      %v3237 = vld [vmem:[#allocation2 + $0x220] sm:$0xff]
      %v3238 = vld [vmem:[#allocation2 + $0x228] sm:$0xff]
      %v3239 = vld [vmem:[#allocation2 + $0x230] sm:$0xff]
      %v3240 = vld [vmem:[#allocation2 + $0x238] sm:$0xff]
      %v3241 = vld [vmem:[#allocation2 + $0x240] sm:$0xff]
      %v3242 = vld [vmem:[#allocation2 + $0x248] sm:$0xff]
      %v3243 = vld [vmem:[#allocation2 + $0x250] sm:$0xff]
      %v3244 = vld [vmem:[#allocation2 + $0x258] sm:$0xff]
      %v3245 = vld [vmem:[#allocation2 + $0x260] sm:$0xff]
      %v3246 = vld [vmem:[#allocation2 + $0x268] sm:$0xff]
      %v3247 = vld [vmem:[#allocation2 + $0x270] sm:$0xff]
      %v3248 = vld [vmem:[#allocation2 + $0x278] sm:$0xff]
      %v3249 = vld [vmem:[%s1] sm:$0xf]
      %v3250 = vld [vmem:[%s1 + $0x4] sm:$0xf]
      %v3251 = vld [vmem:[%s1 + $0x8] sm:$0xf]
      %v3252 = vld [vmem:[%s1 + $0xc] sm:$0xf]
      %v3253 = vld [vmem:[%s1 + $0x10] sm:$0xf]
      %v3254 = vld [vmem:[%s1 + $0x14] sm:$0xf]
      %v3255 = vld [vmem:[%s1 + $0x18] sm:$0xf]
      %v3256 = vld [vmem:[%s1 + $0x1c] sm:$0xf]
      %v3257 = vld [vmem:[%s1 + $0x20] sm:$0xf]
      %v3258 = vld [vmem:[%s1 + $0x24] sm:$0xf]
      %v3259 = vld [vmem:[%s1 + $0x28] sm:$0xf]
      %v3260 = vld [vmem:[%s1 + $0x2c] sm:$0xf]
      %v3261 = vld [vmem:[%s1 + $0x30] sm:$0xf]
      %v3262 = vld [vmem:[%s1 + $0x34] sm:$0xf]
      %v3263 = vld [vmem:[%s1 + $0x38] sm:$0xf]
      %v3264 = vld [vmem:[%s1 + $0x3c] sm:$0xf]
      %v3265 = vld [vmem:[%s1 + $0x40] sm:$0xf]
      %v3266 = vld [vmem:[%s1 + $0x44] sm:$0xf]
      %v3267 = vld [vmem:[%s1 + $0x48] sm:$0xf]
      %v3268 = vld [vmem:[%s1 + $0x4c] sm:$0xf]
      %v3269 = vld [vmem:[%s1 + $0x50] sm:$0xf]
      %v3270 = vld [vmem:[%s1 + $0x54] sm:$0xf]
      %v3271 = vld [vmem:[%s1 + $0x58] sm:$0xf]
      %v3272 = vld [vmem:[%s1 + $0x5c] sm:$0xf]
      %v3273 = vld [vmem:[%s1 + $0x60] sm:$0xf]
      %v3274 = vld [vmem:[%s1 + $0x64] sm:$0xf]
      %v3275 = vld [vmem:[%s1 + $0x68] sm:$0xf]
      %v3276 = vld [vmem:[%s1 + $0x6c] sm:$0xf]
      %v3277 = vld [vmem:[%s1 + $0x70] sm:$0xf]
      %v3278 = vld [vmem:[%s1 + $0x74] sm:$0xf]
      %v3279 = vld [vmem:[%s1 + $0x78] sm:$0xf]
      %v3280 = vld [vmem:[%s1 + $0x7c] sm:$0xf]
      %v3281 = vld [vmem:[%s1 + $0x80] sm:$0xf]
      %v3282 = vld [vmem:[%s1 + $0x84] sm:$0xf]
      %v3283 = vld [vmem:[%s1 + $0x88] sm:$0xf]
      %v3284 = vld [vmem:[%s1 + $0x8c] sm:$0xf]
      %v3285 = vld [vmem:[%s1 + $0x90] sm:$0xf]
      %v3286 = vld [vmem:[%s1 + $0x94] sm:$0xf]
      %v3287 = vld [vmem:[%s1 + $0x98] sm:$0xf]
      %v3288 = vld [vmem:[%s1 + $0x9c] sm:$0xf]
      %v3289 = vld [vmem:[%s1 + $0xa0] sm:$0xf]
      %v3290 = vld [vmem:[%s1 + $0xa4] sm:$0xf]
      %v3291 = vld [vmem:[%s1 + $0xa8] sm:$0xf]
      %v3292 = vld [vmem:[%s1 + $0xac] sm:$0xf]
      %v3293 = vld [vmem:[%s1 + $0xb0] sm:$0xf]
      %v3294 = vld [vmem:[%s1 + $0xb4] sm:$0xf]
      %v3295 = vld [vmem:[%s1 + $0xb8] sm:$0xf]
      %v3296 = vld [vmem:[%s1 + $0xbc] sm:$0xf]
      %v3297 = vld [vmem:[%s1 + $0xc0] sm:$0xf]
      %v3298 = vld [vmem:[%s1 + $0xc4] sm:$0xf]
      %v3299 = vld [vmem:[%s1 + $0xc8] sm:$0xf]
      %v3300 = vld [vmem:[%s1 + $0xcc] sm:$0xf]
      %v3301 = vld [vmem:[%s1 + $0xd0] sm:$0xf]
      %v3302 = vld [vmem:[%s1 + $0xd4] sm:$0xf]
      %v3303 = vld [vmem:[%s1 + $0xd8] sm:$0xf]
      %v3304 = vld [vmem:[%s1 + $0xdc] sm:$0xf]
      %v3305 = vld [vmem:[%s1 + $0xe0] sm:$0xf]
      %v3306 = vld [vmem:[%s1 + $0xe4] sm:$0xf]
      %v3307 = vld [vmem:[%s1 + $0xe8] sm:$0xf]
      %v3308 = vld [vmem:[%s1 + $0xec] sm:$0xf]
      %v3309 = vld [vmem:[%s1 + $0xf0] sm:$0xf]
      %v3310 = vld [vmem:[%s1 + $0xf4] sm:$0xf]
      %v3311 = vld [vmem:[%s1 + $0xf8] sm:$0xf]
      %v3312 = vld [vmem:[%s1 + $0xfc] sm:$0xf]
      %v3313 = vld [vmem:[%s1 + $0x100] sm:$0xf]
      %v3314 = vld [vmem:[%s1 + $0x104] sm:$0xf]
      %v3315 = vld [vmem:[%s1 + $0x108] sm:$0xf]
      %v3316 = vld [vmem:[%s1 + $0x10c] sm:$0xf]
      %v3317 = vld [vmem:[%s1 + $0x110] sm:$0xf]
      %v3318 = vld [vmem:[%s1 + $0x114] sm:$0xf]
      %v3319 = vld [vmem:[%s1 + $0x118] sm:$0xf]
      %v3320 = vld [vmem:[%s1 + $0x11c] sm:$0xf]
      %v3321 = vld [vmem:[%s2] sm:$0x1]
      %v3323 = vlaneseq
      %v3324 = vshrl.u32 %v3323, 7
      %v3325 = vsub.s32 0, %v3324
      %v3326 = vrot.slane %v3321, %v3325
      %v3400 = vunpack.c.l.b16 %v3249
      %v3401 = vunpack.c.l.b16 %v3250
      %v3402 = vunpack.c.l.b16 %v3251
      %v3403 = vunpack.c.l.b16 %v3252
      %v3404 = vunpack.c.l.b16 %v3253
      %v3405 = vunpack.c.l.b16 %v3254
      %v3406 = vunpack.c.l.b16 %v3255
      %v3407 = vunpack.c.l.b16 %v3256
      %v3408 = vunpack.c.l.b16 %v3257
      %v3409 = vunpack.c.l.b16 %v3258
      %v3410 = vunpack.c.l.b16 %v3259
      %v3411 = vunpack.c.l.b16 %v3260
      %v3412 = vunpack.c.l.b16 %v3261
      %v3413 = vunpack.c.l.b16 %v3262
      %v3414 = vunpack.c.l.b16 %v3263
      %v3415 = vunpack.c.l.b16 %v3264
      %v3416 = vunpack.c.l.b16 %v3265
      %v3417 = vunpack.c.l.b16 %v3266
      %v3418 = vunpack.c.l.b16 %v3267
      %v3419 = vunpack.c.l.b16 %v3268
      %v3420 = vunpack.c.l.b16 %v3269
      %v3421 = vunpack.c.l.b16 %v3270
      %v3422 = vunpack.c.l.b16 %v3271
      %v3423 = vunpack.c.l.b16 %v3272
      %v3424 = vunpack.c.l.b16 %v3273
      %v3425 = vunpack.c.l.b16 %v3274
      %v3426 = vunpack.c.l.b16 %v3275
      %v3427 = vunpack.c.l.b16 %v3276
      %v3428 = vunpack.c.l.b16 %v3277
      %v3429 = vunpack.c.l.b16 %v3278
      %v3430 = vunpack.c.l.b16 %v3279
      %v3431 = vunpack.c.l.b16 %v3280
      %v3432 = vunpack.c.l.b16 %v3281
      %v3433 = vunpack.c.l.b16 %v3282
      %v3434 = vunpack.c.l.b16 %v3283
      %v3435 = vunpack.c.l.b16 %v3284
      %v3436 = vunpack.c.l.b16 %v3285
      %v3437 = vunpack.c.l.b16 %v3286
      %v3438 = vunpack.c.l.b16 %v3287
      %v3439 = vunpack.c.l.b16 %v3288
      %v3440 = vunpack.c.l.b16 %v3289
      %v3441 = vunpack.c.l.b16 %v3290
      %v3442 = vunpack.c.l.b16 %v3291
      %v3443 = vunpack.c.l.b16 %v3292
      %v3444 = vunpack.c.l.b16 %v3293
      %v3445 = vunpack.c.l.b16 %v3294
      %v3446 = vunpack.c.l.b16 %v3295
      %v3447 = vunpack.c.l.b16 %v3296
      %v3448 = vunpack.c.l.b16 %v3297
      %v3449 = vunpack.c.l.b16 %v3298
      %v3450 = vunpack.c.l.b16 %v3299
      %v3451 = vunpack.c.l.b16 %v3300
      %v3452 = vunpack.c.l.b16 %v3301
      %v3453 = vunpack.c.l.b16 %v3302
      %v3454 = vunpack.c.l.b16 %v3303
      %v3455 = vunpack.c.l.b16 %v3304
      %v3456 = vunpack.c.l.b16 %v3305
      %v3457 = vunpack.c.l.b16 %v3306
      %v3458 = vunpack.c.l.b16 %v3307
      %v3459 = vunpack.c.l.b16 %v3308
      %v3460 = vunpack.c.l.b16 %v3309
      %v3461 = vunpack.c.l.b16 %v3310
      %v3462 = vunpack.c.l.b16 %v3311
      %v3463 = vunpack.c.l.b16 %v3312
      %v3464 = vunpack.c.l.b16 %v3313
      %v3465 = vunpack.c.l.b16 %v3314
      %v3466 = vunpack.c.l.b16 %v3315
      %v3467 = vunpack.c.l.b16 %v3316
      %v3468 = vunpack.c.l.b16 %v3317
      %v3469 = vunpack.c.l.b16 %v3318
      %v3470 = vunpack.c.l.b16 %v3319
      %v3471 = vunpack.c.l.b16 %v3320
      %v3472 = vpack.c.b16 %v3401, %v3400
      %v3473 = vpack.c.b16 %v3403, %v3402
      %v3474 = vpack.c.b16 %v3405, %v3404
      %v3475 = vpack.c.b16 %v3407, %v3406
      %v3476 = vpack.c.b16 %v3409, %v3408
      %v3477 = vpack.c.b16 %v3411, %v3410
      %v3478 = vpack.c.b16 %v3413, %v3412
      %v3479 = vpack.c.b16 %v3415, %v3414
      %v3480 = vpack.c.b16 %v3417, %v3416
      %v3481 = vpack.c.b16 %v3419, %v3418
      %v3482 = vpack.c.b16 %v3421, %v3420
      %v3483 = vpack.c.b16 %v3423, %v3422
      %v3484 = vpack.c.b16 %v3425, %v3424
      %v3485 = vpack.c.b16 %v3427, %v3426
      %v3486 = vpack.c.b16 %v3429, %v3428
      %v3487 = vpack.c.b16 %v3431, %v3430
      %v3488 = vpack.c.b16 %v3433, %v3432
      %v3489 = vpack.c.b16 %v3435, %v3434
      %v3490 = vpack.c.b16 %v3437, %v3436
      %v3491 = vpack.c.b16 %v3439, %v3438
      %v3492 = vpack.c.b16 %v3441, %v3440
      %v3493 = vpack.c.b16 %v3443, %v3442
      %v3494 = vpack.c.b16 %v3445, %v3444
      %v3495 = vpack.c.b16 %v3447, %v3446
      %v3496 = vpack.c.b16 %v3449, %v3448
      %v3497 = vpack.c.b16 %v3451, %v3450
      %v3498 = vpack.c.b16 %v3453, %v3452
      %v3499 = vpack.c.b16 %v3455, %v3454
      %v3500 = vpack.c.b16 %v3457, %v3456
      %v3501 = vpack.c.b16 %v3459, %v3458
      %v3502 = vpack.c.b16 %v3461, %v3460
      %v3503 = vpack.c.b16 %v3463, %v3462
      %v3504 = vpack.c.b16 %v3465, %v3464
      %v3505 = vpack.c.b16 %v3467, %v3466
      %v3506 = vpack.c.b16 %v3469, %v3468
      %v3507 = vpack.c.b16 %v3471, %v3470
      %v3545 = vsel %vm327, %v3173, 0
      %v3548 = vsel %vm327, %v3178, 0
      %v3551 = vsel %vm327, %v3183, 0
      %v3554 = vsel %vm327, %v3188, 0
      %v3557 = vsel %vm327, %v3193, 0
      %v3560 = vsel %vm327, %v3198, 0
      %v3563 = vsel %vm327, %v3203, 0
      %v3566 = vsel %vm327, %v3208, 0
      %v3569 = vsel %vm327, %v3213, 0
      %v3572 = vsel %vm327, %v3218, 0
      %v3575 = vsel %vm327, %v3223, 0
      %v3578 = vsel %vm327, %v3228, 0
      %v3581 = vsel %vm327, %v3233, 0
      %v3584 = vsel %vm327, %v3238, 0
      %v3587 = vsel %vm327, %v3243, 0
      %v3590 = vsel %vm327, %v3248, 0
      %3592 = vmatprep.subr.bf16.mxu0 0
      %3593 = vmatpush1.bf16.msra.mxu0 %v3472
      %3594 = vmatprep.subr.bf16.mxu0 0
      %3595 = vmatpush1.bf16.msra.mxu0 %v3473
      %3596 = vmatprep.subr.bf16.mxu0 0
      %3597 = vmatpush1.bf16.msra.mxu0 %v3474
      %3598 = vmatprep.subr.bf16.mxu0 0
      %3599 = vmatpush1.bf16.msra.mxu0 %v3475
      %3600 = vmatprep.subr.bf16.mxu0 0
      %3601 = vmatpush1.bf16.msra.mxu0 %v3476
      %3602 = vmatprep.subr.bf16.mxu0 0
      %3603 = vmatpush1.bf16.msra.mxu0 %v3477
      %3604 = vmatprep.subr.bf16.mxu0 0
      %3605 = vmatpush1.bf16.msra.mxu0 %v3478
      %3606 = vmatprep.subr.bf16.mxu0 0
      %3607 = vmatpush1.bf16.msra.mxu0 %v3479
      %3608 = vmatprep.subr.bf16.mxu0 0
      %3609 = vmatpush1.bf16.msra.mxu0 %v3480
      %3610 = vmatprep.subr.bf16.mxu0 0
      %3611 = vmatpush1.bf16.msra.mxu0 %v3481
      %3612 = vmatprep.subr.bf16.mxu0 0
      %3613 = vmatpush1.bf16.msra.mxu0 %v3482
      %3614 = vmatprep.subr.bf16.mxu0 0
      %3615 = vmatpush1.bf16.msra.mxu0 %v3483
      %3616 = vmatprep.subr.bf16.mxu0 0
      %3617 = vmatpush1.bf16.msra.mxu0 %v3484
      %3618 = vmatprep.subr.bf16.mxu0 0
      %3619 = vmatpush1.bf16.msra.mxu0 %v3485
      %3620 = vmatprep.subr.bf16.mxu0 0
      %3621 = vmatpush1.bf16.msra.mxu0 %v3486
      %3622 = vmatprep.subr.bf16.mxu0 0
      %3623 = vmatpush1.bf16.msra.mxu0 %v3487
      %3624 = vmatprep.mubr.bf16.mxu0 %v3170
      %3625 = vmatmul.mubr.bf16.gmra.mrb[0].mxu0 %v3169
      %v3626 = vpop.f32.mrb[0].mxu0
      %v3627 = vadd.f32 %v3326, %v3626
      %v3628 = vpop.f32.mrb[0].mxu0
      %v3629 = vpop.f32.mrb[0].mxu0
      %v3630 = vadd.f32 %v3326, %v3629
      %v3631 = vpop.f32.mrb[0].mxu0
      %3632 = vmatprep.mubr.bf16.mxu0 %v3175
      %3633 = vmatmul.mubr.bf16.gmra.mrb[0].mxu0 %v3174
      %v3634 = vpop.f32.mrb[0].mxu0
      %v3635 = vadd.f32 %v3326, %v3634
      %v3636 = vpop.f32.mrb[0].mxu0
      %v3637 = vpop.f32.mrb[0].mxu0
      %v3638 = vadd.f32 %v3326, %v3637
      %v3639 = vpop.f32.mrb[0].mxu0
      %3640 = vmatprep.mubr.bf16.mxu0 %v3180
      %3641 = vmatmul.mubr.bf16.gmra.mrb[0].mxu0 %v3179
      %v3642 = vpop.f32.mrb[0].mxu0
      %v3643 = vadd.f32 %v3326, %v3642
      %v3644 = vpop.f32.mrb[0].mxu0
      %v3645 = vpop.f32.mrb[0].mxu0
      %v3646 = vadd.f32 %v3326, %v3645
      %v3647 = vpop.f32.mrb[0].mxu0
      %3648 = vmatprep.mubr.bf16.mxu0 %v3185
      %3649 = vmatmul.mubr.bf16.gmra.mrb[0].mxu0 %v3184
      %v3650 = vpop.f32.mrb[0].mxu0
      %v3651 = vadd.f32 %v3326, %v3650
      %v3652 = vpop.f32.mrb[0].mxu0
      %v3653 = vpop.f32.mrb[0].mxu0
      %v3654 = vadd.f32 %v3326, %v3653
      %v3655 = vpop.f32.mrb[0].mxu0
      %3656 = vmatprep.mubr.bf16.mxu0 %v3190
      %3657 = vmatmul.mubr.bf16.gmra.mrb[0].mxu0 %v3189
      %v3658 = vpop.f32.mrb[0].mxu0
      %v3659 = vadd.f32 %v3326, %v3658
      %v3660 = vpop.f32.mrb[0].mxu0
      %v3661 = vpop.f32.mrb[0].mxu0
      %v3662 = vadd.f32 %v3326, %v3661
      %v3663 = vpop.f32.mrb[0].mxu0
      %3664 = vmatprep.mubr.bf16.mxu0 %v3195
      %3665 = vmatmul.mubr.bf16.gmra.mrb[0].mxu0 %v3194
      %v3666 = vpop.f32.mrb[0].mxu0
      %v3667 = vadd.f32 %v3326, %v3666
      %v3668 = vpop.f32.mrb[0].mxu0
      %v3669 = vpop.f32.mrb[0].mxu0
      %v3670 = vadd.f32 %v3326, %v3669
      %v3671 = vpop.f32.mrb[0].mxu0
      %3672 = vmatprep.mubr.bf16.mxu0 %v3200
      %3673 = vmatmul.mubr.bf16.gmra.mrb[0].mxu0 %v3199
      %v3674 = vpop.f32.mrb[0].mxu0
      %v3675 = vadd.f32 %v3326, %v3674
      %v3676 = vpop.f32.mrb[0].mxu0
      %v3677 = vpop.f32.mrb[0].mxu0
      %v3678 = vadd.f32 %v3326, %v3677
      %v3679 = vpop.f32.mrb[0].mxu0
      %3680 = vmatprep.mubr.bf16.mxu0 %v3205
      %3681 = vmatmul.mubr.bf16.gmra.mrb[0].mxu0 %v3204
      %v3682 = vpop.f32.mrb[0].mxu0
      %v3683 = vadd.f32 %v3326, %v3682
      %v3684 = vpop.f32.mrb[0].mxu0
      %v3685 = vpop.f32.mrb[0].mxu0
      %v3686 = vadd.f32 %v3326, %v3685
      %v3687 = vpop.f32.mrb[0].mxu0
      %3688 = vmatprep.mubr.bf16.mxu0 %v3210
      %3689 = vmatmul.mubr.bf16.gmra.mrb[0].mxu0 %v3209
      %v3690 = vpop.f32.mrb[0].mxu0
      %v3691 = vadd.f32 %v3326, %v3690
      %v3692 = vpop.f32.mrb[0].mxu0
      %v3693 = vpop.f32.mrb[0].mxu0
      %v3694 = vadd.f32 %v3326, %v3693
      %v3695 = vpop.f32.mrb[0].mxu0
      %3696 = vmatprep.mubr.bf16.mxu0 %v3215
      %3697 = vmatmul.mubr.bf16.gmra.mrb[0].mxu0 %v3214
      %v3698 = vpop.f32.mrb[0].mxu0
      %v3699 = vadd.f32 %v3326, %v3698
      %v3700 = vpop.f32.mrb[0].mxu0
      %v3701 = vpop.f32.mrb[0].mxu0
      %v3702 = vadd.f32 %v3326, %v3701
      %v3703 = vpop.f32.mrb[0].mxu0
      %3704 = vmatprep.mubr.bf16.mxu0 %v3220
      %3705 = vmatmul.mubr.bf16.gmra.mrb[0].mxu0 %v3219
      %v3706 = vpop.f32.mrb[0].mxu0
      %v3707 = vadd.f32 %v3326, %v3706
      %v3708 = vpop.f32.mrb[0].mxu0
      %v3709 = vpop.f32.mrb[0].mxu0
      %v3710 = vadd.f32 %v3326, %v3709
      %v3711 = vpop.f32.mrb[0].mxu0
      %3712 = vmatprep.mubr.bf16.mxu0 %v3225
      %3713 = vmatmul.mubr.bf16.gmra.mrb[0].mxu0 %v3224
      %v3714 = vpop.f32.mrb[0].mxu0
      %v3715 = vadd.f32 %v3326, %v3714
      %v3716 = vpop.f32.mrb[0].mxu0
      %v3717 = vpop.f32.mrb[0].mxu0
      %v3718 = vadd.f32 %v3326, %v3717
      %v3719 = vpop.f32.mrb[0].mxu0
      %3720 = vmatprep.mubr.bf16.mxu0 %v3230
      %3721 = vmatmul.mubr.bf16.gmra.mrb[0].mxu0 %v3229
      %v3722 = vpop.f32.mrb[0].mxu0
      %v3723 = vadd.f32 %v3326, %v3722
      %v3724 = vpop.f32.mrb[0].mxu0
      %v3725 = vpop.f32.mrb[0].mxu0
      %v3726 = vadd.f32 %v3326, %v3725
      %v3727 = vpop.f32.mrb[0].mxu0
      %3728 = vmatprep.mubr.bf16.mxu0 %v3235
      %3729 = vmatmul.mubr.bf16.gmra.mrb[0].mxu0 %v3234
      %v3730 = vpop.f32.mrb[0].mxu0
      %v3731 = vadd.f32 %v3326, %v3730
      %v3732 = vpop.f32.mrb[0].mxu0
      %v3733 = vpop.f32.mrb[0].mxu0
      %v3734 = vadd.f32 %v3326, %v3733
      %v3735 = vpop.f32.mrb[0].mxu0
      %3736 = vmatprep.mubr.bf16.mxu0 %v3240
      %3737 = vmatmul.mubr.bf16.gmra.mrb[0].mxu0 %v3239
      %v3738 = vpop.f32.mrb[0].mxu0
      %v3739 = vadd.f32 %v3326, %v3738
      %v3740 = vpop.f32.mrb[0].mxu0
      %v3741 = vpop.f32.mrb[0].mxu0
      %v3742 = vadd.f32 %v3326, %v3741
      %v3743 = vpop.f32.mrb[0].mxu0
      %3744 = vmatprep.mubr.bf16.mxu0 %v3245
      %3745 = vmatmul.mubr.bf16.gmra.mrb[0].mxu0 %v3244
      %v3746 = vpop.f32.mrb[0].mxu0
      %v3747 = vadd.f32 %v3326, %v3746
      %v3748 = vpop.f32.mrb[0].mxu0
      %v3749 = vpop.f32.mrb[0].mxu0
      %v3750 = vadd.f32 %v3326, %v3749
      %v3751 = vpop.f32.mrb[0].mxu0
      %3752 = vdwg.mxu0
      %3753 = vmatprep.subr.bf16.mxu0 0
      %3754 = vmatpush1.bf16.msra.mxu0 %v3488
      %3755 = vmatprep.subr.bf16.mxu0 0
      %3756 = vmatpush1.bf16.msra.mxu0 %v3489
      %3757 = vmatprep.subr.bf16.mxu0 0
      %3758 = vmatpush1.bf16.msra.mxu0 %v3490
      %3759 = vmatprep.subr.bf16.mxu0 0
      %3760 = vmatpush1.bf16.msra.mxu0 %v3491
      %3761 = vmatprep.subr.bf16.mxu0 0
      %3762 = vmatpush1.bf16.msra.mxu0 %v3492
      %3763 = vmatprep.subr.bf16.mxu0 0
      %3764 = vmatpush1.bf16.msra.mxu0 %v3493
      %3765 = vmatprep.subr.bf16.mxu0 0
      %3766 = vmatpush1.bf16.msra.mxu0 %v3494
      %3767 = vmatprep.subr.bf16.mxu0 0
      %3768 = vmatpush1.bf16.msra.mxu0 %v3495
      %3769 = vmatprep.subr.bf16.mxu0 0
      %3770 = vmatpush1.bf16.msra.mxu0 %v3496
      %3771 = vmatprep.subr.bf16.mxu0 0
      %3772 = vmatpush1.bf16.msra.mxu0 %v3497
      %3773 = vmatprep.subr.bf16.mxu0 0
      %3774 = vmatpush1.bf16.msra.mxu0 %v3498
      %3775 = vmatprep.subr.bf16.mxu0 0
      %3776 = vmatpush1.bf16.msra.mxu0 %v3499
      %3777 = vmatprep.subr.bf16.mxu0 0
      %3778 = vmatpush1.bf16.msra.mxu0 %v3500
      %3779 = vmatprep.subr.bf16.mxu0 0
      %3780 = vmatpush1.bf16.msra.mxu0 %v3501
      %3781 = vmatprep.subr.bf16.mxu0 0
      %3782 = vmatpush1.bf16.msra.mxu0 %v3502
      %3783 = vmatprep.subr.bf16.mxu0 0
      %3784 = vmatpush1.bf16.msra.mxu0 %v3503
      %3785 = vmatprep.mubr.bf16.mxu0 %v3172
      %3786 = vmatmul.mubr.bf16.gmra.mrb[0].mxu0 %v3171
      %v3787 = vpop.f32.mrb[0].mxu0
      %v3788 = vadd.f32 %v3627, %v3787
      %v3789 = vpop.f32.mrb[0].mxu0
      %v3790 = vpop.f32.mrb[0].mxu0
      %v3791 = vadd.f32 %v3630, %v3790
      %v3792 = vpop.f32.mrb[0].mxu0
      %3793 = vmatprep.mubr.bf16.mxu0 %v3177
      %3794 = vmatmul.mubr.bf16.gmra.mrb[0].mxu0 %v3176
      %v3795 = vpop.f32.mrb[0].mxu0
      %v3796 = vadd.f32 %v3635, %v3795
      %v3797 = vpop.f32.mrb[0].mxu0
      %v3798 = vpop.f32.mrb[0].mxu0
      %v3799 = vadd.f32 %v3638, %v3798
      %v3800 = vpop.f32.mrb[0].mxu0
      %3801 = vmatprep.mubr.bf16.mxu0 %v3182
      %3802 = vmatmul.mubr.bf16.gmra.mrb[0].mxu0 %v3181
      %v3803 = vpop.f32.mrb[0].mxu0
      %v3804 = vadd.f32 %v3643, %v3803
      %v3805 = vpop.f32.mrb[0].mxu0
      %v3806 = vpop.f32.mrb[0].mxu0
      %v3807 = vadd.f32 %v3646, %v3806
      %v3808 = vpop.f32.mrb[0].mxu0
      %3809 = vmatprep.mubr.bf16.mxu0 %v3187
      %3810 = vmatmul.mubr.bf16.gmra.mrb[0].mxu0 %v3186
      %v3811 = vpop.f32.mrb[0].mxu0
      %v3812 = vadd.f32 %v3651, %v3811
      %v3813 = vpop.f32.mrb[0].mxu0
      %v3814 = vpop.f32.mrb[0].mxu0
      %v3815 = vadd.f32 %v3654, %v3814
      %v3816 = vpop.f32.mrb[0].mxu0
      %3817 = vmatprep.mubr.bf16.mxu0 %v3192
      %3818 = vmatmul.mubr.bf16.gmra.mrb[0].mxu0 %v3191
      %v3819 = vpop.f32.mrb[0].mxu0
      %v3820 = vadd.f32 %v3659, %v3819
      %v3821 = vpop.f32.mrb[0].mxu0
      %v3822 = vpop.f32.mrb[0].mxu0
      %v3823 = vadd.f32 %v3662, %v3822
      %v3824 = vpop.f32.mrb[0].mxu0
      %3825 = vmatprep.mubr.bf16.mxu0 %v3197
      %3826 = vmatmul.mubr.bf16.gmra.mrb[0].mxu0 %v3196
      %v3827 = vpop.f32.mrb[0].mxu0
      %v3828 = vadd.f32 %v3667, %v3827
      %v3829 = vpop.f32.mrb[0].mxu0
      %v3830 = vpop.f32.mrb[0].mxu0
      %v3831 = vadd.f32 %v3670, %v3830
      %v3832 = vpop.f32.mrb[0].mxu0
      %3833 = vmatprep.mubr.bf16.mxu0 %v3202
      %3834 = vmatmul.mubr.bf16.gmra.mrb[0].mxu0 %v3201
      %v3835 = vpop.f32.mrb[0].mxu0
      %v3836 = vadd.f32 %v3675, %v3835
      %v3837 = vpop.f32.mrb[0].mxu0
      %v3838 = vpop.f32.mrb[0].mxu0
      %v3839 = vadd.f32 %v3678, %v3838
      %v3840 = vpop.f32.mrb[0].mxu0
      %3841 = vmatprep.mubr.bf16.mxu0 %v3207
      %3842 = vmatmul.mubr.bf16.gmra.mrb[0].mxu0 %v3206
      %v3843 = vpop.f32.mrb[0].mxu0
      %v3844 = vadd.f32 %v3683, %v3843
      %v3845 = vpop.f32.mrb[0].mxu0
      %v3846 = vpop.f32.mrb[0].mxu0
      %v3847 = vadd.f32 %v3686, %v3846
      %v3848 = vpop.f32.mrb[0].mxu0
      %3849 = vmatprep.mubr.bf16.mxu0 %v3212
      %3850 = vmatmul.mubr.bf16.gmra.mrb[0].mxu0 %v3211
      %v3851 = vpop.f32.mrb[0].mxu0
      %v3852 = vadd.f32 %v3691, %v3851
      %v3853 = vpop.f32.mrb[0].mxu0
      %v3854 = vpop.f32.mrb[0].mxu0
      %v3855 = vadd.f32 %v3694, %v3854
      %v3856 = vpop.f32.mrb[0].mxu0
      %3857 = vmatprep.mubr.bf16.mxu0 %v3217
      %3858 = vmatmul.mubr.bf16.gmra.mrb[0].mxu0 %v3216
      %v3859 = vpop.f32.mrb[0].mxu0
      %v3860 = vadd.f32 %v3699, %v3859
      %v3861 = vpop.f32.mrb[0].mxu0
      %v3862 = vpop.f32.mrb[0].mxu0
      %v3863 = vadd.f32 %v3702, %v3862
      %v3864 = vpop.f32.mrb[0].mxu0
      %3865 = vmatprep.mubr.bf16.mxu0 %v3222
      %3866 = vmatmul.mubr.bf16.gmra.mrb[0].mxu0 %v3221
      %v3867 = vpop.f32.mrb[0].mxu0
      %v3868 = vadd.f32 %v3707, %v3867
      %v3869 = vpop.f32.mrb[0].mxu0
      %v3870 = vpop.f32.mrb[0].mxu0
      %v3871 = vadd.f32 %v3710, %v3870
      %v3872 = vpop.f32.mrb[0].mxu0
      %3873 = vmatprep.mubr.bf16.mxu0 %v3227
      %3874 = vmatmul.mubr.bf16.gmra.mrb[0].mxu0 %v3226
      %v3875 = vpop.f32.mrb[0].mxu0
      %v3876 = vadd.f32 %v3715, %v3875
      %v3877 = vpop.f32.mrb[0].mxu0
      %v3878 = vpop.f32.mrb[0].mxu0
      %v3879 = vadd.f32 %v3718, %v3878
      %v3880 = vpop.f32.mrb[0].mxu0
      %3881 = vmatprep.mubr.bf16.mxu0 %v3232
      %3882 = vmatmul.mubr.bf16.gmra.mrb[0].mxu0 %v3231
      %v3883 = vpop.f32.mrb[0].mxu0
      %v3884 = vadd.f32 %v3723, %v3883
      %v3885 = vpop.f32.mrb[0].mxu0
      %v3886 = vpop.f32.mrb[0].mxu0
      %v3887 = vadd.f32 %v3726, %v3886
      %v3888 = vpop.f32.mrb[0].mxu0
      %3889 = vmatprep.mubr.bf16.mxu0 %v3237
      %3890 = vmatmul.mubr.bf16.gmra.mrb[0].mxu0 %v3236
      %v3891 = vpop.f32.mrb[0].mxu0
      %v3892 = vadd.f32 %v3731, %v3891
      %v3893 = vpop.f32.mrb[0].mxu0
      %v3894 = vpop.f32.mrb[0].mxu0
      %v3895 = vadd.f32 %v3734, %v3894
      %v3896 = vpop.f32.mrb[0].mxu0
      %3897 = vmatprep.mubr.bf16.mxu0 %v3242
      %3898 = vmatmul.mubr.bf16.gmra.mrb[0].mxu0 %v3241
      %v3899 = vpop.f32.mrb[0].mxu0
      %v3900 = vadd.f32 %v3739, %v3899
      %v3901 = vpop.f32.mrb[0].mxu0
      %v3902 = vpop.f32.mrb[0].mxu0
      %v3903 = vadd.f32 %v3742, %v3902
      %v3904 = vpop.f32.mrb[0].mxu0
      %3905 = vmatprep.mubr.bf16.mxu0 %v3247
      %3906 = vmatmul.mubr.bf16.gmra.mrb[0].mxu0 %v3246
      %v3907 = vpop.f32.mrb[0].mxu0
      %v3908 = vadd.f32 %v3747, %v3907
      %v3909 = vpop.f32.mrb[0].mxu0
      %v3910 = vpop.f32.mrb[0].mxu0
      %v3911 = vadd.f32 %v3750, %v3910
      %v3912 = vpop.f32.mrb[0].mxu0
      %3913 = vdwg.mxu0
      %3914 = vmatprep.subr.bf16.mxu0 0
      %3915 = vmatpush1.bf16.msra.mxu0 %v3504
      %3916 = vmatprep.subr.bf16.mxu0 0
      %3917 = vmatpush1.bf16.msra.mxu0 %v3505
      %3918 = vmatprep.subr.bf16.mxu0 0
      %3919 = vmatpush1.bf16.msra.mxu0 %v3506
      %3920 = vmatprep.subr.bf16.mxu0 0
      %3921 = vmatpush1.bf16.msra.mxu0 %v3507
      %3922 = vmatprep.subr.bf16.mxu0 0
      %3923 = vmatpush1.bf16.msra.mxu0 0
      %3924 = vmatprep.subr.bf16.mxu0 0
      %3925 = vmatpush1.bf16.msra.mxu0 0
      %3926 = vmatprep.subr.bf16.mxu0 0
      %3927 = vmatpush1.bf16.msra.mxu0 0
      %3928 = vmatprep.subr.bf16.mxu0 0
      %3929 = vmatpush1.bf16.msra.mxu0 0
      %3930 = vmatprep.subr.bf16.mxu0 0
      %3931 = vmatpush1.bf16.msra.mxu0 0
      %3932 = vmatprep.subr.bf16.mxu0 0
      %3933 = vmatpush1.bf16.msra.mxu0 0
      %3934 = vmatprep.subr.bf16.mxu0 0
      %3935 = vmatpush1.bf16.msra.mxu0 0
      %3936 = vmatprep.subr.bf16.mxu0 0
      %3937 = vmatpush1.bf16.msra.mxu0 0
      %3938 = vmatprep.subr.bf16.mxu0 0
      %3939 = vmatpush1.bf16.msra.mxu0 0
      %3940 = vmatprep.subr.bf16.mxu0 0
      %3941 = vmatpush1.bf16.msra.mxu0 0
      %3942 = vmatprep.subr.bf16.mxu0 0
      %3943 = vmatpush1.bf16.msra.mxu0 0
      %3944 = vmatprep.subr.bf16.mxu0 0
      %3945 = vmatpush1.bf16.msra.mxu0 0
      %3946 = vmatprep.mubr.bf16.mxu0 0
      %3947 = vmatmul.mubr.bf16.gmra.mrb[0].mxu0 %v3545
      %v3948 = vpop.f32.mrb[0].mxu0
      %v3949 = vadd.f32 %v3788, %v3948
      %v3950 = vpop.f32.mrb[0].mxu0
      %v3951 = vpop.f32.mrb[0].mxu0
      %v3952 = vadd.f32 %v3791, %v3951
      %v3953 = vpop.f32.mrb[0].mxu0
      %3954 = vmatprep.mubr.bf16.mxu0 0
      %3955 = vmatmul.mubr.bf16.gmra.mrb[0].mxu0 %v3548
      %v3956 = vpop.f32.mrb[0].mxu0
      %v3957 = vadd.f32 %v3796, %v3956
      %v3958 = vpop.f32.mrb[0].mxu0
      %v3959 = vpop.f32.mrb[0].mxu0
      %v3960 = vadd.f32 %v3799, %v3959
      %v3961 = vpop.f32.mrb[0].mxu0
      %3962 = vmatprep.mubr.bf16.mxu0 0
      %3963 = vmatmul.mubr.bf16.gmra.mrb[0].mxu0 %v3551
      %v3964 = vpop.f32.mrb[0].mxu0
      %v3965 = vadd.f32 %v3804, %v3964
      %v3966 = vpop.f32.mrb[0].mxu0
      %v3967 = vpop.f32.mrb[0].mxu0
      %v3968 = vadd.f32 %v3807, %v3967
      %v3969 = vpop.f32.mrb[0].mxu0
      %3970 = vmatprep.mubr.bf16.mxu0 0
      %3971 = vmatmul.mubr.bf16.gmra.mrb[0].mxu0 %v3554
      %v3972 = vpop.f32.mrb[0].mxu0
      %v3973 = vadd.f32 %v3812, %v3972
      %v3974 = vpop.f32.mrb[0].mxu0
      %v3975 = vpop.f32.mrb[0].mxu0
      %v3976 = vadd.f32 %v3815, %v3975
      %v3977 = vpop.f32.mrb[0].mxu0
      %3978 = vmatprep.mubr.bf16.mxu0 0
      %3979 = vmatmul.mubr.bf16.gmra.mrb[0].mxu0 %v3557
      %v3980 = vpop.f32.mrb[0].mxu0
      %v3981 = vadd.f32 %v3820, %v3980
      %v3982 = vpop.f32.mrb[0].mxu0
      %v3983 = vpop.f32.mrb[0].mxu0
      %v3984 = vadd.f32 %v3823, %v3983
      %v3985 = vpop.f32.mrb[0].mxu0
      %3986 = vmatprep.mubr.bf16.mxu0 0
      %3987 = vmatmul.mubr.bf16.gmra.mrb[0].mxu0 %v3560
      %v3988 = vpop.f32.mrb[0].mxu0
      %v3989 = vadd.f32 %v3828, %v3988
      %v3990 = vpop.f32.mrb[0].mxu0
      %v3991 = vpop.f32.mrb[0].mxu0
      %v3992 = vadd.f32 %v3831, %v3991
      %v3993 = vpop.f32.mrb[0].mxu0
      %3994 = vmatprep.mubr.bf16.mxu0 0
      %3995 = vmatmul.mubr.bf16.gmra.mrb[0].mxu0 %v3563
      %v3996 = vpop.f32.mrb[0].mxu0
      %v3997 = vadd.f32 %v3836, %v3996
      %v3998 = vpop.f32.mrb[0].mxu0
      %v3999 = vpop.f32.mrb[0].mxu0
      %v4000 = vadd.f32 %v3839, %v3999
      %v4001 = vpop.f32.mrb[0].mxu0
      %4002 = vmatprep.mubr.bf16.mxu0 0
      %4003 = vmatmul.mubr.bf16.gmra.mrb[0].mxu0 %v3566
      %v4004 = vpop.f32.mrb[0].mxu0
      %v4005 = vadd.f32 %v3844, %v4004
      %v4006 = vpop.f32.mrb[0].mxu0
      %v4007 = vpop.f32.mrb[0].mxu0
      %v4008 = vadd.f32 %v3847, %v4007
      %v4009 = vpop.f32.mrb[0].mxu0
      %4010 = vmatprep.mubr.bf16.mxu0 0
      %4011 = vmatmul.mubr.bf16.gmra.mrb[0].mxu0 %v3569
      %v4012 = vpop.f32.mrb[0].mxu0
      %v4013 = vadd.f32 %v3852, %v4012
      %v4014 = vpop.f32.mrb[0].mxu0
      %v4015 = vpop.f32.mrb[0].mxu0
      %v4016 = vadd.f32 %v3855, %v4015
      %v4017 = vpop.f32.mrb[0].mxu0
      %4018 = vmatprep.mubr.bf16.mxu0 0
      %4019 = vmatmul.mubr.bf16.gmra.mrb[0].mxu0 %v3572
      %v4020 = vpop.f32.mrb[0].mxu0
      %v4021 = vadd.f32 %v3860, %v4020
      %v4022 = vpop.f32.mrb[0].mxu0
      %v4023 = vpop.f32.mrb[0].mxu0
      %v4024 = vadd.f32 %v3863, %v4023
      %v4025 = vpop.f32.mrb[0].mxu0
      %4026 = vmatprep.mubr.bf16.mxu0 0
      %4027 = vmatmul.mubr.bf16.gmra.mrb[0].mxu0 %v3575
      %v4028 = vpop.f32.mrb[0].mxu0
      %v4029 = vadd.f32 %v3868, %v4028
      %v4030 = vpop.f32.mrb[0].mxu0
      %v4031 = vpop.f32.mrb[0].mxu0
      %v4032 = vadd.f32 %v3871, %v4031
      %v4033 = vpop.f32.mrb[0].mxu0
      %4034 = vmatprep.mubr.bf16.mxu0 0
      %4035 = vmatmul.mubr.bf16.gmra.mrb[0].mxu0 %v3578
      %v4036 = vpop.f32.mrb[0].mxu0
      %v4037 = vadd.f32 %v3876, %v4036
      %v4038 = vpop.f32.mrb[0].mxu0
      %v4039 = vpop.f32.mrb[0].mxu0
      %v4040 = vadd.f32 %v3879, %v4039
      %v4041 = vpop.f32.mrb[0].mxu0
      %4042 = vmatprep.mubr.bf16.mxu0 0
      %4043 = vmatmul.mubr.bf16.gmra.mrb[0].mxu0 %v3581
      %v4044 = vpop.f32.mrb[0].mxu0
      %v4045 = vadd.f32 %v3884, %v4044
      %v4046 = vpop.f32.mrb[0].mxu0
      %v4047 = vpop.f32.mrb[0].mxu0
      %v4048 = vadd.f32 %v3887, %v4047
      %v4049 = vpop.f32.mrb[0].mxu0
      %4050 = vmatprep.mubr.bf16.mxu0 0
      %4051 = vmatmul.mubr.bf16.gmra.mrb[0].mxu0 %v3584
      %v4052 = vpop.f32.mrb[0].mxu0
      %v4053 = vadd.f32 %v3892, %v4052
      %v4054 = vpop.f32.mrb[0].mxu0
      %v4055 = vpop.f32.mrb[0].mxu0
      %v4056 = vadd.f32 %v3895, %v4055
      %v4057 = vpop.f32.mrb[0].mxu0
      %4058 = vmatprep.mubr.bf16.mxu0 0
      %4059 = vmatmul.mubr.bf16.gmra.mrb[0].mxu0 %v3587
      %v4060 = vpop.f32.mrb[0].mxu0
      %v4061 = vadd.f32 %v3900, %v4060
      %v4062 = vpop.f32.mrb[0].mxu0
      %v4063 = vpop.f32.mrb[0].mxu0
      %v4064 = vadd.f32 %v3903, %v4063
      %v4065 = vpop.f32.mrb[0].mxu0
      %4066 = vmatprep.mubr.bf16.mxu0 0
      %4067 = vmatmul.mubr.bf16.gmra.mrb[0].mxu0 %v3590
      %v4068 = vpop.f32.mrb[0].mxu0
      %v4069 = vadd.f32 %v3908, %v4068
      %v4070 = vpop.f32.mrb[0].mxu0
      %v4071 = vpop.f32.mrb[0].mxu0
      %v4072 = vadd.f32 %v3911, %v4071
      %v4073 = vpop.f32.mrb[0].mxu0
      %4074 = vdwg.mxu0
      %v4075 = vmax.f32 %v3949, 0.0
      %v4076 = vmax.f32 %v3952, 0.0
      %v4077 = vmax.f32 %v3957, 0.0
      %v4078 = vmax.f32 %v3960, 0.0
      %v4079 = vmax.f32 %v3965, 0.0
      %v4080 = vmax.f32 %v3968, 0.0
      %v4081 = vmax.f32 %v3973, 0.0
      %v4082 = vmax.f32 %v3976, 0.0
      %v4083 = vmax.f32 %v3981, 0.0
      %v4084 = vmax.f32 %v3984, 0.0
      %v4085 = vmax.f32 %v3989, 0.0
      %v4086 = vmax.f32 %v3992, 0.0
      %v4087 = vmax.f32 %v3997, 0.0
      %v4088 = vmax.f32 %v4000, 0.0
      %v4089 = vmax.f32 %v4005, 0.0
      %v4090 = vmax.f32 %v4008, 0.0
      %v4091 = vmax.f32 %v4013, 0.0
      %v4092 = vmax.f32 %v4016, 0.0
      %v4093 = vmax.f32 %v4021, 0.0
      %v4094 = vmax.f32 %v4024, 0.0
      %v4095 = vmax.f32 %v4029, 0.0
      %v4096 = vmax.f32 %v4032, 0.0
      %v4097 = vmax.f32 %v4037, 0.0
      %v4098 = vmax.f32 %v4040, 0.0
      %v4099 = vmax.f32 %v4045, 0.0
      %v4100 = vmax.f32 %v4048, 0.0
      %v4101 = vmax.f32 %v4053, 0.0
      %v4102 = vmax.f32 %v4056, 0.0
      %v4103 = vmax.f32 %v4061, 0.0
      %v4104 = vmax.f32 %v4064, 0.0
      %v4105 = vmax.f32 %v4069, 0.0
      %v4106 = vmax.f32 %v4072, 0.0
      %v4107 = vadd.f32 %v4075, %v4076
      %v4108 = vadd.f32 %v4107, %v4077
      %v4109 = vadd.f32 %v4108, %v4078
      %v4110 = vadd.f32 %v4109, %v4079
      %v4111 = vadd.f32 %v4110, %v4080
      %v4112 = vadd.f32 %v4111, %v4081
      %v4113 = vadd.f32 %v4112, %v4082
      %v4114 = vadd.f32 %v4113, %v4083
      %v4115 = vadd.f32 %v4114, %v4084
      %v4116 = vadd.f32 %v4115, %v4085
      %v4117 = vadd.f32 %v4116, %v4086
      %v4118 = vadd.f32 %v4117, %v4087
      %v4119 = vadd.f32 %v4118, %v4088
      %v4120 = vadd.f32 %v4119, %v4089
      %v4121 = vadd.f32 %v4120, %v4090
      %v4122 = vadd.f32 %v4121, %v4091
      %v4123 = vadd.f32 %v4122, %v4092
      %v4124 = vadd.f32 %v4123, %v4093
      %v4125 = vadd.f32 %v4124, %v4094
      %v4126 = vadd.f32 %v4125, %v4095
      %v4127 = vadd.f32 %v4126, %v4096
      %v4128 = vadd.f32 %v4127, %v4097
      %v4129 = vadd.f32 %v4128, %v4098
      %v4130 = vadd.f32 %v4129, %v4099
      %v4131 = vadd.f32 %v4130, %v4100
      %v4132 = vadd.f32 %v4131, %v4101
      %v4133 = vadd.f32 %v4132, %v4102
      %v4134 = vadd.f32 %v4133, %v4103
      %v4135 = vadd.f32 %v4134, %v4104
      %v4136 = vadd.f32 %v4135, %v4105
      %v4137 = vadd.f32 %v4136, %v4106
      %v4138 = vrot.slane %v4137, 4
      %v4139 = vadd.f32 %v4137, %v4138
      %v4140 = vrot.slane %v4139, 2
      %v4141 = vadd.f32 %v4139, %v4140
      %v4142 = vrot.slane %v4141, 1
      %v4143 = vadd.f32 %v4141, %v4142
      %v4144 = vmul.f32 %v4143, 0.00390625
      %v4145 = vld [vmem:[%s3] sm:$0xff]
      %v4146 = vld [vmem:[%s3 + $0x8] sm:$0xff]
      %v4147 = vld [vmem:[%s3 + $0x10] sm:$0xff]
      %v4148 = vld [vmem:[%s3 + $0x18] sm:$0xff]
      %v4149 = vld [vmem:[%s3 + $0x20] sm:$0xff]
      %v4150 = vld [vmem:[%s3 + $0x28] sm:$0xff]
      %v4151 = vld [vmem:[%s3 + $0x30] sm:$0xff]
      %v4152 = vld [vmem:[%s3 + $0x38] sm:$0xff]
      %v4153 = vld [vmem:[%s3 + $0x40] sm:$0xff]
      %v4154 = vld [vmem:[%s3 + $0x48] sm:$0xff]
      %v4155 = vld [vmem:[%s3 + $0x50] sm:$0xff]
      %v4156 = vld [vmem:[%s3 + $0x58] sm:$0xff]
      %v4157 = vld [vmem:[%s3 + $0x60] sm:$0xff]
      %v4158 = vld [vmem:[%s3 + $0x68] sm:$0xff]
      %v4159 = vld [vmem:[%s3 + $0x70] sm:$0xff]
      %v4160 = vld [vmem:[%s3 + $0x78] sm:$0xff]
      %v4161 = vmul.f32 %v4145, %v4144
      %v4162 = vmul.f32 %v4146, %v4144
      %v4163 = vmul.f32 %v4147, %v4144
      %v4164 = vmul.f32 %v4148, %v4144
      %v4165 = vmul.f32 %v4149, %v4144
      %v4166 = vmul.f32 %v4150, %v4144
      %v4167 = vmul.f32 %v4151, %v4144
      %v4168 = vmul.f32 %v4152, %v4144
      %v4169 = vmul.f32 %v4153, %v4144
      %v4170 = vmul.f32 %v4154, %v4144
      %v4171 = vmul.f32 %v4155, %v4144
      %v4172 = vmul.f32 %v4156, %v4144
      %v4173 = vmul.f32 %v4157, %v4144
      %v4174 = vmul.f32 %v4158, %v4144
      %v4175 = vmul.f32 %v4159, %v4144
      %v4176 = vmul.f32 %v4160, %v4144
      %4177 = vadd.xlane.f32.xlu0 %v4161
      %v4178 = vpop.xlane.xlu0 %4177
      %4179 = vadd.xlane.f32.xlu0 %v4162
      %v4180 = vpop.xlane.xlu0 %4179
      %4181 = vadd.xlane.f32.xlu0 %v4163
      %v4182 = vpop.xlane.xlu0 %4181
      %4183 = vadd.xlane.f32.xlu0 %v4164
      %v4184 = vpop.xlane.xlu0 %4183
      %4185 = vadd.xlane.f32.xlu0 %v4165
      %v4186 = vpop.xlane.xlu0 %4185
      %4187 = vadd.xlane.f32.xlu0 %v4166
      %v4188 = vpop.xlane.xlu0 %4187
      %4189 = vadd.xlane.f32.xlu0 %v4167
      %v4190 = vpop.xlane.xlu0 %4189
      %4191 = vadd.xlane.f32.xlu0 %v4168
      %v4192 = vpop.xlane.xlu0 %4191
      %4193 = vadd.xlane.f32.xlu0 %v4169
      %v4194 = vpop.xlane.xlu0 %4193
      %4195 = vadd.xlane.f32.xlu0 %v4170
      %v4196 = vpop.xlane.xlu0 %4195
      %4197 = vadd.xlane.f32.xlu0 %v4171
      %v4198 = vpop.xlane.xlu0 %4197
      %4199 = vadd.xlane.f32.xlu0 %v4172
      %v4200 = vpop.xlane.xlu0 %4199
      %4201 = vadd.xlane.f32.xlu0 %v4173
      %v4202 = vpop.xlane.xlu0 %4201
      %4203 = vadd.xlane.f32.xlu0 %v4174
      %v4204 = vpop.xlane.xlu0 %4203
      %4205 = vadd.xlane.f32.xlu0 %v4175
      %v4206 = vpop.xlane.xlu0 %4205
      %4207 = vadd.xlane.f32.xlu0 %v4176
      %v4208 = vpop.xlane.xlu0 %4207
      %v4209 = vxor.u32 %v4178, 2147483648
      %v4210 = vxor.u32 %v4180, 2147483648
      %v4211 = vxor.u32 %v4182, 2147483648
      %v4212 = vxor.u32 %v4184, 2147483648
      %v4213 = vxor.u32 %v4186, 2147483648
      %v4214 = vxor.u32 %v4188, 2147483648
      %v4215 = vxor.u32 %v4190, 2147483648
      %v4216 = vxor.u32 %v4192, 2147483648
      %v4217 = vxor.u32 %v4194, 2147483648
      %v4218 = vxor.u32 %v4196, 2147483648
      %v4219 = vxor.u32 %v4198, 2147483648
      %v4220 = vxor.u32 %v4200, 2147483648
      %v4221 = vxor.u32 %v4202, 2147483648
      %v4222 = vxor.u32 %v4204, 2147483648
      %v4223 = vxor.u32 %v4206, 2147483648
      %v4224 = vxor.u32 %v4208, 2147483648
      %v4225 = vmul.f32 %v4209, 1.442695
      %v4226 = vpow.pop %v4225
      %v4227 = vmul.f32 %v4210, 1.442695
      %v4228 = vpow.pop %v4227
      %v4229 = vmul.f32 %v4211, 1.442695
      %v4230 = vpow.pop %v4229
      %v4231 = vmul.f32 %v4212, 1.442695
      %v4232 = vpow.pop %v4231
      %v4233 = vmul.f32 %v4213, 1.442695
      %v4234 = vpow.pop %v4233
      %v4235 = vmul.f32 %v4214, 1.442695
      %v4236 = vpow.pop %v4235
      %v4237 = vmul.f32 %v4215, 1.442695
      %v4238 = vpow.pop %v4237
      %v4239 = vmul.f32 %v4216, 1.442695
      %v4240 = vpow.pop %v4239
      %v4241 = vmul.f32 %v4217, 1.442695
      %v4242 = vpow.pop %v4241
      %v4243 = vmul.f32 %v4218, 1.442695
      %v4244 = vpow.pop %v4243
      %v4245 = vmul.f32 %v4219, 1.442695
      %v4246 = vpow.pop %v4245
      %v4247 = vmul.f32 %v4220, 1.442695
      %v4248 = vpow.pop %v4247
      %v4249 = vmul.f32 %v4221, 1.442695
      %v4250 = vpow.pop %v4249
      %v4251 = vmul.f32 %v4222, 1.442695
      %v4252 = vpow.pop %v4251
      %v4253 = vmul.f32 %v4223, 1.442695
      %v4254 = vpow.pop %v4253
      %v4255 = vmul.f32 %v4224, 1.442695
      %v4256 = vpow.pop %v4255
      %v4257 = vadd.f32 %v4226, 1.0
      %v4258 = vadd.f32 %v4228, 1.0
      %v4259 = vadd.f32 %v4230, 1.0
      %v4260 = vadd.f32 %v4232, 1.0
      %v4261 = vadd.f32 %v4234, 1.0
      %v4262 = vadd.f32 %v4236, 1.0
      %v4263 = vadd.f32 %v4238, 1.0
      %v4264 = vadd.f32 %v4240, 1.0
      %v4265 = vadd.f32 %v4242, 1.0
      %v4266 = vadd.f32 %v4244, 1.0
      %v4267 = vadd.f32 %v4246, 1.0
      %v4268 = vadd.f32 %v4248, 1.0
      %v4269 = vadd.f32 %v4250, 1.0
      %v4270 = vadd.f32 %v4252, 1.0
      %v4271 = vadd.f32 %v4254, 1.0
      %v4272 = vadd.f32 %v4256, 1.0
      %v4273 = vrcp.pop %v4257
      %v4274 = vmul.f32 1.0, %v4273
      %v4275 = vrcp.pop %v4258
      %v4276 = vmul.f32 1.0, %v4275
      %v4277 = vrcp.pop %v4259
      %v4278 = vmul.f32 1.0, %v4277
      %v4279 = vrcp.pop %v4260
      %v4280 = vmul.f32 1.0, %v4279
      %v4281 = vrcp.pop %v4261
      %v4282 = vmul.f32 1.0, %v4281
      %v4283 = vrcp.pop %v4262
      %v4284 = vmul.f32 1.0, %v4283
      %v4285 = vrcp.pop %v4263
      %v4286 = vmul.f32 1.0, %v4285
      %v4287 = vrcp.pop %v4264
      %v4288 = vmul.f32 1.0, %v4287
      %v4289 = vrcp.pop %v4265
      %v4290 = vmul.f32 1.0, %v4289
      %v4291 = vrcp.pop %v4266
      %v4292 = vmul.f32 1.0, %v4291
      %v4293 = vrcp.pop %v4267
      %v4294 = vmul.f32 1.0, %v4293
      %v4295 = vrcp.pop %v4268
      %v4296 = vmul.f32 1.0, %v4295
      %v4297 = vrcp.pop %v4269
      %v4298 = vmul.f32 1.0, %v4297
      %v4299 = vrcp.pop %v4270
      %v4300 = vmul.f32 1.0, %v4299
      %v4301 = vrcp.pop %v4271
      %v4302 = vmul.f32 1.0, %v4301
      %v4303 = vrcp.pop %v4272
      %v4304 = vmul.f32 1.0, %v4303
      %4305 = vxpose.xlu0.b32.start [1/16] %v4075, 128
      %4306 = vxpose.xlu0.b32.cont [2/16] %v4076, 128
      %4307 = vxpose.xlu0.b32.cont [3/16] %v4077, 128
      %4308 = vxpose.xlu0.b32.cont [4/16] %v4078, 128
      %4309 = vxpose.xlu0.b32.cont [5/16] %v4079, 128
      %4310 = vxpose.xlu0.b32.cont [6/16] %v4080, 128
      %4311 = vxpose.xlu0.b32.cont [7/16] %v4081, 128
      %4312 = vxpose.xlu0.b32.cont [8/16] %v4082, 128
      %4313 = vxpose.xlu0.b32.cont [9/16] %v4083, 128
      %4314 = vxpose.xlu0.b32.cont [10/16] %v4084, 128
      %4315 = vxpose.xlu0.b32.cont [11/16] %v4085, 128
      %4316 = vxpose.xlu0.b32.cont [12/16] %v4086, 128
      %4317 = vxpose.xlu0.b32.cont [13/16] %v4087, 128
      %4318 = vxpose.xlu0.b32.cont [14/16] %v4088, 128
      %4319 = vxpose.xlu0.b32.cont [15/16] %v4089, 128
      %4320 = vxpose.xlu0.b32.end [16/16] %v4090, 128
      %v4321 = vpop.trf.xlu0
      %v4322 = vpop.trf.xlu0
      %v4323 = vpop.trf.xlu0
      %v4324 = vpop.trf.xlu0
      %v4325 = vpop.trf.xlu0
      %v4326 = vpop.trf.xlu0
      %v4327 = vpop.trf.xlu0
      %v4328 = vpop.trf.xlu0
      %v4329 = vpop.trf.xlu0
      %v4330 = vpop.trf.xlu0
      %v4331 = vpop.trf.xlu0
      %v4332 = vpop.trf.xlu0
      %v4333 = vpop.trf.xlu0
      %v4334 = vpop.trf.xlu0
      %v4335 = vpop.trf.xlu0
      %v4336 = vpop.trf.xlu0
      %4337 = vxpose.xlu0.b32.start [1/16] %v4091, 128
      %4338 = vxpose.xlu0.b32.cont [2/16] %v4092, 128
      %4339 = vxpose.xlu0.b32.cont [3/16] %v4093, 128
      %4340 = vxpose.xlu0.b32.cont [4/16] %v4094, 128
      %4341 = vxpose.xlu0.b32.cont [5/16] %v4095, 128
      %4342 = vxpose.xlu0.b32.cont [6/16] %v4096, 128
      %4343 = vxpose.xlu0.b32.cont [7/16] %v4097, 128
      %4344 = vxpose.xlu0.b32.cont [8/16] %v4098, 128
      %4345 = vxpose.xlu0.b32.cont [9/16] %v4099, 128
      %4346 = vxpose.xlu0.b32.cont [10/16] %v4100, 128
      %4347 = vxpose.xlu0.b32.cont [11/16] %v4101, 128
      %4348 = vxpose.xlu0.b32.cont [12/16] %v4102, 128
      %4349 = vxpose.xlu0.b32.cont [13/16] %v4103, 128
      %4350 = vxpose.xlu0.b32.cont [14/16] %v4104, 128
      %4351 = vxpose.xlu0.b32.cont [15/16] %v4105, 128
      %4352 = vxpose.xlu0.b32.end [16/16] %v4106, 128
      %v4353 = vpop.trf.xlu0
      %v4354 = vpop.trf.xlu0
      %v4355 = vpop.trf.xlu0
      %v4356 = vpop.trf.xlu0
      %v4357 = vpop.trf.xlu0
      %v4358 = vpop.trf.xlu0
      %v4359 = vpop.trf.xlu0
      %v4360 = vpop.trf.xlu0
      %v4361 = vpop.trf.xlu0
      %v4362 = vpop.trf.xlu0
      %v4363 = vpop.trf.xlu0
      %v4364 = vpop.trf.xlu0
      %v4365 = vpop.trf.xlu0
      %v4366 = vpop.trf.xlu0
      %v4367 = vpop.trf.xlu0
      %v4368 = vpop.trf.xlu0
      %v4369 = vmul.f32 %v4321, %v4274
      %v4370 = vmul.f32 %v4353, %v4274
      %v4371 = vmul.f32 %v4322, %v4276
      %v4372 = vmul.f32 %v4354, %v4276
      %v4373 = vmul.f32 %v4323, %v4278
      %v4374 = vmul.f32 %v4355, %v4278
      %v4375 = vmul.f32 %v4324, %v4280
      %v4376 = vmul.f32 %v4356, %v4280
      %v4377 = vmul.f32 %v4325, %v4282
      %v4378 = vmul.f32 %v4357, %v4282
      %v4379 = vmul.f32 %v4326, %v4284
      %v4380 = vmul.f32 %v4358, %v4284
      %v4381 = vmul.f32 %v4327, %v4286
      %v4382 = vmul.f32 %v4359, %v4286
      %v4383 = vmul.f32 %v4328, %v4288
      %v4384 = vmul.f32 %v4360, %v4288
      %v4385 = vmul.f32 %v4329, %v4290
      %v4386 = vmul.f32 %v4361, %v4290
      %v4387 = vmul.f32 %v4330, %v4292
      %v4388 = vmul.f32 %v4362, %v4292
      %v4389 = vmul.f32 %v4331, %v4294
      %v4390 = vmul.f32 %v4363, %v4294
      %v4391 = vmul.f32 %v4332, %v4296
      %v4392 = vmul.f32 %v4364, %v4296
      %v4393 = vmul.f32 %v4333, %v4298
      %v4394 = vmul.f32 %v4365, %v4298
      %v4395 = vmul.f32 %v4334, %v4300
      %v4396 = vmul.f32 %v4366, %v4300
      %v4397 = vmul.f32 %v4335, %v4302
      %v4398 = vmul.f32 %v4367, %v4302
      %v4399 = vmul.f32 %v4336, %v4304
      %v4400 = vmul.f32 %v4368, %v4304
      %4401 = vst [vmem:[%s197] sm:$0xff] %v4369
      %4402 = vst [vmem:[%s197 + $0x8] sm:$0xff] %v4370
      %4403 = vst [vmem:[%s197 + $0x10] sm:$0xff] %v4371
      %4404 = vst [vmem:[%s197 + $0x18] sm:$0xff] %v4372
      %4405 = vst [vmem:[%s197 + $0x20] sm:$0xff] %v4373
      %4406 = vst [vmem:[%s197 + $0x28] sm:$0xff] %v4374
      %4407 = vst [vmem:[%s197 + $0x30] sm:$0xff] %v4375
      %4408 = vst [vmem:[%s197 + $0x38] sm:$0xff] %v4376
      %4409 = vst [vmem:[%s197 + $0x40] sm:$0xff] %v4377
      %4410 = vst [vmem:[%s197 + $0x48] sm:$0xff] %v4378
      %4411 = vst [vmem:[%s197 + $0x50] sm:$0xff] %v4379
      %4412 = vst [vmem:[%s197 + $0x58] sm:$0xff] %v4380
      %4413 = vst [vmem:[%s197 + $0x60] sm:$0xff] %v4381
      %4414 = vst [vmem:[%s197 + $0x68] sm:$0xff] %v4382
      %4415 = vst [vmem:[%s197 + $0x70] sm:$0xff] %v4383
      %4416 = vst [vmem:[%s197 + $0x78] sm:$0xff] %v4384
      %4417 = vst [vmem:[%s197 + $0x80] sm:$0xff] %v4385
      %4418 = vst [vmem:[%s197 + $0x88] sm:$0xff] %v4386
      %4419 = vst [vmem:[%s197 + $0x90] sm:$0xff] %v4387
      %4420 = vst [vmem:[%s197 + $0x98] sm:$0xff] %v4388
      %4421 = vst [vmem:[%s197 + $0xa0] sm:$0xff] %v4389
      %4422 = vst [vmem:[%s197 + $0xa8] sm:$0xff] %v4390
      %4423 = vst [vmem:[%s197 + $0xb0] sm:$0xff] %v4391
      %4424 = vst [vmem:[%s197 + $0xb8] sm:$0xff] %v4392
      %4425 = vst [vmem:[%s197 + $0xc0] sm:$0xff] %v4393
      %4426 = vst [vmem:[%s197 + $0xc8] sm:$0xff] %v4394
      %4427 = vst [vmem:[%s197 + $0xd0] sm:$0xff] %v4395
      %4428 = vst [vmem:[%s197 + $0xd8] sm:$0xff] %v4396
      %4429 = vst [vmem:[%s197 + $0xe0] sm:$0xff] %v4397
      %4430 = vst [vmem:[%s197 + $0xe8] sm:$0xff] %v4398
      %4431 = vst [vmem:[%s197 + $0xf0] sm:$0xff] %v4399
      %4432 = vst [vmem:[%s197 + $0xf8] sm:$0xff] %v4400
      %p4433 = scmp.lt.s32.totalorder %s15, 1
      %s4434 = scalar_select %p4433, %s15, 1
      %s4435 = smul.addr %s4434, 32
      %s4436 = smul.addr %s4435, 8
      %s4437 = scalar_lea.vmem %s4, %s4436
      // Predicated region
      $region37: #{attention_refinement_module.1} parent=35 // pred_check
        %p4438 = pneg %p122
      $region38: #{attention_refinement_module.1} parent=35 // pred_check_branch
        %4440 = sbr.rel (%p4438) target = $region40
      $region39: #{attention_refinement_module.1} parent=35 // pred_region
        _
      $region40: #{attention_refinement_module.1} parent=35 // pred_fallthru
        _
    $region36: #{attention_refinement_module.1} parent=5 // pred_fallthru
      _
    %p4441 = scmp.le.s32.totalorder 2, %s10
    // Predicated region
    $region41: #{attention_refinement_module.1} parent=5 // pred_check
      %p4442 = pneg %p4441
    $region42: #{attention_refinement_module.1} parent=5 // pred_check_branch
      %4444 = sbr.rel (%p4442) target = $region44
    $region43: #{attention_refinement_module.1} parent=5 // pred_region
      %s4445 = ssub.s32 %s10, 2
      // Predicated region
      $region45: #{attention_refinement_module.1} parent=43 // pred_check
        %p4446 = pneg %p128
      $region46: #{attention_refinement_module.1} parent=43 // pred_check_branch
        %4448 = sbr.rel (%p4446) target = $region48
      $region47: #{attention_refinement_module.1} parent=43 // pred_region
        %p4449 = scmp.lt.s32.totalorder %s16, 1
        %s4450 = scalar_select %p4449, %s16, 1
        %s4451 = smul.addr %s4450, 32
        %s4452 = smul.addr %s4451, 8
        %s4453 = scalar_lea.vmem %s4, %s4452
      $region48: #{attention_refinement_module.1} parent=43 // pred_fallthru
        _
    $region44: #{attention_refinement_module.1} parent=5 // pred_fallthru
      _
  $region6: #{attention_refinement_module.1} parent=0 // loop_footer
    %s14 = sadd.s32 1, %s10
  $region7: #{attention_refinement_module.1} parent=0 // loop_footer_branch
    %9 = sbr.rel target = $region3
  $region8: #{attention_refinement_module.1} parent=0 // loop_exit
    _

</llo_original>
